<compile_context>
chip_gen: v7x
topology: tpu7x:2x2x1
jax: 0.10.0
libtpu: 0.0.40
codegen_flags: <defaults>
</compile_context>

<pallas_src>
import functools

import jax
import jax.numpy as jnp
from jax import lax
from jax.experimental import pallas as pl
from jax.experimental.pallas import tpu as pltpu

EPS = float(jnp.finfo(jnp.float32).eps)  # matches F.rms_norm default eps for f32
VMEM_LIMIT = 32 * 1024 * 1024


def _pick_tile(dim, target, quantum):
    """Largest tile <= target that divides dim and is a multiple of quantum,
    or the full dim if dim <= target / no such divisor exists."""
    dim = int(dim)
    if dim <= target:
        return dim
    t = (target // quantum) * quantum
    while t >= quantum:
        if dim % t == 0:
            return t
        t -= quantum
    return dim


# ----------------------------- linear (K-tiled) -----------------------------

def _linear_kernel(x_ref, w_ref, o_ref, acc_ref, *, activation, nk):
    k = pl.program_id(2)

    @pl.when(k == 0)
    def _():
        acc_ref[...] = jnp.zeros_like(acc_ref)

    acc_ref[...] += lax.dot_general(
        x_ref[...].astype(jnp.bfloat16), w_ref[...].astype(jnp.bfloat16),
        dimension_numbers=(((1,), (1,)), ((), ())),
        preferred_element_type=jnp.float32,
    )

    @pl.when(k == nk - 1)
    def _():
        acc = acc_ref[...]
        if activation == "relu_sq":
            acc = jnp.maximum(acc, 0.0)
            acc = acc * acc
        o_ref[...] = acc.astype(o_ref.dtype)


def linear(x2d, w, *, activation="none", tm_target=256, tn_target=512, tk_target=512):
    """y = x2d @ w.T   (PyTorch nn.Linear semantics; w is [out_features, in_features])."""
    M, K = x2d.shape
    N, K2 = w.shape
    assert K == K2
    tm = _pick_tile(M, tm_target, 8)
    tn = _pick_tile(N, tn_target, 128)
    tk = _pick_tile(K, tk_target, 128)
    nk = K // tk
    return pl.pallas_call(
        functools.partial(_linear_kernel, activation=activation, nk=nk),
        out_shape=jax.ShapeDtypeStruct((M, N), x2d.dtype),
        grid_spec=pltpu.PrefetchScalarGridSpec(
            num_scalar_prefetch=0,
            grid=(M // tm, N // tn, nk),
            in_specs=[
                pl.BlockSpec((tm, tk), lambda i, j, k: (i, k)),
                pl.BlockSpec((tn, tk), lambda i, j, k: (j, k)),
            ],
            out_specs=pl.BlockSpec((tm, tn), lambda i, j, k: (i, j)),
            scratch_shapes=[pltpu.VMEM((tm, tn), jnp.float32)],
        ),
        compiler_params=pltpu.CompilerParams(
            dimension_semantics=("parallel", "parallel", "arbitrary"),
            vmem_limit_bytes=VMEM_LIMIT,
        ),
    )(x2d, w)


# --------------------------------- rmsnorm ----------------------------------

def _rmsnorm_kernel(x_ref, o_ref):
    x = x_ref[...].astype(jnp.float32)
    ms = jnp.mean(x * x, axis=-1, keepdims=True)
    o_ref[...] = (x * lax.rsqrt(ms + EPS)).astype(o_ref.dtype)


def rmsnorm(x):
    """F.rms_norm(x, (x.shape[-1],))  -- no affine weight."""
    orig_shape = x.shape
    D = orig_shape[-1]
    x2d = x.reshape(-1, D)
    M = x2d.shape[0]
    tm = _pick_tile(M, 1024, 8)
    out = pl.pallas_call(
        _rmsnorm_kernel,
        out_shape=jax.ShapeDtypeStruct((M, D), x.dtype),
        grid_spec=pltpu.PrefetchScalarGridSpec(
            num_scalar_prefetch=0,
            grid=(M // tm,),
            in_specs=[pl.BlockSpec((tm, D), lambda i: (i, 0))],
            out_specs=pl.BlockSpec((tm, D), lambda i: (i, 0)),
        ),
        compiler_params=pltpu.CompilerParams(dimension_semantics=("parallel",)),
    )(x2d)
    return out.reshape(orig_shape)


# ------------------- fused residual mix + rmsnorm (one pass) ----------------

def _mix_norm_kernel(lam_ref, x_ref, x0_ref, xm_ref, xn_ref):
    lam0 = lam_ref[0]
    lam1 = lam_ref[1]
    xm = lam0 * x_ref[...].astype(jnp.float32) + lam1 * x0_ref[...].astype(jnp.float32)
    ms = jnp.mean(xm * xm, axis=-1, keepdims=True)
    xm_ref[...] = xm.astype(xm_ref.dtype)
    xn_ref[...] = (xm * lax.rsqrt(ms + EPS)).astype(xn_ref.dtype)


def mix_norm(x, x0, lam):
    """Returns (xm, norm(xm)) with xm = lam[0]*x + lam[1]*x0, in a single HBM pass."""
    B, T, D = x.shape
    x2d = x.reshape(-1, D)
    x02d = x0.reshape(-1, D)
    M = x2d.shape[0]
    tm = _pick_tile(M, 1024, 8)
    xm, xn = pl.pallas_call(
        _mix_norm_kernel,
        out_shape=(jax.ShapeDtypeStruct((M, D), x.dtype),
                   jax.ShapeDtypeStruct((M, D), x.dtype)),
        grid_spec=pltpu.PrefetchScalarGridSpec(
            num_scalar_prefetch=0,
            grid=(M // tm,),
            in_specs=[
                pl.BlockSpec(memory_space=pltpu.MemorySpace.SMEM),  # lam (2,) scalars
                pl.BlockSpec((tm, D), lambda i: (i, 0)),
                pl.BlockSpec((tm, D), lambda i: (i, 0)),
            ],
            out_specs=(pl.BlockSpec((tm, D), lambda i: (i, 0)),
                       pl.BlockSpec((tm, D), lambda i: (i, 0))),
        ),
        compiler_params=pltpu.CompilerParams(dimension_semantics=("parallel",)),
    )(lam.astype(jnp.float32), x2d, x02d)
    return xm.reshape(B, T, D), xn.reshape(B, T, D)


# ----------------------- flash-style causal attention -----------------------

def _flash_attn_kernel(q_ref, k_ref, v_ref, o_ref, m_sc, l_sc, acc_sc,
                       *, scale, tq, tk, nk):
    qi = pl.program_id(2)
    ki = pl.program_id(3)

    @pl.when(ki == 0)
    def _init():
        m_sc[...] = jnp.full_like(m_sc, -jnp.inf)
        l_sc[...] = jnp.zeros_like(l_sc)
        acc_sc[...] = jnp.zeros_like(acc_sc)

    # Skip kv tiles that are fully masked by causality.
    @pl.when(ki * tk < (qi + 1) * tq)
    def _compute():
        q = (q_ref[...].astype(jnp.float32) * scale).astype(jnp.bfloat16)
        k = k_ref[...].astype(jnp.bfloat16)
        s = lax.dot_general(q, k, dimension_numbers=(((1,), (1,)), ((), ())),
                            preferred_element_type=jnp.float32)
        row = qi * tq + lax.broadcasted_iota(jnp.int32, (tq, tk), 0)
        col = ki * tk + lax.broadcasted_iota(jnp.int32, (tq, tk), 1)
        s = jnp.where(row >= col, s, -jnp.inf)
        m_prev = m_sc[...]
        m_new = jnp.maximum(m_prev, jnp.max(s, axis=-1, keepdims=True))
        alpha = jnp.exp(m_prev - m_new)
        p = jnp.exp(s - m_new)
        l_sc[...] = alpha * l_sc[...] + jnp.sum(p, axis=-1, keepdims=True)
        acc_sc[...] = alpha * acc_sc[...] + lax.dot_general(
            p.astype(jnp.bfloat16), v_ref[...].astype(jnp.bfloat16),
            dimension_numbers=(((1,), (0,)), ((), ())),
            preferred_element_type=jnp.float32)
        m_sc[...] = m_new

    @pl.when(ki == nk - 1)
    def _finalize():
        o_ref[...] = (acc_sc[...] * pl.reciprocal(l_sc[...], approx=True)
                      ).astype(o_ref.dtype)


def causal_attention(q, k, v, *, scale, tq_target=256, tk_target=256):
    """q, k, v: (B, T, H, hd) -> out (B, T, H*hd). Causal flash attention.

    No (B,H,T,hd) transposes: heads are addressed via the BlockSpec index_map over
    the flattened (H*hd) last axis.
    """
    B, T, H, hd = q.shape
    qf = q.reshape(B, T, H * hd)
    kf = k.reshape(B, T, H * hd)
    vf = v.reshape(B, T, H * hd)
    tq = _pick_tile(T, tq_target, 8)
    tk = _pick_tile(T, tk_target, 8)
    nq, nk = T // tq, T // tk
    out = pl.pallas_call(
        functools.partial(_flash_attn_kernel, scale=scale, tq=tq, tk=tk, nk=nk),
        out_shape=jax.ShapeDtypeStruct((B, T, H * hd), q.dtype),
        grid_spec=pltpu.PrefetchScalarGridSpec(
            num_scalar_prefetch=0,
            grid=(B, H, nq, nk),
            in_specs=[
                pl.BlockSpec((None, tq, hd), lambda b, h, qi, ki: (b, qi, h)),
                pl.BlockSpec((None, tk, hd), lambda b, h, qi, ki: (b, ki, h)),
                pl.BlockSpec((None, tk, hd), lambda b, h, qi, ki: (b, ki, h)),
            ],
            out_specs=pl.BlockSpec((None, tq, hd), lambda b, h, qi, ki: (b, qi, h)),
            scratch_shapes=[
                pltpu.VMEM((tq, 1), jnp.float32),   # running max
                pltpu.VMEM((tq, 1), jnp.float32),   # running denom
                pltpu.VMEM((tq, hd), jnp.float32),  # running numerator
            ],
        ),
        compiler_params=pltpu.CompilerParams(
            dimension_semantics=("parallel", "parallel", "parallel", "arbitrary"),
            vmem_limit_bytes=VMEM_LIMIT,
        ),
    )(qf, kf, vf)
    return out  # (B, T, H*hd)


# --------------- fused lm_head + sigmoid-scale + cross-entropy ---------------

def _lm_head_ce_kernel(x_ref, w_ref, tgt_ref, loss_ref, m_sc, l_sc, g_sc, *, tn, nv):
    j = pl.program_id(1)

    @pl.when(j == 0)
    def _init():
        m_sc[...] = jnp.full_like(m_sc, -jnp.inf)
        l_sc[...] = jnp.zeros_like(l_sc)
        g_sc[...] = jnp.zeros_like(g_sc)

    acc = lax.dot_general(
        x_ref[...].astype(jnp.bfloat16), w_ref[...].astype(jnp.bfloat16),
        dimension_numbers=(((1,), (1,)), ((), ())),
        preferred_element_type=jnp.float32)
    # 30 * sigmoid(acc / 7.5) == 15 * (1 + tanh(acc / 15))  (EUP tanh, stable)
    z = 15.0 * (jnp.tanh(acc * (1.0 / 15.0)) + 1.0)

    tm = z.shape[0]
    col = j * tn + lax.broadcasted_iota(jnp.int32, (tm, tn), 1)
    tgt = tgt_ref[...]  # (tm, 1) int32
    g_sc[...] += jnp.sum(jnp.where(col == tgt, z, 0.0), axis=-1, keepdims=True)

    m_prev = m_sc[...]
    m_new = jnp.maximum(m_prev, jnp.max(z, axis=-1, keepdims=True))
    l_sc[...] = l_sc[...] * jnp.exp(m_prev - m_new) + \
        jnp.sum(jnp.exp(z - m_new), axis=-1, keepdims=True)
    m_sc[...] = m_new

    @pl.when(j == nv - 1)
    def _finalize():
        # per-row loss = logsumexp(z) - z[target]
        loss_ref[...] = (m_sc[...] + jnp.log(l_sc[...]) - g_sc[...]).astype(loss_ref.dtype)


def lm_head_loss(x2d, w, targets_flat, *, tm_target=256, tn_target=512):
    """mean over rows of cross_entropy(30*sigmoid((x @ w.T)/7.5), targets).

    The (M, V) logits never hit HBM: sigmoid scaling, online logsumexp over vocab
    tiles and the target-logit gather all happen in the kernel epilogue.
    """
    M, D = x2d.shape
    V, D2 = w.shape
    assert D == D2
    tm = _pick_tile(M, tm_target, 8)
    tn = _pick_tile(V, tn_target, 128)
    nv = V // tn
    tgt = targets_flat.astype(jnp.int32).reshape(M, 1)
    per_row = pl.pallas_call(
        functools.partial(_lm_head_ce_kernel, tn=tn, nv=nv),
        out_shape=jax.ShapeDtypeStruct((M, 1), jnp.float32),
        grid_spec=pltpu.PrefetchScalarGridSpec(
            num_scalar_prefetch=0,
            grid=(M // tm, nv),
            in_specs=[
                pl.BlockSpec((tm, D), lambda i, j: (i, 0)),
                pl.BlockSpec((tn, D), lambda i, j: (j, 0)),
                pl.BlockSpec((tm, 1), lambda i, j: (i, 0)),
            ],
            out_specs=pl.BlockSpec((tm, 1), lambda i, j: (i, 0)),
            scratch_shapes=[pltpu.VMEM((tm, 1), jnp.float32),
                            pltpu.VMEM((tm, 1), jnp.float32),
                            pltpu.VMEM((tm, 1), jnp.float32)],
        ),
        compiler_params=pltpu.CompilerParams(
            dimension_semantics=("parallel", "arbitrary"),
            vmem_limit_bytes=VMEM_LIMIT,
        ),
    )(x2d, w, tgt)
    return jnp.mean(per_row)


# ------------------------------ model pieces -------------------------------

def next_multiple_of_n(v, *, n):
    return next(x for x in range(n, int(v) + 1 + n, n) if x >= v)


def make_rotary_tables(head_dim, max_seq_len):
    n = head_dim // 4
    angular_freq = (1.0 / 1024.0) ** jnp.linspace(0.0, 1.0, n, dtype=jnp.float32)
    angular_freq = jnp.concatenate([angular_freq, jnp.zeros((n,), jnp.float32)])
    t = jnp.arange(max_seq_len, dtype=jnp.float32)
    theta = jnp.einsum("i,j->ij", t, angular_freq)  # (T, head_dim // 2)
    return jnp.cos(theta), jnp.sin(theta)


def apply_rotary(x, cos, sin):
    # x: (B, T, H, D)
    T = x.shape[1]
    half = x.shape[-1] // 2
    xf = x.astype(jnp.float32)
    x1, x2 = xf[..., :half], xf[..., half:]
    c = cos[None, :T, None, :]
    s = sin[None, :T, None, :]
    y1 = x1 * c + x2 * s
    y2 = -x1 * s + x2 * c
    return jnp.concatenate([y1, y2], axis=-1).astype(x.dtype)


def attention_forward(p, x, ve_i, cfg, cos, sin):
    B, T, D = x.shape
    H, hd = cfg["num_heads"], cfg["head_dim"]
    hdim = H * hd
    qkv_w = p["qkv_w"].reshape(3 * hdim, D)
    qkv = linear(x.reshape(B * T, D), qkv_w).reshape(B, T, 3, H, hd)
    q, k, v = qkv[:, :, 0], qkv[:, :, 1], qkv[:, :, 2]   # (B, T, H, hd)
    q, k = rmsnorm(q), rmsnorm(k)
    q, k = apply_rotary(q, cos, sin), apply_rotary(k, cos, sin)
    lam = p["lambdas"]
    if ve_i is not None:
        v = lam[0] * v + lam[1] * ve_i.reshape(B, T, H, hd)
    else:
        v = lam[0] * v
    y = causal_attention(q, k, v, scale=0.12)             # (B, T, hdim), no transposes
    y = linear(y.reshape(B * T, hdim), p["c_proj"]).reshape(B, T, D)
    return y


def mlp_forward(p, x):
    B, T, D = x.shape
    h = linear(x.reshape(B * T, D), p["c_fc"], activation="relu_sq")
    y = linear(h, p["c_proj"]).reshape(B, T, D)
    return y


def block_forward(p, x, ve_i, x0, cfg, cos, sin, layer_idx):
    # fused: x <- lam0*x + lam1*x0, xn <- rmsnorm(x)
    x, xn = mix_norm(x, x0, p["lambdas"])
    if layer_idx != 7:  # layer 7 has no attention in the reference model
        x = x + attention_forward(p["attn"], xn, ve_i, cfg, cos, sin)
        xn2 = rmsnorm(x)
    else:
        xn2 = xn
    x = x + mlp_forward(p["mlp"], xn2)
    return x


def gpt_forward(params, toks, targets, cfg, cos, sin):
    B, T = toks.shape
    L = cfg["num_layers"]

    # value embeddings: [ve0, ve1, ve2] + [None]*(L-6) + [ve0, ve1, ve2]
    ve_tabs = params["value_embeds"]
    ve_full = [jnp.take(ve_tabs[j], toks, axis=0) for j in range(3)]
    ve = [ve_full[0], ve_full[1], ve_full[2]] + [None] * (L - 6) \
         + [ve_full[0], ve_full[1], ve_full[2]]

    # FlexibleEmbedding with byte_mixin_method == 'noop' (ByteMixinNoop: identity on toks)
    tok_embs = jnp.take(params["embed_tokens"], toks, axis=0)
    x = x0 = rmsnorm(tok_embs)

    skip_connections = []
    n = L // 2
    for i in range(L):
        if i >= n:
            x = x + params["skip_weights"][i - n] * skip_connections.pop()
        x = block_forward(params["blocks"][i], x, ve[i], x0, cfg, cos, sin, layer_idx=i)
        if i < n:
            skip_connections.append(x)

    # ByteMixoutNoop + fused lm_head / sigmoid-scale / cross-entropy
    x = rmsnorm(x)
    loss = lm_head_loss(x.reshape(B * T, -1), params["lm_head"], targets.reshape(-1))
    return loss


# ------------------------------ parameter init -----------------------------

def _casted_linear_init(key, out_f, in_f):
    std = 0.5 * in_f ** (-0.5)
    bound = (3.0 ** 0.5) * std
    return jax.random.uniform(key, (out_f, in_f), jnp.float32, -bound, bound)


def init_params(key, cfg):
    # NOTE: the PyTorch module zero-inits c_proj / lm_head; here we use the same
    # uniform law so the kernels compute non-trivial values (synthetic weights).
    D = cfg["model_dim"]
    H = cfg["num_heads"]
    hd = cfg["head_dim"]
    hdim = H * hd
    mlp_h = next_multiple_of_n(int(4.0 * D), n=128)
    vpad = next_multiple_of_n(cfg["vocab_size"], n=128)

    keys = iter(jax.random.split(key, 8 + 6 * cfg["num_layers"]))
    params = {
        "embed_tokens": jax.random.normal(next(keys), (cfg["vocab_size"], D), jnp.float32),
        "value_embeds": [jax.random.normal(next(keys), (cfg["vocab_size"], D), jnp.float32)
                         for _ in range(3)],
        "lm_head": _casted_linear_init(next(keys), vpad, D),
        "skip_weights": jnp.ones((cfg["num_layers"] // 2,), jnp.float32),
        "blocks": [],
    }
    std = 0.5 * D ** (-0.5)
    bound = (3.0 ** 0.5) * std
    for i in range(cfg["num_layers"]):
        blk = {
            "lambdas": jnp.array([1.0, 0.0], jnp.float32),
            "attn": {
                "qkv_w": jax.random.uniform(next(keys), (3, hdim, D), jnp.float32, -bound, bound),
                "lambdas": jnp.array([0.5, 0.5], jnp.float32),
                "c_proj": _casted_linear_init(next(keys), D, hdim),
            },
            "mlp": {
                "c_fc": _casted_linear_init(next(keys), mlp_h, D),
                "c_proj": _casted_linear_init(next(keys), D, mlp_h),
            },
        }
        params["blocks"].append(blk)
    return params


# ---------------------------------- main ------------------------------------

if __name__ == "__main__":
    cfg = dict(
        vocab_size=64,
        num_layers=6,      # must be even and >= 6 (value-embedding layout)
        num_heads=1,
        model_dim=128,
        head_dim=128,
        max_seq_len=128,
    )
    B, T = 1, cfg["max_seq_len"]

    root = jax.random.PRNGKey(0)
    kp, kt, ky = jax.random.split(root, 3)
    params = init_params(kp, cfg)
    toks = jax.random.randint(kt, (B, T), 0, cfg["vocab_size"], dtype=jnp.int32)
    targets = jax.random.randint(ky, (B, T), 0, cfg["vocab_size"], dtype=jnp.int32)
    cos, sin = make_rotary_tables(cfg["head_dim"], cfg["max_seq_len"])

    fwd = jax.jit(functools.partial(gpt_forward, cfg=cfg, cos=cos, sin=sin))
    loss = fwd(params, toks, targets)
    jax.block_until_ready(loss)
    assert loss.shape == () and jnp.isfinite(loss)
    print("KERNEL_OK")
</pallas_src>

<mosaic_0001>
module attributes {stable_mosaic.version = 11 : i64} {
  func.func @_rmsnorm_kernel(%arg0: i32, %arg1: memref<128x128xf32, #tpu.memory_space<vmem>>, %arg2: memref<128x128xf32, #tpu.memory_space<vmem>>) attributes {dimension_semantics = [#tpu.dimension_semantics<parallel>], iteration_bounds = array<i64: 1>, scalar_prefetch = 0 : i64, scratch_operands = 0 : i64, tpu.core_type = #tpu.core_type<tc>, window_params = [{transform_indices = @transform_0, window_bounds = array<i64: 128, 128>}, {transform_indices = @transform_1, window_bounds = array<i64: 128, 128>}]} {
    %c0 = arith.constant 0 : index
    %c0_0 = arith.constant 0 : index
    %0 = vector.load %arg1[%c0, %c0_0] : memref<128x128xf32, #tpu.memory_space<vmem>>, vector<128x128xf32>
    %1 = arith.mulf %0, %0 : vector<128x128xf32>
    %cst = arith.constant dense<0.000000e+00> : vector<128xf32>
    %2 = vector.multi_reduction <add>, %1, %cst [1] : vector<128x128xf32> to vector<128xf32>
    %3 = vector.shape_cast %2 : vector<128xf32> to vector<128x1xf32>
    %cst_1 = arith.constant 1.280000e+02 : f32
    %4 = vector.broadcast %cst_1 : f32 to vector<128x1xf32>
    %5 = arith.divf %3, %4 : vector<128x1xf32>
    %cst_2 = arith.constant 1.1920929E-7 : f32
    %6 = vector.broadcast %cst_2 : f32 to vector<128x1xf32>
    %7 = arith.addf %5, %6 : vector<128x1xf32>
    %8 = math.rsqrt %7 : vector<128x1xf32>
    %9 = vector.broadcast %8 : vector<128x1xf32> to vector<128x128xf32>
    %10 = arith.mulf %0, %9 : vector<128x128xf32>
    %c0_3 = arith.constant 0 : index
    %c0_4 = arith.constant 0 : index
    %11 = vector.load %arg2[%c0_3, %c0_4] : memref<128x128xf32, #tpu.memory_space<vmem>>, vector<128x128xf32>
    tpu.vector_store %arg2[%c0_3, %c0_4], %10 {strides = array<i32>} : memref<128x128xf32, #tpu.memory_space<vmem>>, vector<128x128xf32>,
    return
  }
  func.func @transform_0(%arg0: i32) -> (i32, i32) {
    %c0_i32 = arith.constant 0 : i32
    %c0_i32_0 = arith.constant 0 : i32
    return %arg0, %c0_i32 : i32, i32
  }
  func.func @transform_1(%arg0: i32) -> (i32, i32) {
    %c0_i32 = arith.constant 0 : i32
    %c0_i32_0 = arith.constant 0 : i32
    return %arg0, %c0_i32 : i32, i32
  }
}

module attributes {stable_mosaic.version = 11 : i64} {
  func.func @_mix_norm_kernel(%arg0: i32, %arg1: memref<2xf32, #tpu.memory_space<smem>>, %arg2: memref<128x128xf32, #tpu.memory_space<vmem>>, %arg3: memref<128x128xf32, #tpu.memory_space<vmem>>, %arg4: memref<128x128xf32, #tpu.memory_space<vmem>>, %arg5: memref<128x128xf32, #tpu.memory_space<vmem>>) attributes {dimension_semantics = [#tpu.dimension_semantics<parallel>], iteration_bounds = array<i64: 1>, scalar_prefetch = 0 : i64, scratch_operands = 0 : i64, tpu.core_type = #tpu.core_type<tc>, window_params = [{transform_indices = @transform_0, window_bounds = array<i64: 2>}, {transform_indices = @transform_1, window_bounds = array<i64: 128, 128>}, {transform_indices = @transform_2, window_bounds = array<i64: 128, 128>}, {transform_indices = @transform_3, window_bounds = array<i64: 128, 128>}, {transform_indices = @transform_4, window_bounds = array<i64: 128, 128>}]} {
    %c0 = arith.constant 0 : index
    %0 = memref.load %arg1[%c0] : memref<2xf32, #tpu.memory_space<smem>>
    %c1 = arith.constant 1 : index
    %1 = memref.load %arg1[%c1] : memref<2xf32, #tpu.memory_space<smem>>
    %c0_0 = arith.constant 0 : index
    %c0_1 = arith.constant 0 : index
    %2 = vector.load %arg2[%c0_0, %c0_1] : memref<128x128xf32, #tpu.memory_space<vmem>>, vector<128x128xf32>
    %3 = vector.broadcast %0 : f32 to vector<128x128xf32>
    %4 = arith.mulf %3, %2 : vector<128x128xf32>
    %c0_2 = arith.constant 0 : index
    %c0_3 = arith.constant 0 : index
    %5 = vector.load %arg3[%c0_2, %c0_3] : memref<128x128xf32, #tpu.memory_space<vmem>>, vector<128x128xf32>
    %6 = vector.broadcast %1 : f32 to vector<128x128xf32>
    %7 = arith.mulf %6, %5 : vector<128x128xf32>
    %8 = arith.addf %4, %7 : vector<128x128xf32>
    %9 = arith.mulf %8, %8 : vector<128x128xf32>
    %cst = arith.constant dense<0.000000e+00> : vector<128xf32>
    %10 = vector.multi_reduction <add>, %9, %cst [1] : vector<128x128xf32> to vector<128xf32>
    %11 = vector.shape_cast %10 : vector<128xf32> to vector<128x1xf32>
    %cst_4 = arith.constant 1.280000e+02 : f32
    %12 = vector.broadcast %cst_4 : f32 to vector<128x1xf32>
    %13 = arith.divf %11, %12 : vector<128x1xf32>
    %c0_5 = arith.constant 0 : index
    %c0_6 = arith.constant 0 : index
    %14 = vector.load %arg4[%c0_5, %c0_6] : memref<128x128xf32, #tpu.memory_space<vmem>>, vector<128x128xf32>
    tpu.vector_store %arg4[%c0_5, %c0_6], %8 {strides = array<i32>} : memref<128x128xf32, #tpu.memory_space<vmem>>, vector<128x128xf32>,
    %cst_7 = arith.constant 1.1920929E-7 : f32
    %15 = vector.broadcast %cst_7 : f32 to vector<128x1xf32>
    %16 = arith.addf %13, %15 : vector<128x1xf32>
    %17 = math.rsqrt %16 : vector<128x1xf32>
    %18 = vector.broadcast %17 : vector<128x1xf32> to vector<128x128xf32>
    %19 = arith.mulf %8, %18 : vector<128x128xf32>
    %c0_8 = arith.constant 0 : index
    %c0_9 = arith.constant 0 : index
    %20 = vector.load %arg5[%c0_8, %c0_9] : memref<128x128xf32, #tpu.memory_space<vmem>>, vector<128x128xf32>
    tpu.vector_store %arg5[%c0_8, %c0_9], %19 {strides = array<i32>} : memref<128x128xf32, #tpu.memory_space<vmem>>, vector<128x128xf32>,
    return
  }
  func.func @transform_0(%arg0: i32) -> i32 {
    %c0_i32 = arith.constant 0 : i32
    %c0_i32_0 = arith.constant 0 : i32
    return %c0_i32 : i32
  }
  func.func @transform_1(%arg0: i32) -> (i32, i32) {
    %c0_i32 = arith.constant 0 : i32
    %c0_i32_0 = arith.constant 0 : i32
    return %arg0, %c0_i32 : i32, i32
  }
  func.func @transform_2(%arg0: i32) -> (i32, i32) {
    %c0_i32 = arith.constant 0 : i32
    %c0_i32_0 = arith.constant 0 : i32
    return %arg0, %c0_i32 : i32, i32
  }
  func.func @transform_3(%arg0: i32) -> (i32, i32) {
    %c0_i32 = arith.constant 0 : i32
    %c0_i32_0 = arith.constant 0 : i32
    return %arg0, %c0_i32 : i32, i32
  }
  func.func @transform_4(%arg0: i32) -> (i32, i32) {
    %c0_i32 = arith.constant 0 : i32
    %c0_i32_0 = arith.constant 0 : i32
    return %arg0, %c0_i32 : i32, i32
  }
}

module attributes {stable_mosaic.version = 11 : i64} {
  func.func @_linear_kernel(%arg0: i32, %arg1: i32, %arg2: i32, %arg3: memref<128x128xf32, #tpu.memory_space<vmem>>, %arg4: memref<384x128xf32, #tpu.memory_space<vmem>>, %arg5: memref<128x384xf32, #tpu.memory_space<vmem>>, %arg6: memref<128x384xf32, #tpu.memory_space<vmem>>) attributes {dimension_semantics = [#tpu.dimension_semantics<parallel>, #tpu.dimension_semantics<parallel>, #tpu.dimension_semantics<arbitrary>], iteration_bounds = array<i64: 1, 1, 1>, scalar_prefetch = 0 : i64, scratch_operands = 1 : i64, tpu.core_type = #tpu.core_type<tc>, window_params = [{transform_indices = @transform_0, window_bounds = array<i64: 128, 128>}, {transform_indices = @transform_1, window_bounds = array<i64: 384, 128>}, {transform_indices = @transform_2, window_bounds = array<i64: 128, 384>}]} {
    %c0_i32 = arith.constant 0 : i32
    %0 = arith.cmpi eq, %arg2, %c0_i32 : i32
    %1 = arith.extui %0 : i1 to i32
    %c0_i32_0 = arith.constant 0 : i32
    %2 = arith.cmpi ne, %1, %c0_i32_0 : i32
    scf.if %2 {
      %cst_10 = arith.constant 0.000000e+00 : f32
      %14 = vector.broadcast %cst_10 : f32 to vector<128x384xf32>
      %c0_11 = arith.constant 0 : index
      %c0_12 = arith.constant 0 : index
      %15 = vector.load %arg6[%c0_11, %c0_12] : memref<128x384xf32, #tpu.memory_space<vmem>>, vector<128x384xf32>
      tpu.vector_store %arg6[%c0_11, %c0_12], %14 {strides = array<i32>} : memref<128x384xf32, #tpu.memory_space<vmem>>, vector<128x384xf32>,
    } else {
    }
    %c0 = arith.constant 0 : index
    %c0_1 = arith.constant 0 : index
    %3 = vector.load %arg6[%c0, %c0_1] : memref<128x384xf32, #tpu.memory_space<vmem>>, vector<128x384xf32>
    %c0_2 = arith.constant 0 : index
    %c0_3 = arith.constant 0 : index
    %4 = vector.load %arg3[%c0_2, %c0_3] : memref<128x128xf32, #tpu.memory_space<vmem>>, vector<128x128xf32>
    %5 = arith.truncf %4 : vector<128x128xf32> to vector<128x128xbf16>
    %c0_4 = arith.constant 0 : index
    %c0_5 = arith.constant 0 : index
    %6 = vector.load %arg4[%c0_4, %c0_5] : memref<384x128xf32, #tpu.memory_space<vmem>>, vector<384x128xf32>
    %7 = arith.truncf %6 : vector<384x128xf32> to vector<384x128xbf16>
    %cst = arith.constant dense<0.000000e+00> : vector<128x384xf32>
    %8 = tpu.matmul %5, %7, %cst {dimension_numbers = #tpu.dot_dimension_numbers<[1], [1], [0], [0], [0, 0, 1, 0], [], []>} : vector<128x128xbf16>, vector<384x128xbf16>, vector<128x384xf32> -> vector<128x384xf32>
    %9 = arith.addf %3, %8 : vector<128x384xf32>
    %c0_6 = arith.constant 0 : index
    %c0_7 = arith.constant 0 : index
    %10 = vector.load %arg6[%c0_6, %c0_7] : memref<128x384xf32, #tpu.memory_space<vmem>>, vector<128x384xf32>
    tpu.vector_store %arg6[%c0_6, %c0_7], %9 {strides = array<i32>} : memref<128x384xf32, #tpu.memory_space<vmem>>, vector<128x384xf32>,
    %c0_i32_8 = arith.constant 0 : i32
    %11 = arith.cmpi eq, %arg2, %c0_i32_8 : i32
    %12 = arith.extui %11 : i1 to i32
    %c0_i32_9 = arith.constant 0 : i32
    %13 = arith.cmpi ne, %12, %c0_i32_9 : i32
    scf.if %13 {
      %c0_10 = arith.constant 0 : index
      %c0_11 = arith.constant 0 : index
      %14 = vector.load %arg6[%c0_10, %c0_11] : memref<128x384xf32, #tpu.memory_space<vmem>>, vector<128x384xf32>
      %c0_12 = arith.constant 0 : index
      %c0_13 = arith.constant 0 : index
      %15 = vector.load %arg5[%c0_12, %c0_13] : memref<128x384xf32, #tpu.memory_space<vmem>>, vector<128x384xf32>
      tpu.vector_store %arg5[%c0_12, %c0_13], %14 {strides = array<i32>} : memref<128x384xf32, #tpu.memory_space<vmem>>, vector<128x384xf32>,
    } else {
    }
    return
  }
  func.func @transform_0(%arg0: i32, %arg1: i32, %arg2: i32) -> (i32, i32) {
    %c0_i32 = arith.constant 0 : i32
    return %arg0, %arg2 : i32, i32
  }
  func.func @transform_1(%arg0: i32, %arg1: i32, %arg2: i32) -> (i32, i32) {
    %c0_i32 = arith.constant 0 : i32
    return %arg1, %arg2 : i32, i32
  }
  func.func @transform_2(%arg0: i32, %arg1: i32, %arg2: i32) -> (i32, i32) {
    %c0_i32 = arith.constant 0 : i32
    return %arg0, %arg1 : i32, i32
  }
}

module attributes {stable_mosaic.version = 11 : i64} {
  func.func @_flash_attn_kernel(%arg0: i32, %arg1: i32, %arg2: i32, %arg3: i32, %arg4: memref<1x128x128xf32, #tpu.memory_space<vmem>>, %arg5: memref<1x128x128xf32, #tpu.memory_space<vmem>>, %arg6: memref<1x128x128xf32, #tpu.memory_space<vmem>>, %arg7: memref<1x128x128xf32, #tpu.memory_space<vmem>>, %arg8: memref<128x1xf32, #tpu.memory_space<vmem>>, %arg9: memref<128x1xf32, #tpu.memory_space<vmem>>, %arg10: memref<128x128xf32, #tpu.memory_space<vmem>>) attributes {dimension_semantics = [#tpu.dimension_semantics<parallel>, #tpu.dimension_semantics<parallel>, #tpu.dimension_semantics<parallel>, #tpu.dimension_semantics<arbitrary>], iteration_bounds = array<i64: 1, 1, 1, 1>, scalar_prefetch = 0 : i64, scratch_operands = 3 : i64, tpu.core_type = #tpu.core_type<tc>, window_params = [{transform_indices = @transform_0, window_bounds = array<i64: 1, 128, 128>}, {transform_indices = @transform_1, window_bounds = array<i64: 1, 128, 128>}, {transform_indices = @transform_2, window_bounds = array<i64: 1, 128, 128>}, {transform_indices = @transform_3, window_bounds = array<i64: 1, 128, 128>}]} {
    %c0_i32 = arith.constant 0 : i32
    %0 = arith.cmpi eq, %arg3, %c0_i32 : i32
    %1 = arith.extui %0 : i1 to i32
    %c0_i32_0 = arith.constant 0 : i32
    %2 = arith.cmpi ne, %1, %c0_i32_0 : i32
    scf.if %2 {
      %cst = arith.constant 0xFF800000 : f32
      %12 = vector.broadcast %cst : f32 to vector<128x1xf32>
      %c0 = arith.constant 0 : index
      %c0_5 = arith.constant 0 : index
      %13 = vector.load %arg8[%c0, %c0_5] : memref<128x1xf32, #tpu.memory_space<vmem>>, vector<128x1xf32>
      tpu.vector_store %arg8[%c0, %c0_5], %12 {strides = array<i32>} : memref<128x1xf32, #tpu.memory_space<vmem>>, vector<128x1xf32>,
      %cst_6 = arith.constant 0.000000e+00 : f32
      %14 = vector.broadcast %cst_6 : f32 to vector<128x1xf32>
      %c0_7 = arith.constant 0 : index
      %c0_8 = arith.constant 0 : index
      %15 = vector.load %arg9[%c0_7, %c0_8] : memref<128x1xf32, #tpu.memory_space<vmem>>, vector<128x1xf32>
      tpu.vector_store %arg9[%c0_7, %c0_8], %14 {strides = array<i32>} : memref<128x1xf32, #tpu.memory_space<vmem>>, vector<128x1xf32>,
      %cst_9 = arith.constant 0.000000e+00 : f32
      %16 = vector.broadcast %cst_9 : f32 to vector<128x128xf32>
      %c0_10 = arith.constant 0 : index
      %c0_11 = arith.constant 0 : index
      %17 = vector.load %arg10[%c0_10, %c0_11] : memref<128x128xf32, #tpu.memory_space<vmem>>, vector<128x128xf32>
      tpu.vector_store %arg10[%c0_10, %c0_11], %16 {strides = array<i32>} : memref<128x128xf32, #tpu.memory_space<vmem>>, vector<128x128xf32>,
    } else {
    }
    %c128_i32 = arith.constant 128 : i32
    %3 = arith.muli %arg3, %c128_i32 : i32
    %c1_i32 = arith.constant 1 : i32
    %4 = arith.addi %arg2, %c1_i32 : i32
    %c128_i32_1 = arith.constant 128 : i32
    %5 = arith.muli %4, %c128_i32_1 : i32
    %6 = arith.cmpi slt, %3, %5 : i32
    %7 = arith.extui %6 : i1 to i32
    %c0_i32_2 = arith.constant 0 : i32
    %8 = arith.cmpi ne, %7, %c0_i32_2 : i32
    scf.if %8 {
      %c0 = arith.constant 0 : index
      %c0_5 = arith.constant 0 : index
      %c0_6 = arith.constant 0 : index
      %12 = vector.load %arg4[%c0, %c0_5, %c0_6] : memref<1x128x128xf32, #tpu.memory_space<vmem>>, vector<1x128x128xf32>
      %13 = vector.shape_cast %12 : vector<1x128x128xf32> to vector<128x128xf32>
      %cst = arith.constant 1.200000e-01 : f32
      %14 = vector.broadcast %cst : f32 to vector<128x128xf32>
      %15 = arith.mulf %13, %14 : vector<128x128xf32>
      %16 = arith.truncf %15 : vector<128x128xf32> to vector<128x128xbf16>
      %c0_7 = arith.constant 0 : index
      %c0_8 = arith.constant 0 : index
      %c0_9 = arith.constant 0 : index
      %17 = vector.load %arg5[%c0_7, %c0_8, %c0_9] : memref<1x128x128xf32, #tpu.memory_space<vmem>>, vector<1x128x128xf32>
      %18 = vector.shape_cast %17 : vector<1x128x128xf32> to vector<128x128xf32>
      %19 = arith.truncf %18 : vector<128x128xf32> to vector<128x128xbf16>
      %cst_10 = arith.constant dense<0.000000e+00> : vector<128x128xf32>
      %20 = tpu.matmul %16, %19, %cst_10 {dimension_numbers = #tpu.dot_dimension_numbers<[1], [1], [0], [0], [0, 0, 1, 0], [], []>} : vector<128x128xbf16>, vector<128x128xbf16>, vector<128x128xf32> -> vector<128x128xf32>
      %c128_i32_11 = arith.constant 128 : i32
      %21 = arith.muli %arg2, %c128_i32_11 : i32
      %22 = tpu.iota {dimensions = array<i32: 0>} : vector<128x128xi32>
      %23 = vector.broadcast %21 : i32 to vector<128x128xi32>
      %24 = arith.addi %23, %22 : vector<128x128xi32>
      %c128_i32_12 = arith.constant 128 : i32
      %25 = arith.muli %arg3, %c128_i32_12 : i32
      %26 = tpu.iota {dimensions = array<i32: 1>} : vector<128x128xi32>
      %27 = vector.broadcast %25 : i32 to vector<128x128xi32>
      %28 = arith.addi %27, %26 : vector<128x128xi32>
      %29 = arith.cmpi sge, %24, %28 : vector<128x128xi32>
      %cst_13 = arith.constant 0xFF800000 : f32
      %30 = vector.broadcast %cst_13 : f32 to vector<128x128xf32>
      %31 = arith.select %29, %20, %30 : vector<128x128xi1>, vector<128x128xf32>
      %c0_14 = arith.constant 0 : index
      %c0_15 = arith.constant 0 : index
      %32 = vector.load %arg8[%c0_14, %c0_15] : memref<128x1xf32, #tpu.memory_space<vmem>>, vector<128x1xf32>
      %cst_16 = arith.constant dense<0xFF800000> : vector<128xf32>
      %33 = vector.multi_reduction <maximumf>, %31, %cst_16 [1] : vector<128x128xf32> to vector<128xf32>
      %34 = vector.shape_cast %33 : vector<128xf32> to vector<128x1xf32>
      %35 = arith.maximumf %32, %34 : vector<128x1xf32>
      %36 = arith.subf %32, %35 : vector<128x1xf32>
      %37 = math.exp %36 : vector<128x1xf32>
      %38 = vector.broadcast %35 : vector<128x1xf32> to vector<128x128xf32>
      %39 = arith.subf %31, %38 : vector<128x128xf32>
      %40 = math.exp %39 : vector<128x128xf32>
      %c0_17 = arith.constant 0 : index
      %c0_18 = arith.constant 0 : index
      %41 = vector.load %arg9[%c0_17, %c0_18] : memref<128x1xf32, #tpu.memory_space<vmem>>, vector<128x1xf32>
      %42 = arith.mulf %37, %41 : vector<128x1xf32>
      %cst_19 = arith.constant dense<0.000000e+00> : vector<128xf32>
      %43 = vector.multi_reduction <add>, %40, %cst_19 [1] : vector<128x128xf32> to vector<128xf32>
      %44 = vector.shape_cast %43 : vector<128xf32> to vector<128x1xf32>
      %45 = arith.addf %42, %44 : vector<128x1xf32>
      %c0_20 = arith.constant 0 : index
      %c0_21 = arith.constant 0 : index
      %46 = vector.load %arg9[%c0_20, %c0_21] : memref<128x1xf32, #tpu.memory_space<vmem>>, vector<128x1xf32>
      tpu.vector_store %arg9[%c0_20, %c0_21], %45 {strides = array<i32>} : memref<128x1xf32, #tpu.memory_space<vmem>>, vector<128x1xf32>,
      %c0_22 = arith.constant 0 : index
      %c0_23 = arith.constant 0 : index
      %47 = vector.load %arg10[%c0_22, %c0_23] : memref<128x128xf32, #tpu.memory_space<vmem>>, vector<128x128xf32>
      %48 = vector.broadcast %37 : vector<128x1xf32> to vector<128x128xf32>
      %49 = arith.mulf %48, %47 : vector<128x128xf32>
      %50 = arith.truncf %40 : vector<128x128xf32> to vector<128x128xbf16>
      %c0_24 = arith.constant 0 : index
      %c0_25 = arith.constant 0 : index
      %c0_26 = arith.constant 0 : index
      %51 = vector.load %arg6[%c0_24, %c0_25, %c0_26] : memref<1x128x128xf32, #tpu.memory_space<vmem>>, vector<1x128x128xf32>
      %52 = vector.shape_cast %51 : vector<1x128x128xf32> to vector<128x128xf32>
      %53 = arith.truncf %52 : vector<128x128xf32> to vector<128x128xbf16>
      %cst_27 = arith.constant dense<0.000000e+00> : vector<128x128xf32>
      %54 = tpu.matmul %50, %53, %cst_27 {dimension_numbers = #tpu.dot_dimension_numbers<[1], [0], [0], [1], [0, 0, 1, 1], [], []>} : vector<128x128xbf16>, vector<128x128xbf16>, vector<128x128xf32> -> vector<128x128xf32>
      %55 = arith.addf %49, %54 : vector<128x128xf32>
      %c0_28 = arith.constant 0 : index
      %c0_29 = arith.constant 0 : index
      %56 = vector.load %arg10[%c0_28, %c0_29] : memref<128x128xf32, #tpu.memory_space<vmem>>, vector<128x128xf32>
      tpu.vector_store %arg10[%c0_28, %c0_29], %55 {strides = array<i32>} : memref<128x128xf32, #tpu.memory_space<vmem>>, vector<128x128xf32>,
      %c0_30 = arith.constant 0 : index
      %c0_31 = arith.constant 0 : index
      %57 = vector.load %arg8[%c0_30, %c0_31] : memref<128x1xf32, #tpu.memory_space<vmem>>, vector<128x1xf32>
      tpu.vector_store %arg8[%c0_30, %c0_31], %35 {strides = array<i32>} : memref<128x1xf32, #tpu.memory_space<vmem>>, vector<128x1xf32>,
    } else {
    }
    %c0_i32_3 = arith.constant 0 : i32
    %9 = arith.cmpi eq, %arg3, %c0_i32_3 : i32
    %10 = arith.extui %9 : i1 to i32
    %c0_i32_4 = arith.constant 0 : i32
    %11 = arith.cmpi ne, %10, %c0_i32_4 : i32
    scf.if %11 {
      %c0 = arith.constant 0 : index
      %c0_5 = arith.constant 0 : index
      %12 = vector.load %arg10[%c0, %c0_5] : memref<128x128xf32, #tpu.memory_space<vmem>>, vector<128x128xf32>
      %c0_6 = arith.constant 0 : index
      %c0_7 = arith.constant 0 : index
      %13 = vector.load %arg9[%c0_6, %c0_7] : memref<128x1xf32, #tpu.memory_space<vmem>>, vector<128x1xf32>
      %14 = tpu.reciprocal %13 {approx = true} : vector<128x1xf32> -> vector<128x1xf32>
      %15 = vector.broadcast %14 : vector<128x1xf32> to vector<128x128xf32>
      %16 = arith.mulf %12, %15 : vector<128x128xf32>
      %c0_8 = arith.constant 0 : index
      %c0_9 = arith.constant 0 : index
      %c0_10 = arith.constant 0 : index
      %17 = vector.load %arg7[%c0_8, %c0_9, %c0_10] : memref<1x128x128xf32, #tpu.memory_space<vmem>>, vector<1x128x128xf32>
      %18 = vector.shape_cast %17 : vector<1x128x128xf32> to vector<128x128xf32>
      %19 = vector.shape_cast %16 : vector<128x128xf32> to vector<1x128x128xf32>
      tpu.vector_store %arg7[%c0_8, %c0_9, %c0_10], %19 {strides = array<i32>} : memref<1x128x128xf32, #tpu.memory_space<vmem>>, vector<1x128x128xf32>,
    } else {
    }
    return
  }
  func.func @transform_0(%arg0: i32, %arg1: i32, %arg2: i32, %arg3: i32) -> (i32, i32, i32) {
    %c0_i32 = arith.constant 0 : i32
    return %arg0, %arg2, %arg1 : i32, i32, i32
  }
  func.func @transform_1(%arg0: i32, %arg1: i32, %arg2: i32, %arg3: i32) -> (i32, i32, i32) {
    %c0_i32 = arith.constant 0 : i32
    return %arg0, %arg3, %arg1 : i32, i32, i32
  }
  func.func @transform_2(%arg0: i32, %arg1: i32, %arg2: i32, %arg3: i32) -> (i32, i32, i32) {
    %c0_i32 = arith.constant 0 : i32
    return %arg0, %arg3, %arg1 : i32, i32, i32
  }
  func.func @transform_3(%arg0: i32, %arg1: i32, %arg2: i32, %arg3: i32) -> (i32, i32, i32) {
    %c0_i32 = arith.constant 0 : i32
    return %arg0, %arg2, %arg1 : i32, i32, i32
  }
}

module attributes {stable_mosaic.version = 11 : i64} {
  func.func @_linear_kernel(%arg0: i32, %arg1: i32, %arg2: i32, %arg3: memref<128x128xf32, #tpu.memory_space<vmem>>, %arg4: memref<128x128xf32, #tpu.memory_space<vmem>>, %arg5: memref<128x128xf32, #tpu.memory_space<vmem>>, %arg6: memref<128x128xf32, #tpu.memory_space<vmem>>) attributes {dimension_semantics = [#tpu.dimension_semantics<parallel>, #tpu.dimension_semantics<parallel>, #tpu.dimension_semantics<arbitrary>], iteration_bounds = array<i64: 1, 1, 1>, scalar_prefetch = 0 : i64, scratch_operands = 1 : i64, tpu.core_type = #tpu.core_type<tc>, window_params = [{transform_indices = @transform_0, window_bounds = array<i64: 128, 128>}, {transform_indices = @transform_1, window_bounds = array<i64: 128, 128>}, {transform_indices = @transform_2, window_bounds = array<i64: 128, 128>}]} {
    %c0_i32 = arith.constant 0 : i32
    %0 = arith.cmpi eq, %arg2, %c0_i32 : i32
    %1 = arith.extui %0 : i1 to i32
    %c0_i32_0 = arith.constant 0 : i32
    %2 = arith.cmpi ne, %1, %c0_i32_0 : i32
    scf.if %2 {
      %cst_10 = arith.constant 0.000000e+00 : f32
      %14 = vector.broadcast %cst_10 : f32 to vector<128x128xf32>
      %c0_11 = arith.constant 0 : index
      %c0_12 = arith.constant 0 : index
      %15 = vector.load %arg6[%c0_11, %c0_12] : memref<128x128xf32, #tpu.memory_space<vmem>>, vector<128x128xf32>
      tpu.vector_store %arg6[%c0_11, %c0_12], %14 {strides = array<i32>} : memref<128x128xf32, #tpu.memory_space<vmem>>, vector<128x128xf32>,
    } else {
    }
    %c0 = arith.constant 0 : index
    %c0_1 = arith.constant 0 : index
    %3 = vector.load %arg6[%c0, %c0_1] : memref<128x128xf32, #tpu.memory_space<vmem>>, vector<128x128xf32>
    %c0_2 = arith.constant 0 : index
    %c0_3 = arith.constant 0 : index
    %4 = vector.load %arg3[%c0_2, %c0_3] : memref<128x128xf32, #tpu.memory_space<vmem>>, vector<128x128xf32>
    %5 = arith.truncf %4 : vector<128x128xf32> to vector<128x128xbf16>
    %c0_4 = arith.constant 0 : index
    %c0_5 = arith.constant 0 : index
    %6 = vector.load %arg4[%c0_4, %c0_5] : memref<128x128xf32, #tpu.memory_space<vmem>>, vector<128x128xf32>
    %7 = arith.truncf %6 : vector<128x128xf32> to vector<128x128xbf16>
    %cst = arith.constant dense<0.000000e+00> : vector<128x128xf32>
    %8 = tpu.matmul %5, %7, %cst {dimension_numbers = #tpu.dot_dimension_numbers<[1], [1], [0], [0], [0, 0, 1, 0], [], []>} : vector<128x128xbf16>, vector<128x128xbf16>, vector<128x128xf32> -> vector<128x128xf32>
    %9 = arith.addf %3, %8 : vector<128x128xf32>
    %c0_6 = arith.constant 0 : index
    %c0_7 = arith.constant 0 : index
    %10 = vector.load %arg6[%c0_6, %c0_7] : memref<128x128xf32, #tpu.memory_space<vmem>>, vector<128x128xf32>
    tpu.vector_store %arg6[%c0_6, %c0_7], %9 {strides = array<i32>} : memref<128x128xf32, #tpu.memory_space<vmem>>, vector<128x128xf32>,
    %c0_i32_8 = arith.constant 0 : i32
    %11 = arith.cmpi eq, %arg2, %c0_i32_8 : i32
    %12 = arith.extui %11 : i1 to i32
    %c0_i32_9 = arith.constant 0 : i32
    %13 = arith.cmpi ne, %12, %c0_i32_9 : i32
    scf.if %13 {
      %c0_10 = arith.constant 0 : index
      %c0_11 = arith.constant 0 : index
      %14 = vector.load %arg6[%c0_10, %c0_11] : memref<128x128xf32, #tpu.memory_space<vmem>>, vector<128x128xf32>
      %c0_12 = arith.constant 0 : index
      %c0_13 = arith.constant 0 : index
      %15 = vector.load %arg5[%c0_12, %c0_13] : memref<128x128xf32, #tpu.memory_space<vmem>>, vector<128x128xf32>
      tpu.vector_store %arg5[%c0_12, %c0_13], %14 {strides = array<i32>} : memref<128x128xf32, #tpu.memory_space<vmem>>, vector<128x128xf32>,
    } else {
    }
    return
  }
  func.func @transform_0(%arg0: i32, %arg1: i32, %arg2: i32) -> (i32, i32) {
    %c0_i32 = arith.constant 0 : i32
    return %arg0, %arg2 : i32, i32
  }
  func.func @transform_1(%arg0: i32, %arg1: i32, %arg2: i32) -> (i32, i32) {
    %c0_i32 = arith.constant 0 : i32
    return %arg1, %arg2 : i32, i32
  }
  func.func @transform_2(%arg0: i32, %arg1: i32, %arg2: i32) -> (i32, i32) {
    %c0_i32 = arith.constant 0 : i32
    return %arg0, %arg1 : i32, i32
  }
}

module attributes {stable_mosaic.version = 11 : i64} {
  func.func @_linear_kernel(%arg0: i32, %arg1: i32, %arg2: i32, %arg3: memref<128x128xf32, #tpu.memory_space<vmem>>, %arg4: memref<512x128xf32, #tpu.memory_space<vmem>>, %arg5: memref<128x512xf32, #tpu.memory_space<vmem>>, %arg6: memref<128x512xf32, #tpu.memory_space<vmem>>) attributes {dimension_semantics = [#tpu.dimension_semantics<parallel>, #tpu.dimension_semantics<parallel>, #tpu.dimension_semantics<arbitrary>], iteration_bounds = array<i64: 1, 1, 1>, scalar_prefetch = 0 : i64, scratch_operands = 1 : i64, tpu.core_type = #tpu.core_type<tc>, window_params = [{transform_indices = @transform_0, window_bounds = array<i64: 128, 128>}, {transform_indices = @transform_1, window_bounds = array<i64: 512, 128>}, {transform_indices = @transform_2, window_bounds = array<i64: 128, 512>}]} {
    %c0_i32 = arith.constant 0 : i32
    %0 = arith.cmpi eq, %arg2, %c0_i32 : i32
    %1 = arith.extui %0 : i1 to i32
    %c0_i32_0 = arith.constant 0 : i32
    %2 = arith.cmpi ne, %1, %c0_i32_0 : i32
    scf.if %2 {
      %cst_10 = arith.constant 0.000000e+00 : f32
      %14 = vector.broadcast %cst_10 : f32 to vector<128x512xf32>
      %c0_11 = arith.constant 0 : index
      %c0_12 = arith.constant 0 : index
      %15 = vector.load %arg6[%c0_11, %c0_12] : memref<128x512xf32, #tpu.memory_space<vmem>>, vector<128x512xf32>
      tpu.vector_store %arg6[%c0_11, %c0_12], %14 {strides = array<i32>} : memref<128x512xf32, #tpu.memory_space<vmem>>, vector<128x512xf32>,
    } else {
    }
    %c0 = arith.constant 0 : index
    %c0_1 = arith.constant 0 : index
    %3 = vector.load %arg6[%c0, %c0_1] : memref<128x512xf32, #tpu.memory_space<vmem>>, vector<128x512xf32>
    %c0_2 = arith.constant 0 : index
    %c0_3 = arith.constant 0 : index
    %4 = vector.load %arg3[%c0_2, %c0_3] : memref<128x128xf32, #tpu.memory_space<vmem>>, vector<128x128xf32>
    %5 = arith.truncf %4 : vector<128x128xf32> to vector<128x128xbf16>
    %c0_4 = arith.constant 0 : index
    %c0_5 = arith.constant 0 : index
    %6 = vector.load %arg4[%c0_4, %c0_5] : memref<512x128xf32, #tpu.memory_space<vmem>>, vector<512x128xf32>
    %7 = arith.truncf %6 : vector<512x128xf32> to vector<512x128xbf16>
    %cst = arith.constant dense<0.000000e+00> : vector<128x512xf32>
    %8 = tpu.matmul %5, %7, %cst {dimension_numbers = #tpu.dot_dimension_numbers<[1], [1], [0], [0], [0, 0, 1, 0], [], []>} : vector<128x128xbf16>, vector<512x128xbf16>, vector<128x512xf32> -> vector<128x512xf32>
    %9 = arith.addf %3, %8 : vector<128x512xf32>
    %c0_6 = arith.constant 0 : index
    %c0_7 = arith.constant 0 : index
    %10 = vector.load %arg6[%c0_6, %c0_7] : memref<128x512xf32, #tpu.memory_space<vmem>>, vector<128x512xf32>
    tpu.vector_store %arg6[%c0_6, %c0_7], %9 {strides = array<i32>} : memref<128x512xf32, #tpu.memory_space<vmem>>, vector<128x512xf32>,
    %c0_i32_8 = arith.constant 0 : i32
    %11 = arith.cmpi eq, %arg2, %c0_i32_8 : i32
    %12 = arith.extui %11 : i1 to i32
    %c0_i32_9 = arith.constant 0 : i32
    %13 = arith.cmpi ne, %12, %c0_i32_9 : i32
    scf.if %13 {
      %c0_10 = arith.constant 0 : index
      %c0_11 = arith.constant 0 : index
      %14 = vector.load %arg6[%c0_10, %c0_11] : memref<128x512xf32, #tpu.memory_space<vmem>>, vector<128x512xf32>
      %cst_12 = arith.constant 0.000000e+00 : f32
      %15 = vector.broadcast %cst_12 : f32 to vector<128x512xf32>
      %16 = arith.maximumf %14, %15 : vector<128x512xf32>
      %17 = arith.mulf %16, %16 : vector<128x512xf32>
      %c0_13 = arith.constant 0 : index
      %c0_14 = arith.constant 0 : index
      %18 = vector.load %arg5[%c0_13, %c0_14] : memref<128x512xf32, #tpu.memory_space<vmem>>, vector<128x512xf32>
      tpu.vector_store %arg5[%c0_13, %c0_14], %17 {strides = array<i32>} : memref<128x512xf32, #tpu.memory_space<vmem>>, vector<128x512xf32>,
    } else {
    }
    return
  }
  func.func @transform_0(%arg0: i32, %arg1: i32, %arg2: i32) -> (i32, i32) {
    %c0_i32 = arith.constant 0 : i32
    return %arg0, %arg2 : i32, i32
  }
  func.func @transform_1(%arg0: i32, %arg1: i32, %arg2: i32) -> (i32, i32) {
    %c0_i32 = arith.constant 0 : i32
    return %arg1, %arg2 : i32, i32
  }
  func.func @transform_2(%arg0: i32, %arg1: i32, %arg2: i32) -> (i32, i32) {
    %c0_i32 = arith.constant 0 : i32
    return %arg0, %arg1 : i32, i32
  }
}

module attributes {stable_mosaic.version = 11 : i64} {
  func.func @_linear_kernel(%arg0: i32, %arg1: i32, %arg2: i32, %arg3: memref<128x512xf32, #tpu.memory_space<vmem>>, %arg4: memref<128x512xf32, #tpu.memory_space<vmem>>, %arg5: memref<128x128xf32, #tpu.memory_space<vmem>>, %arg6: memref<128x128xf32, #tpu.memory_space<vmem>>) attributes {dimension_semantics = [#tpu.dimension_semantics<parallel>, #tpu.dimension_semantics<parallel>, #tpu.dimension_semantics<arbitrary>], iteration_bounds = array<i64: 1, 1, 1>, scalar_prefetch = 0 : i64, scratch_operands = 1 : i64, tpu.core_type = #tpu.core_type<tc>, window_params = [{transform_indices = @transform_0, window_bounds = array<i64: 128, 512>}, {transform_indices = @transform_1, window_bounds = array<i64: 128, 512>}, {transform_indices = @transform_2, window_bounds = array<i64: 128, 128>}]} {
    %c0_i32 = arith.constant 0 : i32
    %0 = arith.cmpi eq, %arg2, %c0_i32 : i32
    %1 = arith.extui %0 : i1 to i32
    %c0_i32_0 = arith.constant 0 : i32
    %2 = arith.cmpi ne, %1, %c0_i32_0 : i32
    scf.if %2 {
      %cst_10 = arith.constant 0.000000e+00 : f32
      %14 = vector.broadcast %cst_10 : f32 to vector<128x128xf32>
      %c0_11 = arith.constant 0 : index
      %c0_12 = arith.constant 0 : index
      %15 = vector.load %arg6[%c0_11, %c0_12] : memref<128x128xf32, #tpu.memory_space<vmem>>, vector<128x128xf32>
      tpu.vector_store %arg6[%c0_11, %c0_12], %14 {strides = array<i32>} : memref<128x128xf32, #tpu.memory_space<vmem>>, vector<128x128xf32>,
    } else {
    }
    %c0 = arith.constant 0 : index
    %c0_1 = arith.constant 0 : index
    %3 = vector.load %arg6[%c0, %c0_1] : memref<128x128xf32, #tpu.memory_space<vmem>>, vector<128x128xf32>
    %c0_2 = arith.constant 0 : index
    %c0_3 = arith.constant 0 : index
    %4 = vector.load %arg3[%c0_2, %c0_3] : memref<128x512xf32, #tpu.memory_space<vmem>>, vector<128x512xf32>
    %5 = arith.truncf %4 : vector<128x512xf32> to vector<128x512xbf16>
    %c0_4 = arith.constant 0 : index
    %c0_5 = arith.constant 0 : index
    %6 = vector.load %arg4[%c0_4, %c0_5] : memref<128x512xf32, #tpu.memory_space<vmem>>, vector<128x512xf32>
    %7 = arith.truncf %6 : vector<128x512xf32> to vector<128x512xbf16>
    %cst = arith.constant dense<0.000000e+00> : vector<128x128xf32>
    %8 = tpu.matmul %5, %7, %cst {dimension_numbers = #tpu.dot_dimension_numbers<[1], [1], [0], [0], [0, 0, 1, 0], [], []>} : vector<128x512xbf16>, vector<128x512xbf16>, vector<128x128xf32> -> vector<128x128xf32>
    %9 = arith.addf %3, %8 : vector<128x128xf32>
    %c0_6 = arith.constant 0 : index
    %c0_7 = arith.constant 0 : index
    %10 = vector.load %arg6[%c0_6, %c0_7] : memref<128x128xf32, #tpu.memory_space<vmem>>, vector<128x128xf32>
    tpu.vector_store %arg6[%c0_6, %c0_7], %9 {strides = array<i32>} : memref<128x128xf32, #tpu.memory_space<vmem>>, vector<128x128xf32>,
    %c0_i32_8 = arith.constant 0 : i32
    %11 = arith.cmpi eq, %arg2, %c0_i32_8 : i32
    %12 = arith.extui %11 : i1 to i32
    %c0_i32_9 = arith.constant 0 : i32
    %13 = arith.cmpi ne, %12, %c0_i32_9 : i32
    scf.if %13 {
      %c0_10 = arith.constant 0 : index
      %c0_11 = arith.constant 0 : index
      %14 = vector.load %arg6[%c0_10, %c0_11] : memref<128x128xf32, #tpu.memory_space<vmem>>, vector<128x128xf32>
      %c0_12 = arith.constant 0 : index
      %c0_13 = arith.constant 0 : index
      %15 = vector.load %arg5[%c0_12, %c0_13] : memref<128x128xf32, #tpu.memory_space<vmem>>, vector<128x128xf32>
      tpu.vector_store %arg5[%c0_12, %c0_13], %14 {strides = array<i32>} : memref<128x128xf32, #tpu.memory_space<vmem>>, vector<128x128xf32>,
    } else {
    }
    return
  }
  func.func @transform_0(%arg0: i32, %arg1: i32, %arg2: i32) -> (i32, i32) {
    %c0_i32 = arith.constant 0 : i32
    return %arg0, %arg2 : i32, i32
  }
  func.func @transform_1(%arg0: i32, %arg1: i32, %arg2: i32) -> (i32, i32) {
    %c0_i32 = arith.constant 0 : i32
    return %arg1, %arg2 : i32, i32
  }
  func.func @transform_2(%arg0: i32, %arg1: i32, %arg2: i32) -> (i32, i32) {
    %c0_i32 = arith.constant 0 : i32
    return %arg0, %arg1 : i32, i32
  }
}

module attributes {stable_mosaic.version = 11 : i64} {
  func.func @_lm_head_ce_kernel(%arg0: i32, %arg1: i32, %arg2: memref<128x128xf32, #tpu.memory_space<vmem>>, %arg3: memref<128x128xf32, #tpu.memory_space<vmem>>, %arg4: memref<128x1xi32, #tpu.memory_space<vmem>>, %arg5: memref<128x1xf32, #tpu.memory_space<vmem>>, %arg6: memref<128x1xf32, #tpu.memory_space<vmem>>, %arg7: memref<128x1xf32, #tpu.memory_space<vmem>>, %arg8: memref<128x1xf32, #tpu.memory_space<vmem>>) attributes {dimension_semantics = [#tpu.dimension_semantics<parallel>, #tpu.dimension_semantics<arbitrary>], iteration_bounds = array<i64: 1, 1>, scalar_prefetch = 0 : i64, scratch_operands = 3 : i64, tpu.core_type = #tpu.core_type<tc>, window_params = [{transform_indices = @transform_0, window_bounds = array<i64: 128, 128>}, {transform_indices = @transform_1, window_bounds = array<i64: 128, 128>}, {transform_indices = @transform_2, window_bounds = array<i64: 128, 1>}, {transform_indices = @transform_3, window_bounds = array<i64: 128, 1>}]} {
    %c0_i32 = arith.constant 0 : i32
    %0 = arith.cmpi eq, %arg1, %c0_i32 : i32
    %1 = arith.extui %0 : i1 to i32
    %c0_i32_0 = arith.constant 0 : i32
    %2 = arith.cmpi ne, %1, %c0_i32_0 : i32
    scf.if %2 {
      %cst_27 = arith.constant 0xFF800000 : f32
      %48 = vector.broadcast %cst_27 : f32 to vector<128x1xf32>
      %c0_28 = arith.constant 0 : index
      %c0_29 = arith.constant 0 : index
      %49 = vector.load %arg6[%c0_28, %c0_29] : memref<128x1xf32, #tpu.memory_space<vmem>>, vector<128x1xf32>
      tpu.vector_store %arg6[%c0_28, %c0_29], %48 {strides = array<i32>} : memref<128x1xf32, #tpu.memory_space<vmem>>, vector<128x1xf32>,
      %cst_30 = arith.constant 0.000000e+00 : f32
      %50 = vector.broadcast %cst_30 : f32 to vector<128x1xf32>
      %c0_31 = arith.constant 0 : index
      %c0_32 = arith.constant 0 : index
      %51 = vector.load %arg7[%c0_31, %c0_32] : memref<128x1xf32, #tpu.memory_space<vmem>>, vector<128x1xf32>
      tpu.vector_store %arg7[%c0_31, %c0_32], %50 {strides = array<i32>} : memref<128x1xf32, #tpu.memory_space<vmem>>, vector<128x1xf32>,
      %cst_33 = arith.constant 0.000000e+00 : f32
      %52 = vector.broadcast %cst_33 : f32 to vector<128x1xf32>
      %c0_34 = arith.constant 0 : index
      %c0_35 = arith.constant 0 : index
      %53 = vector.load %arg8[%c0_34, %c0_35] : memref<128x1xf32, #tpu.memory_space<vmem>>, vector<128x1xf32>
      tpu.vector_store %arg8[%c0_34, %c0_35], %52 {strides = array<i32>} : memref<128x1xf32, #tpu.memory_space<vmem>>, vector<128x1xf32>,
    } else {
    }
    %c0 = arith.constant 0 : index
    %c0_1 = arith.constant 0 : index
    %3 = vector.load %arg2[%c0, %c0_1] : memref<128x128xf32, #tpu.memory_space<vmem>>, vector<128x128xf32>
    %4 = arith.truncf %3 : vector<128x128xf32> to vector<128x128xbf16>
    %c0_2 = arith.constant 0 : index
    %c0_3 = arith.constant 0 : index
    %5 = vector.load %arg3[%c0_2, %c0_3] : memref<128x128xf32, #tpu.memory_space<vmem>>, vector<128x128xf32>
    %6 = arith.truncf %5 : vector<128x128xf32> to vector<128x128xbf16>
    %cst = arith.constant dense<0.000000e+00> : vector<128x128xf32>
    %7 = tpu.matmul %4, %6, %cst {dimension_numbers = #tpu.dot_dimension_numbers<[1], [1], [0], [0], [0, 0, 1, 0], [], []>} : vector<128x128xbf16>, vector<128x128xbf16>, vector<128x128xf32> -> vector<128x128xf32>
    %cst_4 = arith.constant 0.0666666701 : f32
    %8 = vector.broadcast %cst_4 : f32 to vector<128x128xf32>
    %9 = arith.mulf %7, %8 : vector<128x128xf32>
    %10 = math.tanh %9 : vector<128x128xf32>
    %cst_5 = arith.constant 1.000000e+00 : f32
    %11 = vector.broadcast %cst_5 : f32 to vector<128x128xf32>
    %12 = arith.addf %10, %11 : vector<128x128xf32>
    %cst_6 = arith.constant 1.500000e+01 : f32
    %13 = vector.broadcast %cst_6 : f32 to vector<128x128xf32>
    %14 = arith.mulf %13, %12 : vector<128x128xf32>
    %c128_i32 = arith.constant 128 : i32
    %15 = arith.muli %arg1, %c128_i32 : i32
    %16 = tpu.iota {dimensions = array<i32: 1>} : vector<128x128xi32>
    %17 = vector.broadcast %15 : i32 to vector<128x128xi32>
    %18 = arith.addi %17, %16 : vector<128x128xi32>
    %c0_7 = arith.constant 0 : index
    %c0_8 = arith.constant 0 : index
    %19 = vector.load %arg4[%c0_7, %c0_8] : memref<128x1xi32, #tpu.memory_space<vmem>>, vector<128x1xi32>
    %c0_9 = arith.constant 0 : index
    %c0_10 = arith.constant 0 : index
    %20 = vector.load %arg8[%c0_9, %c0_10] : memref<128x1xf32, #tpu.memory_space<vmem>>, vector<128x1xf32>
    %21 = vector.broadcast %19 : vector<128x1xi32> to vector<128x128xi32>
    %22 = arith.cmpi eq, %18, %21 : vector<128x128xi32>
    %cst_11 = arith.constant 0.000000e+00 : f32
    %23 = vector.broadcast %cst_11 : f32 to vector<128x128xf32>
    %24 = arith.select %22, %14, %23 : vector<128x128xi1>, vector<128x128xf32>
    %cst_12 = arith.constant dense<0.000000e+00> : vector<128xf32>
    %25 = vector.multi_reduction <add>, %24, %cst_12 [1] : vector<128x128xf32> to vector<128xf32>
    %26 = vector.shape_cast %25 : vector<128xf32> to vector<128x1xf32>
    %27 = arith.addf %20, %26 : vector<128x1xf32>
    %c0_13 = arith.constant 0 : index
    %c0_14 = arith.constant 0 : index
    %28 = vector.load %arg8[%c0_13, %c0_14] : memref<128x1xf32, #tpu.memory_space<vmem>>, vector<128x1xf32>
    tpu.vector_store %arg8[%c0_13, %c0_14], %27 {strides = array<i32>} : memref<128x1xf32, #tpu.memory_space<vmem>>, vector<128x1xf32>,
    %c0_15 = arith.constant 0 : index
    %c0_16 = arith.constant 0 : index
    %29 = vector.load %arg6[%c0_15, %c0_16] : memref<128x1xf32, #tpu.memory_space<vmem>>, vector<128x1xf32>
    %cst_17 = arith.constant dense<0xFF800000> : vector<128xf32>
    %30 = vector.multi_reduction <maximumf>, %14, %cst_17 [1] : vector<128x128xf32> to vector<128xf32>
    %31 = vector.shape_cast %30 : vector<128xf32> to vector<128x1xf32>
    %32 = arith.maximumf %29, %31 : vector<128x1xf32>
    %c0_18 = arith.constant 0 : index
    %c0_19 = arith.constant 0 : index
    %33 = vector.load %arg7[%c0_18, %c0_19] : memref<128x1xf32, #tpu.memory_space<vmem>>, vector<128x1xf32>
    %34 = arith.subf %29, %32 : vector<128x1xf32>
    %35 = math.exp %34 : vector<128x1xf32>
    %36 = arith.mulf %33, %35 : vector<128x1xf32>
    %37 = vector.broadcast %32 : vector<128x1xf32> to vector<128x128xf32>
    %38 = arith.subf %14, %37 : vector<128x128xf32>
    %39 = math.exp %38 : vector<128x128xf32>
    %cst_20 = arith.constant dense<0.000000e+00> : vector<128xf32>
    %40 = vector.multi_reduction <add>, %39, %cst_20 [1] : vector<128x128xf32> to vector<128xf32>
    %41 = vector.shape_cast %40 : vector<128xf32> to vector<128x1xf32>
    %42 = arith.addf %36, %41 : vector<128x1xf32>
    %c0_21 = arith.constant 0 : index
    %c0_22 = arith.constant 0 : index
    %43 = vector.load %arg7[%c0_21, %c0_22] : memref<128x1xf32, #tpu.memory_space<vmem>>, vector<128x1xf32>
    tpu.vector_store %arg7[%c0_21, %c0_22], %42 {strides = array<i32>} : memref<128x1xf32, #tpu.memory_space<vmem>>, vector<128x1xf32>,
    %c0_23 = arith.constant 0 : index
    %c0_24 = arith.constant 0 : index
    %44 = vector.load %arg6[%c0_23, %c0_24] : memref<128x1xf32, #tpu.memory_space<vmem>>, vector<128x1xf32>
    tpu.vector_store %arg6[%c0_23, %c0_24], %32 {strides = array<i32>} : memref<128x1xf32, #tpu.memory_space<vmem>>, vector<128x1xf32>,
    %c0_i32_25 = arith.constant 0 : i32
    %45 = arith.cmpi eq, %arg1, %c0_i32_25 : i32
    %46 = arith.extui %45 : i1 to i32
    %c0_i32_26 = arith.constant 0 : i32
    %47 = arith.cmpi ne, %46, %c0_i32_26 : i32
    scf.if %47 {
      %c0_27 = arith.constant 0 : index
      %c0_28 = arith.constant 0 : index
      %48 = vector.load %arg6[%c0_27, %c0_28] : memref<128x1xf32, #tpu.memory_space<vmem>>, vector<128x1xf32>
      %c0_29 = arith.constant 0 : index
      %c0_30 = arith.constant 0 : index
      %49 = vector.load %arg7[%c0_29, %c0_30] : memref<128x1xf32, #tpu.memory_space<vmem>>, vector<128x1xf32>
      %50 = math.log %49 : vector<128x1xf32>
      %51 = arith.addf %48, %50 : vector<128x1xf32>
      %c0_31 = arith.constant 0 : index
      %c0_32 = arith.constant 0 : index
      %52 = vector.load %arg8[%c0_31, %c0_32] : memref<128x1xf32, #tpu.memory_space<vmem>>, vector<128x1xf32>
      %53 = arith.subf %51, %52 : vector<128x1xf32>
      %c0_33 = arith.constant 0 : index
      %c0_34 = arith.constant 0 : index
      %54 = vector.load %arg5[%c0_33, %c0_34] : memref<128x1xf32, #tpu.memory_space<vmem>>, vector<128x1xf32>
      tpu.vector_store %arg5[%c0_33, %c0_34], %53 {strides = array<i32>} : memref<128x1xf32, #tpu.memory_space<vmem>>, vector<128x1xf32>,
    } else {
    }
    return
  }
  func.func @transform_0(%arg0: i32, %arg1: i32) -> (i32, i32) {
    %c0_i32 = arith.constant 0 : i32
    %c0_i32_0 = arith.constant 0 : i32
    return %arg0, %c0_i32 : i32, i32
  }
  func.func @transform_1(%arg0: i32, %arg1: i32) -> (i32, i32) {
    %c0_i32 = arith.constant 0 : i32
    %c0_i32_0 = arith.constant 0 : i32
    return %arg1, %c0_i32 : i32, i32
  }
  func.func @transform_2(%arg0: i32, %arg1: i32) -> (i32, i32) {
    %c0_i32 = arith.constant 0 : i32
    %c0_i32_0 = arith.constant 0 : i32
    return %arg0, %c0_i32 : i32, i32
  }
  func.func @transform_3(%arg0: i32, %arg1: i32) -> (i32, i32) {
    %c0_i32 = arith.constant 0 : i32
    %c0_i32_0 = arith.constant 0 : i32
    return %arg0, %c0_i32 : i32, i32
  }
}

</mosaic_0001>

<llo_original>
// kernel: gpt_forward.57
$region0: #{gpt_forward.57}
  #allocation0 [shape = 'u32[]', space=smem, size = 0x4, offset = 0x4, fixed_abs, tag = 'smem constant byte address 0x4 - core index']
  #allocation1 [shape = 'u32[144,128]{1,0:T(1,128)}', space=vmem, size = 0x12000, scoped, tag = 'internal scratch']
  %s0 = inlined_call_operand.vmem [shape: f32[128,128], index: 0, kind: input, shape index: {}]
  %s1 = inlined_call_operand.vmem [shape: f32[128,128], index: 1, kind: output, shape index: {}]
  %s2 = sld [smem:[#allocation0]]
  $region14: #{gpt_forward.57} parent=0
    _
  %s4 = ssub.s32 1, %s2
  %s5 = scalar_select 0, %s4, %s2
  // Predicated region
  $region2: #{gpt_forward.57} parent=0 // pred_check
    _
  $region3: #{gpt_forward.57} parent=0 // pred_check_branch
    %7 = sbr.rel (0) target = $region5
  $region4: #{gpt_forward.57} parent=0 // pred_region
    _
  $region5: #{gpt_forward.57} parent=0 // pred_fallthru
    _
  %v8 = vld [vmem:[%s0] sm:$0xff]
  %v9 = vld [vmem:[%s0 + $0x8] sm:$0xff]
  %v10 = vld [vmem:[%s0 + $0x10] sm:$0xff]
  %v11 = vld [vmem:[%s0 + $0x18] sm:$0xff]
  %v12 = vld [vmem:[%s0 + $0x20] sm:$0xff]
  %v13 = vld [vmem:[%s0 + $0x28] sm:$0xff]
  %v14 = vld [vmem:[%s0 + $0x30] sm:$0xff]
  %v15 = vld [vmem:[%s0 + $0x38] sm:$0xff]
  %v16 = vld [vmem:[%s0 + $0x40] sm:$0xff]
  %v17 = vld [vmem:[%s0 + $0x48] sm:$0xff]
  %v18 = vld [vmem:[%s0 + $0x50] sm:$0xff]
  %v19 = vld [vmem:[%s0 + $0x58] sm:$0xff]
  %v20 = vld [vmem:[%s0 + $0x60] sm:$0xff]
  %v21 = vld [vmem:[%s0 + $0x68] sm:$0xff]
  %v22 = vld [vmem:[%s0 + $0x70] sm:$0xff]
  %v23 = vld [vmem:[%s0 + $0x78] sm:$0xff]
  %v24 = vmul.f32 %v8, %v8
  %v25 = vmul.f32 %v9, %v9
  %v26 = vmul.f32 %v10, %v10
  %v27 = vmul.f32 %v11, %v11
  %v28 = vmul.f32 %v12, %v12
  %v29 = vmul.f32 %v13, %v13
  %v30 = vmul.f32 %v14, %v14
  %v31 = vmul.f32 %v15, %v15
  %v32 = vmul.f32 %v16, %v16
  %v33 = vmul.f32 %v17, %v17
  %v34 = vmul.f32 %v18, %v18
  %v35 = vmul.f32 %v19, %v19
  %v36 = vmul.f32 %v20, %v20
  %v37 = vmul.f32 %v21, %v21
  %v38 = vmul.f32 %v22, %v22
  %v39 = vmul.f32 %v23, %v23
  %40 = vadd.xlane.f32.xlu0 %v24
  %v41 = vpop.xlane.xlu0 %40
  %42 = vadd.xlane.f32.xlu0 %v25
  %v43 = vpop.xlane.xlu0 %42
  %44 = vadd.xlane.f32.xlu0 %v26
  %v45 = vpop.xlane.xlu0 %44
  %46 = vadd.xlane.f32.xlu0 %v27
  %v47 = vpop.xlane.xlu0 %46
  %48 = vadd.xlane.f32.xlu0 %v28
  %v49 = vpop.xlane.xlu0 %48
  %50 = vadd.xlane.f32.xlu0 %v29
  %v51 = vpop.xlane.xlu0 %50
  %52 = vadd.xlane.f32.xlu0 %v30
  %v53 = vpop.xlane.xlu0 %52
  %54 = vadd.xlane.f32.xlu0 %v31
  %v55 = vpop.xlane.xlu0 %54
  %56 = vadd.xlane.f32.xlu0 %v32
  %v57 = vpop.xlane.xlu0 %56
  %58 = vadd.xlane.f32.xlu0 %v33
  %v59 = vpop.xlane.xlu0 %58
  %60 = vadd.xlane.f32.xlu0 %v34
  %v61 = vpop.xlane.xlu0 %60
  %62 = vadd.xlane.f32.xlu0 %v35
  %v63 = vpop.xlane.xlu0 %62
  %64 = vadd.xlane.f32.xlu0 %v36
  %v65 = vpop.xlane.xlu0 %64
  %66 = vadd.xlane.f32.xlu0 %v37
  %v67 = vpop.xlane.xlu0 %66
  %68 = vadd.xlane.f32.xlu0 %v38
  %v69 = vpop.xlane.xlu0 %68
  %70 = vadd.xlane.f32.xlu0 %v39
  %v71 = vpop.xlane.xlu0 %70
  %v72 = vrcp.pop 128.0
  %v73 = vmul.f32 %v41, %v72
  %v74 = vmul.f32 %v43, %v72
  %v75 = vmul.f32 %v45, %v72
  %v76 = vmul.f32 %v47, %v72
  %v77 = vmul.f32 %v49, %v72
  %v78 = vmul.f32 %v51, %v72
  %v79 = vmul.f32 %v53, %v72
  %v80 = vmul.f32 %v55, %v72
  %v81 = vmul.f32 %v57, %v72
  %v82 = vmul.f32 %v59, %v72
  %v83 = vmul.f32 %v61, %v72
  %v84 = vmul.f32 %v63, %v72
  %v85 = vmul.f32 %v65, %v72
  %v86 = vmul.f32 %v67, %v72
  %v87 = vmul.f32 %v69, %v72
  %v88 = vmul.f32 %v71, %v72
  %v89 = vadd.f32 %v73, 1.1920929e-07
  %v90 = vadd.f32 %v74, 1.1920929e-07
  %v91 = vadd.f32 %v75, 1.1920929e-07
  %v92 = vadd.f32 %v76, 1.1920929e-07
  %v93 = vadd.f32 %v77, 1.1920929e-07
  %v94 = vadd.f32 %v78, 1.1920929e-07
  %v95 = vadd.f32 %v79, 1.1920929e-07
  %v96 = vadd.f32 %v80, 1.1920929e-07
  %v97 = vadd.f32 %v81, 1.1920929e-07
  %v98 = vadd.f32 %v82, 1.1920929e-07
  %v99 = vadd.f32 %v83, 1.1920929e-07
  %v100 = vadd.f32 %v84, 1.1920929e-07
  %v101 = vadd.f32 %v85, 1.1920929e-07
  %v102 = vadd.f32 %v86, 1.1920929e-07
  %v103 = vadd.f32 %v87, 1.1920929e-07
  %v104 = vadd.f32 %v88, 1.1920929e-07
  %v105 = vrsqrt.pop %v89
  %v106 = vrsqrt.pop %v90
  %v107 = vrsqrt.pop %v91
  %v108 = vrsqrt.pop %v92
  %v109 = vrsqrt.pop %v93
  %v110 = vrsqrt.pop %v94
  %v111 = vrsqrt.pop %v95
  %v112 = vrsqrt.pop %v96
  %v113 = vrsqrt.pop %v97
  %v114 = vrsqrt.pop %v98
  %v115 = vrsqrt.pop %v99
  %v116 = vrsqrt.pop %v100
  %v117 = vrsqrt.pop %v101
  %v118 = vrsqrt.pop %v102
  %v119 = vrsqrt.pop %v103
  %v120 = vrsqrt.pop %v104
  %v121 = vmul.f32 %v8, %v105
  %v122 = vmul.f32 %v9, %v106
  %v123 = vmul.f32 %v10, %v107
  %v124 = vmul.f32 %v11, %v108
  %v125 = vmul.f32 %v12, %v109
  %v126 = vmul.f32 %v13, %v110
  %v127 = vmul.f32 %v14, %v111
  %v128 = vmul.f32 %v15, %v112
  %v129 = vmul.f32 %v16, %v113
  %v130 = vmul.f32 %v17, %v114
  %v131 = vmul.f32 %v18, %v115
  %v132 = vmul.f32 %v19, %v116
  %v133 = vmul.f32 %v20, %v117
  %v134 = vmul.f32 %v21, %v118
  %v135 = vmul.f32 %v22, %v119
  %v136 = vmul.f32 %v23, %v120
  %137 = vst [vmem:[%s1] sm:$0xff] %v121
  %138 = vst [vmem:[%s1 + $0x8] sm:$0xff] %v122
  %139 = vst [vmem:[%s1 + $0x10] sm:$0xff] %v123
  %140 = vst [vmem:[%s1 + $0x18] sm:$0xff] %v124
  %141 = vst [vmem:[%s1 + $0x20] sm:$0xff] %v125
  %142 = vst [vmem:[%s1 + $0x28] sm:$0xff] %v126
  %143 = vst [vmem:[%s1 + $0x30] sm:$0xff] %v127
  %144 = vst [vmem:[%s1 + $0x38] sm:$0xff] %v128
  %145 = vst [vmem:[%s1 + $0x40] sm:$0xff] %v129
  %146 = vst [vmem:[%s1 + $0x48] sm:$0xff] %v130
  %147 = vst [vmem:[%s1 + $0x50] sm:$0xff] %v131
  %148 = vst [vmem:[%s1 + $0x58] sm:$0xff] %v132
  %149 = vst [vmem:[%s1 + $0x60] sm:$0xff] %v133
  %150 = vst [vmem:[%s1 + $0x68] sm:$0xff] %v134
  %151 = vst [vmem:[%s1 + $0x70] sm:$0xff] %v135
  %152 = vst [vmem:[%s1 + $0x78] sm:$0xff] %v136
  // Predicated region
  $region6: #{gpt_forward.57} parent=0 // pred_check
    _
  $region7: #{gpt_forward.57} parent=0 // pred_check_branch
    %154 = sbr.rel (0) target = $region9
  $region8: #{gpt_forward.57} parent=0 // pred_region
    _
  $region9: #{gpt_forward.57} parent=0 // pred_fallthru
    _
  // Predicated region
  $region10: #{gpt_forward.57} parent=0 // pred_check
    _
  $region11: #{gpt_forward.57} parent=0 // pred_check_branch
    %156 = sbr.rel (0) target = $region13
  $region12: #{gpt_forward.57} parent=0 // pred_region
    _
  $region13: #{gpt_forward.57} parent=0 // pred_fallthru
    _

// kernel: gpt_forward.58
$region0: #{gpt_forward.58}
  #allocation0 [shape = 'u32[]', space=smem, size = 0x4, offset = 0x4, fixed_abs, tag = 'smem constant byte address 0x4 - core index']
  #allocation1 [shape = 'u32[144,128]{1,0:T(1,128)}', space=vmem, size = 0x12000, scoped, tag = 'internal scratch']
  %s0 = inlined_call_operand.vmem [shape: f32[2], index: 0, kind: input, shape index: {}]
  %s1 = inlined_call_operand.vmem [shape: f32[128,128], index: 1, kind: input, shape index: {}, may-alias: {1,2}]
  %s2 = inlined_call_operand.vmem [shape: f32[128,128], index: 2, kind: input, shape index: {}, may-alias: {1,2}]
  %s3 = inlined_call_operand.vmem [shape: f32[128,128], index: 3, kind: output, shape index: {0}]
  %s4 = inlined_call_operand.vmem [shape: f32[128,128], index: 4, kind: output, shape index: {1}]
  %5 = xla_tuple %s3, %s4
  %s6 = sld [smem:[#allocation0]]
  $region34: #{gpt_forward.58} parent=0
    _
  %s8 = ssub.s32 1, %s6
  %s9 = scalar_select 0, %s8, %s6
  $region1: #{gpt_forward.58} parent=0
    #allocation2 [shape = 'u8[512]{0}', space=smem, size = 0x200, scoped, tag = 'input window, operand 0, single buffered']
    #allocation3 [shape = 's32[1]{0}', space=sflag, size = 0x4, scoped, tag = 'scoped memory for gpt_forward.58']
    %10 = vsyncpa [#allocation3], 0
    // Predicated region
    $region2: #{gpt_forward.58} parent=1 // pred_check
      _
    $region3: #{gpt_forward.58} parent=1 // pred_check_branch
      %12 = sbr.rel (0) target = $region5
    $region4: #{gpt_forward.58} parent=1 // pred_region
      %s14 = ssub.s32 16, 16
      %15 = vsyncadd [#allocation3], %s14
      %s17 = sshll.u32 %s0, 4
      %s18 = int_to_ptr.vmem [resolvable:$true] %s17
      %20 = dma.vmem_to_smem %s18, 16, [#allocation2], [#allocation3]
    $region5: #{gpt_forward.58} parent=1 // pred_fallthru
      _
    // Predicated region
    $region6: #{gpt_forward.58} parent=1 // pred_check
      _
    $region7: #{gpt_forward.58} parent=1 // pred_check_branch
      %22 = sbr.rel (0) target = $region9
    $region8: #{gpt_forward.58} parent=1 // pred_region
      _
    $region9: #{gpt_forward.58} parent=1 // pred_fallthru
      _
    // Predicated region
    $region10: #{gpt_forward.58} parent=1 // pred_check
      _
    $region11: #{gpt_forward.58} parent=1 // pred_check_branch
      %24 = sbr.rel (0) target = $region13
    $region12: #{gpt_forward.58} parent=1 // pred_region
      _
    $region13: #{gpt_forward.58} parent=1 // pred_fallthru
      _
    // Predicated region
    $region14: #{gpt_forward.58} parent=1 // pred_check
      _
    $region15: #{gpt_forward.58} parent=1 // pred_check_branch
      %26 = sbr.rel (0) target = $region17
    $region16: #{gpt_forward.58} parent=1 // pred_region
      %27 = dma.done [#allocation3], 16
    $region17: #{gpt_forward.58} parent=1 // pred_fallthru
      _
    %28 = sfence
    %s29 = sld [smem:[#allocation2]]
    %s30 = sld [smem:[#allocation2 + $0x1]]
    %v31 = vld [vmem:[%s1] sm:$0xff]
    %v32 = vld [vmem:[%s1 + $0x8] sm:$0xff]
    %v33 = vld [vmem:[%s1 + $0x10] sm:$0xff]
    %v34 = vld [vmem:[%s1 + $0x18] sm:$0xff]
    %v35 = vld [vmem:[%s1 + $0x20] sm:$0xff]
    %v36 = vld [vmem:[%s1 + $0x28] sm:$0xff]
    %v37 = vld [vmem:[%s1 + $0x30] sm:$0xff]
    %v38 = vld [vmem:[%s1 + $0x38] sm:$0xff]
    %v39 = vld [vmem:[%s1 + $0x40] sm:$0xff]
    %v40 = vld [vmem:[%s1 + $0x48] sm:$0xff]
    %v41 = vld [vmem:[%s1 + $0x50] sm:$0xff]
    %v42 = vld [vmem:[%s1 + $0x58] sm:$0xff]
    %v43 = vld [vmem:[%s1 + $0x60] sm:$0xff]
    %v44 = vld [vmem:[%s1 + $0x68] sm:$0xff]
    %v45 = vld [vmem:[%s1 + $0x70] sm:$0xff]
    %v46 = vld [vmem:[%s1 + $0x78] sm:$0xff]
    %v47 = vstv %s29
    %v48 = vmul.f32 %v47, %v31
    %v49 = vmul.f32 %v47, %v32
    %v50 = vmul.f32 %v47, %v33
    %v51 = vmul.f32 %v47, %v34
    %v52 = vmul.f32 %v47, %v35
    %v53 = vmul.f32 %v47, %v36
    %v54 = vmul.f32 %v47, %v37
    %v55 = vmul.f32 %v47, %v38
    %v56 = vmul.f32 %v47, %v39
    %v57 = vmul.f32 %v47, %v40
    %v58 = vmul.f32 %v47, %v41
    %v59 = vmul.f32 %v47, %v42
    %v60 = vmul.f32 %v47, %v43
    %v61 = vmul.f32 %v47, %v44
    %v62 = vmul.f32 %v47, %v45
    %v63 = vmul.f32 %v47, %v46
    %v64 = vld [vmem:[%s2] sm:$0xff]
    %v65 = vld [vmem:[%s2 + $0x8] sm:$0xff]
    %v66 = vld [vmem:[%s2 + $0x10] sm:$0xff]
    %v67 = vld [vmem:[%s2 + $0x18] sm:$0xff]
    %v68 = vld [vmem:[%s2 + $0x20] sm:$0xff]
    %v69 = vld [vmem:[%s2 + $0x28] sm:$0xff]
    %v70 = vld [vmem:[%s2 + $0x30] sm:$0xff]
    %v71 = vld [vmem:[%s2 + $0x38] sm:$0xff]
    %v72 = vld [vmem:[%s2 + $0x40] sm:$0xff]
    %v73 = vld [vmem:[%s2 + $0x48] sm:$0xff]
    %v74 = vld [vmem:[%s2 + $0x50] sm:$0xff]
    %v75 = vld [vmem:[%s2 + $0x58] sm:$0xff]
    %v76 = vld [vmem:[%s2 + $0x60] sm:$0xff]
    %v77 = vld [vmem:[%s2 + $0x68] sm:$0xff]
    %v78 = vld [vmem:[%s2 + $0x70] sm:$0xff]
    %v79 = vld [vmem:[%s2 + $0x78] sm:$0xff]
    %v80 = vstv %s30
    %v81 = vmul.f32 %v80, %v64
    %v82 = vmul.f32 %v80, %v65
    %v83 = vmul.f32 %v80, %v66
    %v84 = vmul.f32 %v80, %v67
    %v85 = vmul.f32 %v80, %v68
    %v86 = vmul.f32 %v80, %v69
    %v87 = vmul.f32 %v80, %v70
    %v88 = vmul.f32 %v80, %v71
    %v89 = vmul.f32 %v80, %v72
    %v90 = vmul.f32 %v80, %v73
    %v91 = vmul.f32 %v80, %v74
    %v92 = vmul.f32 %v80, %v75
    %v93 = vmul.f32 %v80, %v76
    %v94 = vmul.f32 %v80, %v77
    %v95 = vmul.f32 %v80, %v78
    %v96 = vmul.f32 %v80, %v79
    %v97 = vadd.f32 %v48, %v81
    %v98 = vadd.f32 %v49, %v82
    %v99 = vadd.f32 %v50, %v83
    %v100 = vadd.f32 %v51, %v84
    %v101 = vadd.f32 %v52, %v85
    %v102 = vadd.f32 %v53, %v86
    %v103 = vadd.f32 %v54, %v87
    %v104 = vadd.f32 %v55, %v88
    %v105 = vadd.f32 %v56, %v89
    %v106 = vadd.f32 %v57, %v90
    %v107 = vadd.f32 %v58, %v91
    %v108 = vadd.f32 %v59, %v92
    %v109 = vadd.f32 %v60, %v93
    %v110 = vadd.f32 %v61, %v94
    %v111 = vadd.f32 %v62, %v95
    %v112 = vadd.f32 %v63, %v96
    %v113 = vmul.f32 %v97, %v97
    %v114 = vmul.f32 %v98, %v98
    %v115 = vmul.f32 %v99, %v99
    %v116 = vmul.f32 %v100, %v100
    %v117 = vmul.f32 %v101, %v101
    %v118 = vmul.f32 %v102, %v102
    %v119 = vmul.f32 %v103, %v103
    %v120 = vmul.f32 %v104, %v104
    %v121 = vmul.f32 %v105, %v105
    %v122 = vmul.f32 %v106, %v106
    %v123 = vmul.f32 %v107, %v107
    %v124 = vmul.f32 %v108, %v108
    %v125 = vmul.f32 %v109, %v109
    %v126 = vmul.f32 %v110, %v110
    %v127 = vmul.f32 %v111, %v111
    %v128 = vmul.f32 %v112, %v112
    %129 = vadd.xlane.f32.xlu0 %v113
    %v130 = vpop.xlane.xlu0 %129
    %131 = vadd.xlane.f32.xlu0 %v114
    %v132 = vpop.xlane.xlu0 %131
    %133 = vadd.xlane.f32.xlu0 %v115
    %v134 = vpop.xlane.xlu0 %133
    %135 = vadd.xlane.f32.xlu0 %v116
    %v136 = vpop.xlane.xlu0 %135
    %137 = vadd.xlane.f32.xlu0 %v117
    %v138 = vpop.xlane.xlu0 %137
    %139 = vadd.xlane.f32.xlu0 %v118
    %v140 = vpop.xlane.xlu0 %139
    %141 = vadd.xlane.f32.xlu0 %v119
    %v142 = vpop.xlane.xlu0 %141
    %143 = vadd.xlane.f32.xlu0 %v120
    %v144 = vpop.xlane.xlu0 %143
    %145 = vadd.xlane.f32.xlu0 %v121
    %v146 = vpop.xlane.xlu0 %145
    %147 = vadd.xlane.f32.xlu0 %v122
    %v148 = vpop.xlane.xlu0 %147
    %149 = vadd.xlane.f32.xlu0 %v123
    %v150 = vpop.xlane.xlu0 %149
    %151 = vadd.xlane.f32.xlu0 %v124
    %v152 = vpop.xlane.xlu0 %151
    %153 = vadd.xlane.f32.xlu0 %v125
    %v154 = vpop.xlane.xlu0 %153
    %155 = vadd.xlane.f32.xlu0 %v126
    %v156 = vpop.xlane.xlu0 %155
    %157 = vadd.xlane.f32.xlu0 %v127
    %v158 = vpop.xlane.xlu0 %157
    %159 = vadd.xlane.f32.xlu0 %v128
    %v160 = vpop.xlane.xlu0 %159
    %v161 = vrcp.pop 128.0
    %v162 = vmul.f32 %v130, %v161
    %v163 = vmul.f32 %v132, %v161
    %v164 = vmul.f32 %v134, %v161
    %v165 = vmul.f32 %v136, %v161
    %v166 = vmul.f32 %v138, %v161
    %v167 = vmul.f32 %v140, %v161
    %v168 = vmul.f32 %v142, %v161
    %v169 = vmul.f32 %v144, %v161
    %v170 = vmul.f32 %v146, %v161
    %v171 = vmul.f32 %v148, %v161
    %v172 = vmul.f32 %v150, %v161
    %v173 = vmul.f32 %v152, %v161
    %v174 = vmul.f32 %v154, %v161
    %v175 = vmul.f32 %v156, %v161
    %v176 = vmul.f32 %v158, %v161
    %v177 = vmul.f32 %v160, %v161
    %178 = vst [vmem:[%s3] sm:$0xff] %v97
    %179 = vst [vmem:[%s3 + $0x8] sm:$0xff] %v98
    %180 = vst [vmem:[%s3 + $0x10] sm:$0xff] %v99
    %181 = vst [vmem:[%s3 + $0x18] sm:$0xff] %v100
    %182 = vst [vmem:[%s3 + $0x20] sm:$0xff] %v101
    %183 = vst [vmem:[%s3 + $0x28] sm:$0xff] %v102
    %184 = vst [vmem:[%s3 + $0x30] sm:$0xff] %v103
    %185 = vst [vmem:[%s3 + $0x38] sm:$0xff] %v104
    %186 = vst [vmem:[%s3 + $0x40] sm:$0xff] %v105
    %187 = vst [vmem:[%s3 + $0x48] sm:$0xff] %v106
    %188 = vst [vmem:[%s3 + $0x50] sm:$0xff] %v107
    %189 = vst [vmem:[%s3 + $0x58] sm:$0xff] %v108
    %190 = vst [vmem:[%s3 + $0x60] sm:$0xff] %v109
    %191 = vst [vmem:[%s3 + $0x68] sm:$0xff] %v110
    %192 = vst [vmem:[%s3 + $0x70] sm:$0xff] %v111
    %193 = vst [vmem:[%s3 + $0x78] sm:$0xff] %v112
    %v194 = vadd.f32 %v162, 1.1920929e-07
    %v195 = vadd.f32 %v163, 1.1920929e-07
    %v196 = vadd.f32 %v164, 1.1920929e-07
    %v197 = vadd.f32 %v165, 1.1920929e-07
    %v198 = vadd.f32 %v166, 1.1920929e-07
    %v199 = vadd.f32 %v167, 1.1920929e-07
    %v200 = vadd.f32 %v168, 1.1920929e-07
    %v201 = vadd.f32 %v169, 1.1920929e-07
    %v202 = vadd.f32 %v170, 1.1920929e-07
    %v203 = vadd.f32 %v171, 1.1920929e-07
    %v204 = vadd.f32 %v172, 1.1920929e-07
    %v205 = vadd.f32 %v173, 1.1920929e-07
    %v206 = vadd.f32 %v174, 1.1920929e-07
    %v207 = vadd.f32 %v175, 1.1920929e-07
    %v208 = vadd.f32 %v176, 1.1920929e-07
    %v209 = vadd.f32 %v177, 1.1920929e-07
    %v210 = vrsqrt.pop %v194
    %v211 = vrsqrt.pop %v195
    %v212 = vrsqrt.pop %v196
    %v213 = vrsqrt.pop %v197
    %v214 = vrsqrt.pop %v198
    %v215 = vrsqrt.pop %v199
    %v216 = vrsqrt.pop %v200
    %v217 = vrsqrt.pop %v201
    %v218 = vrsqrt.pop %v202
    %v219 = vrsqrt.pop %v203
    %v220 = vrsqrt.pop %v204
    %v221 = vrsqrt.pop %v205
    %v222 = vrsqrt.pop %v206
    %v223 = vrsqrt.pop %v207
    %v224 = vrsqrt.pop %v208
    %v225 = vrsqrt.pop %v209
    %v226 = vmul.f32 %v97, %v210
    %v227 = vmul.f32 %v98, %v211
    %v228 = vmul.f32 %v99, %v212
    %v229 = vmul.f32 %v100, %v213
    %v230 = vmul.f32 %v101, %v214
    %v231 = vmul.f32 %v102, %v215
    %v232 = vmul.f32 %v103, %v216
    %v233 = vmul.f32 %v104, %v217
    %v234 = vmul.f32 %v105, %v218
    %v235 = vmul.f32 %v106, %v219
    %v236 = vmul.f32 %v107, %v220
    %v237 = vmul.f32 %v108, %v221
    %v238 = vmul.f32 %v109, %v222
    %v239 = vmul.f32 %v110, %v223
    %v240 = vmul.f32 %v111, %v224
    %v241 = vmul.f32 %v112, %v225
    %242 = vst [vmem:[%s4] sm:$0xff] %v226
    %243 = vst [vmem:[%s4 + $0x8] sm:$0xff] %v227
    %244 = vst [vmem:[%s4 + $0x10] sm:$0xff] %v228
    %245 = vst [vmem:[%s4 + $0x18] sm:$0xff] %v229
    %246 = vst [vmem:[%s4 + $0x20] sm:$0xff] %v230
    %247 = vst [vmem:[%s4 + $0x28] sm:$0xff] %v231
    %248 = vst [vmem:[%s4 + $0x30] sm:$0xff] %v232
    %249 = vst [vmem:[%s4 + $0x38] sm:$0xff] %v233
    %250 = vst [vmem:[%s4 + $0x40] sm:$0xff] %v234
    %251 = vst [vmem:[%s4 + $0x48] sm:$0xff] %v235
    %252 = vst [vmem:[%s4 + $0x50] sm:$0xff] %v236
    %253 = vst [vmem:[%s4 + $0x58] sm:$0xff] %v237
    %254 = vst [vmem:[%s4 + $0x60] sm:$0xff] %v238
    %255 = vst [vmem:[%s4 + $0x68] sm:$0xff] %v239
    %256 = vst [vmem:[%s4 + $0x70] sm:$0xff] %v240
    %257 = vst [vmem:[%s4 + $0x78] sm:$0xff] %v241
    // Predicated region
    $region18: #{gpt_forward.58} parent=1 // pred_check
      _
    $region19: #{gpt_forward.58} parent=1 // pred_check_branch
      %259 = sbr.rel (0) target = $region21
    $region20: #{gpt_forward.58} parent=1 // pred_region
      _
    $region21: #{gpt_forward.58} parent=1 // pred_fallthru
      _
    // Predicated region
    $region22: #{gpt_forward.58} parent=1 // pred_check
      _
    $region23: #{gpt_forward.58} parent=1 // pred_check_branch
      %261 = sbr.rel (0) target = $region25
    $region24: #{gpt_forward.58} parent=1 // pred_region
      _
    $region25: #{gpt_forward.58} parent=1 // pred_fallthru
      _
    // Predicated region
    $region26: #{gpt_forward.58} parent=1 // pred_check
      _
    $region27: #{gpt_forward.58} parent=1 // pred_check_branch
      %263 = sbr.rel (0) target = $region29
    $region28: #{gpt_forward.58} parent=1 // pred_region
      _
    $region29: #{gpt_forward.58} parent=1 // pred_fallthru
      _
    // Predicated region
    $region30: #{gpt_forward.58} parent=1 // pred_check
      _
    $region31: #{gpt_forward.58} parent=1 // pred_check_branch
      %265 = sbr.rel (0) target = $region33
    $region32: #{gpt_forward.58} parent=1 // pred_region
      _
    $region33: #{gpt_forward.58} parent=1 // pred_fallthru
      _
    %266 = vsyncpa [#allocation3], 1

// kernel: gpt_forward.59
$region0: #{gpt_forward.59}
  #allocation0 [shape = 'u32[]', space=smem, size = 0x4, offset = 0x4, fixed_abs, tag = 'smem constant byte address 0x4 - core index']
  #allocation1 [shape = 'u32[144,128]{1,0:T(1,128)}', space=vmem, size = 0x12000, scoped, tag = 'internal scratch']
  #allocation2 [shape = 'f32[128,384]{1,0:T(8,128)}', space=vmem, size = 0x30000, scoped, tag = 'scratch operand']
  %s0 = inlined_call_operand.vmem [shape: f32[128,128], index: 0, kind: input, shape index: {}]
  %s1 = inlined_call_operand.vmem [shape: f32[384,128], index: 1, kind: input, shape index: {}]
  %s2 = inlined_call_operand.vmem [shape: f32[128,384], index: 2, kind: output, shape index: {}]
  %s3 = sld [smem:[#allocation0]]
  $region26: #{gpt_forward.59} parent=0
    _
  %s5 = ssub.s32 1, %s3
  %s6 = scalar_select 0, %s5, %s3
  // Predicated region
  $region2: #{gpt_forward.59} parent=0 // pred_check
    _
  $region3: #{gpt_forward.59} parent=0 // pred_check_branch
    %8 = sbr.rel (0) target = $region5
  $region4: #{gpt_forward.59} parent=0 // pred_region
    _
  $region5: #{gpt_forward.59} parent=0 // pred_fallthru
    _
  // Predicated region
  $region6: #{gpt_forward.59} parent=0 // pred_check
    _
  $region7: #{gpt_forward.59} parent=0 // pred_check_branch
    %10 = sbr.rel (0) target = $region9
  $region8: #{gpt_forward.59} parent=0 // pred_region
    _
  $region9: #{gpt_forward.59} parent=0 // pred_fallthru
    _
  %p12 = scmp.eq.s32.totalorder 0, 0
  // Predicated region
  $region10: #{gpt_forward.59} parent=0 // pred_check
    %p13 = pneg %p12
  $region11: #{gpt_forward.59} parent=0 // pred_check_branch
    %15 = sbr.rel (%p13) target = $region13
  $region12: #{gpt_forward.59} parent=0 // pred_region
    %16 = vst [vmem:[#allocation2] sm:$0xff] 0.0
    %17 = vst [vmem:[#allocation2 + $0x8] sm:$0xff] 0.0
    %18 = vst [vmem:[#allocation2 + $0x10] sm:$0xff] 0.0
    %19 = vst [vmem:[#allocation2 + $0x18] sm:$0xff] 0.0
    %20 = vst [vmem:[#allocation2 + $0x20] sm:$0xff] 0.0
    %21 = vst [vmem:[#allocation2 + $0x28] sm:$0xff] 0.0
    %22 = vst [vmem:[#allocation2 + $0x30] sm:$0xff] 0.0
    %23 = vst [vmem:[#allocation2 + $0x38] sm:$0xff] 0.0
    %24 = vst [vmem:[#allocation2 + $0x40] sm:$0xff] 0.0
    %25 = vst [vmem:[#allocation2 + $0x48] sm:$0xff] 0.0
    %26 = vst [vmem:[#allocation2 + $0x50] sm:$0xff] 0.0
    %27 = vst [vmem:[#allocation2 + $0x58] sm:$0xff] 0.0
    %28 = vst [vmem:[#allocation2 + $0x60] sm:$0xff] 0.0
    %29 = vst [vmem:[#allocation2 + $0x68] sm:$0xff] 0.0
    %30 = vst [vmem:[#allocation2 + $0x70] sm:$0xff] 0.0
    %31 = vst [vmem:[#allocation2 + $0x78] sm:$0xff] 0.0
    %32 = vst [vmem:[#allocation2 + $0x80] sm:$0xff] 0.0
    %33 = vst [vmem:[#allocation2 + $0x88] sm:$0xff] 0.0
    %34 = vst [vmem:[#allocation2 + $0x90] sm:$0xff] 0.0
    %35 = vst [vmem:[#allocation2 + $0x98] sm:$0xff] 0.0
    %36 = vst [vmem:[#allocation2 + $0xa0] sm:$0xff] 0.0
    %37 = vst [vmem:[#allocation2 + $0xa8] sm:$0xff] 0.0
    %38 = vst [vmem:[#allocation2 + $0xb0] sm:$0xff] 0.0
    %39 = vst [vmem:[#allocation2 + $0xb8] sm:$0xff] 0.0
    %40 = vst [vmem:[#allocation2 + $0xc0] sm:$0xff] 0.0
    %41 = vst [vmem:[#allocation2 + $0xc8] sm:$0xff] 0.0
    %42 = vst [vmem:[#allocation2 + $0xd0] sm:$0xff] 0.0
    %43 = vst [vmem:[#allocation2 + $0xd8] sm:$0xff] 0.0
    %44 = vst [vmem:[#allocation2 + $0xe0] sm:$0xff] 0.0
    %45 = vst [vmem:[#allocation2 + $0xe8] sm:$0xff] 0.0
    %46 = vst [vmem:[#allocation2 + $0xf0] sm:$0xff] 0.0
    %47 = vst [vmem:[#allocation2 + $0xf8] sm:$0xff] 0.0
    %48 = vst [vmem:[#allocation2 + $0x100] sm:$0xff] 0.0
    %49 = vst [vmem:[#allocation2 + $0x108] sm:$0xff] 0.0
    %50 = vst [vmem:[#allocation2 + $0x110] sm:$0xff] 0.0
    %51 = vst [vmem:[#allocation2 + $0x118] sm:$0xff] 0.0
    %52 = vst [vmem:[#allocation2 + $0x120] sm:$0xff] 0.0
    %53 = vst [vmem:[#allocation2 + $0x128] sm:$0xff] 0.0
    %54 = vst [vmem:[#allocation2 + $0x130] sm:$0xff] 0.0
    %55 = vst [vmem:[#allocation2 + $0x138] sm:$0xff] 0.0
    %56 = vst [vmem:[#allocation2 + $0x140] sm:$0xff] 0.0
    %57 = vst [vmem:[#allocation2 + $0x148] sm:$0xff] 0.0
    %58 = vst [vmem:[#allocation2 + $0x150] sm:$0xff] 0.0
    %59 = vst [vmem:[#allocation2 + $0x158] sm:$0xff] 0.0
    %60 = vst [vmem:[#allocation2 + $0x160] sm:$0xff] 0.0
    %61 = vst [vmem:[#allocation2 + $0x168] sm:$0xff] 0.0
    %62 = vst [vmem:[#allocation2 + $0x170] sm:$0xff] 0.0
    %63 = vst [vmem:[#allocation2 + $0x178] sm:$0xff] 0.0
  $region13: #{gpt_forward.59} parent=0 // pred_fallthru
    _
  %v64 = vld [vmem:[#allocation2] sm:$0xff]
  %v65 = vld [vmem:[#allocation2 + $0x8] sm:$0xff]
  %v66 = vld [vmem:[#allocation2 + $0x10] sm:$0xff]
  %v67 = vld [vmem:[#allocation2 + $0x18] sm:$0xff]
  %v68 = vld [vmem:[#allocation2 + $0x20] sm:$0xff]
  %v69 = vld [vmem:[#allocation2 + $0x28] sm:$0xff]
  %v70 = vld [vmem:[#allocation2 + $0x30] sm:$0xff]
  %v71 = vld [vmem:[#allocation2 + $0x38] sm:$0xff]
  %v72 = vld [vmem:[#allocation2 + $0x40] sm:$0xff]
  %v73 = vld [vmem:[#allocation2 + $0x48] sm:$0xff]
  %v74 = vld [vmem:[#allocation2 + $0x50] sm:$0xff]
  %v75 = vld [vmem:[#allocation2 + $0x58] sm:$0xff]
  %v76 = vld [vmem:[#allocation2 + $0x60] sm:$0xff]
  %v77 = vld [vmem:[#allocation2 + $0x68] sm:$0xff]
  %v78 = vld [vmem:[#allocation2 + $0x70] sm:$0xff]
  %v79 = vld [vmem:[#allocation2 + $0x78] sm:$0xff]
  %v80 = vld [vmem:[#allocation2 + $0x80] sm:$0xff]
  %v81 = vld [vmem:[#allocation2 + $0x88] sm:$0xff]
  %v82 = vld [vmem:[#allocation2 + $0x90] sm:$0xff]
  %v83 = vld [vmem:[#allocation2 + $0x98] sm:$0xff]
  %v84 = vld [vmem:[#allocation2 + $0xa0] sm:$0xff]
  %v85 = vld [vmem:[#allocation2 + $0xa8] sm:$0xff]
  %v86 = vld [vmem:[#allocation2 + $0xb0] sm:$0xff]
  %v87 = vld [vmem:[#allocation2 + $0xb8] sm:$0xff]
  %v88 = vld [vmem:[#allocation2 + $0xc0] sm:$0xff]
  %v89 = vld [vmem:[#allocation2 + $0xc8] sm:$0xff]
  %v90 = vld [vmem:[#allocation2 + $0xd0] sm:$0xff]
  %v91 = vld [vmem:[#allocation2 + $0xd8] sm:$0xff]
  %v92 = vld [vmem:[#allocation2 + $0xe0] sm:$0xff]
  %v93 = vld [vmem:[#allocation2 + $0xe8] sm:$0xff]
  %v94 = vld [vmem:[#allocation2 + $0xf0] sm:$0xff]
  %v95 = vld [vmem:[#allocation2 + $0xf8] sm:$0xff]
  %v96 = vld [vmem:[#allocation2 + $0x100] sm:$0xff]
  %v97 = vld [vmem:[#allocation2 + $0x108] sm:$0xff]
  %v98 = vld [vmem:[#allocation2 + $0x110] sm:$0xff]
  %v99 = vld [vmem:[#allocation2 + $0x118] sm:$0xff]
  %v100 = vld [vmem:[#allocation2 + $0x120] sm:$0xff]
  %v101 = vld [vmem:[#allocation2 + $0x128] sm:$0xff]
  %v102 = vld [vmem:[#allocation2 + $0x130] sm:$0xff]
  %v103 = vld [vmem:[#allocation2 + $0x138] sm:$0xff]
  %v104 = vld [vmem:[#allocation2 + $0x140] sm:$0xff]
  %v105 = vld [vmem:[#allocation2 + $0x148] sm:$0xff]
  %v106 = vld [vmem:[#allocation2 + $0x150] sm:$0xff]
  %v107 = vld [vmem:[#allocation2 + $0x158] sm:$0xff]
  %v108 = vld [vmem:[#allocation2 + $0x160] sm:$0xff]
  %v109 = vld [vmem:[#allocation2 + $0x168] sm:$0xff]
  %v110 = vld [vmem:[#allocation2 + $0x170] sm:$0xff]
  %v111 = vld [vmem:[#allocation2 + $0x178] sm:$0xff]
  %v112 = vld [vmem:[%s0] sm:$0xff]
  %v113 = vld [vmem:[%s0 + $0x8] sm:$0xff]
  %v114 = vld [vmem:[%s0 + $0x10] sm:$0xff]
  %v115 = vld [vmem:[%s0 + $0x18] sm:$0xff]
  %v116 = vld [vmem:[%s0 + $0x20] sm:$0xff]
  %v117 = vld [vmem:[%s0 + $0x28] sm:$0xff]
  %v118 = vld [vmem:[%s0 + $0x30] sm:$0xff]
  %v119 = vld [vmem:[%s0 + $0x38] sm:$0xff]
  %v120 = vld [vmem:[%s0 + $0x40] sm:$0xff]
  %v121 = vld [vmem:[%s0 + $0x48] sm:$0xff]
  %v122 = vld [vmem:[%s0 + $0x50] sm:$0xff]
  %v123 = vld [vmem:[%s0 + $0x58] sm:$0xff]
  %v124 = vld [vmem:[%s0 + $0x60] sm:$0xff]
  %v125 = vld [vmem:[%s0 + $0x68] sm:$0xff]
  %v126 = vld [vmem:[%s0 + $0x70] sm:$0xff]
  %v127 = vld [vmem:[%s0 + $0x78] sm:$0xff]
  %v128 = vpack.c.bf16 %v113, %v112
  %v129 = vpack.c.bf16 %v115, %v114
  %v130 = vpack.c.bf16 %v117, %v116
  %v131 = vpack.c.bf16 %v119, %v118
  %v132 = vpack.c.bf16 %v121, %v120
  %v133 = vpack.c.bf16 %v123, %v122
  %v134 = vpack.c.bf16 %v125, %v124
  %v135 = vpack.c.bf16 %v127, %v126
  %v136 = vld [vmem:[%s1] sm:$0xff]
  %v137 = vld [vmem:[%s1 + $0x8] sm:$0xff]
  %v138 = vld [vmem:[%s1 + $0x10] sm:$0xff]
  %v139 = vld [vmem:[%s1 + $0x18] sm:$0xff]
  %v140 = vld [vmem:[%s1 + $0x20] sm:$0xff]
  %v141 = vld [vmem:[%s1 + $0x28] sm:$0xff]
  %v142 = vld [vmem:[%s1 + $0x30] sm:$0xff]
  %v143 = vld [vmem:[%s1 + $0x38] sm:$0xff]
  %v144 = vld [vmem:[%s1 + $0x40] sm:$0xff]
  %v145 = vld [vmem:[%s1 + $0x48] sm:$0xff]
  %v146 = vld [vmem:[%s1 + $0x50] sm:$0xff]
  %v147 = vld [vmem:[%s1 + $0x58] sm:$0xff]
  %v148 = vld [vmem:[%s1 + $0x60] sm:$0xff]
  %v149 = vld [vmem:[%s1 + $0x68] sm:$0xff]
  %v150 = vld [vmem:[%s1 + $0x70] sm:$0xff]
  %v151 = vld [vmem:[%s1 + $0x78] sm:$0xff]
  %v152 = vld [vmem:[%s1 + $0x80] sm:$0xff]
  %v153 = vld [vmem:[%s1 + $0x88] sm:$0xff]
  %v154 = vld [vmem:[%s1 + $0x90] sm:$0xff]
  %v155 = vld [vmem:[%s1 + $0x98] sm:$0xff]
  %v156 = vld [vmem:[%s1 + $0xa0] sm:$0xff]
  %v157 = vld [vmem:[%s1 + $0xa8] sm:$0xff]
  %v158 = vld [vmem:[%s1 + $0xb0] sm:$0xff]
  %v159 = vld [vmem:[%s1 + $0xb8] sm:$0xff]
  %v160 = vld [vmem:[%s1 + $0xc0] sm:$0xff]
  %v161 = vld [vmem:[%s1 + $0xc8] sm:$0xff]
  %v162 = vld [vmem:[%s1 + $0xd0] sm:$0xff]
  %v163 = vld [vmem:[%s1 + $0xd8] sm:$0xff]
  %v164 = vld [vmem:[%s1 + $0xe0] sm:$0xff]
  %v165 = vld [vmem:[%s1 + $0xe8] sm:$0xff]
  %v166 = vld [vmem:[%s1 + $0xf0] sm:$0xff]
  %v167 = vld [vmem:[%s1 + $0xf8] sm:$0xff]
  %v168 = vld [vmem:[%s1 + $0x100] sm:$0xff]
  %v169 = vld [vmem:[%s1 + $0x108] sm:$0xff]
  %v170 = vld [vmem:[%s1 + $0x110] sm:$0xff]
  %v171 = vld [vmem:[%s1 + $0x118] sm:$0xff]
  %v172 = vld [vmem:[%s1 + $0x120] sm:$0xff]
  %v173 = vld [vmem:[%s1 + $0x128] sm:$0xff]
  %v174 = vld [vmem:[%s1 + $0x130] sm:$0xff]
  %v175 = vld [vmem:[%s1 + $0x138] sm:$0xff]
  %v176 = vld [vmem:[%s1 + $0x140] sm:$0xff]
  %v177 = vld [vmem:[%s1 + $0x148] sm:$0xff]
  %v178 = vld [vmem:[%s1 + $0x150] sm:$0xff]
  %v179 = vld [vmem:[%s1 + $0x158] sm:$0xff]
  %v180 = vld [vmem:[%s1 + $0x160] sm:$0xff]
  %v181 = vld [vmem:[%s1 + $0x168] sm:$0xff]
  %v182 = vld [vmem:[%s1 + $0x170] sm:$0xff]
  %v183 = vld [vmem:[%s1 + $0x178] sm:$0xff]
  %v184 = vpack.c.bf16 %v137, %v136
  %v185 = vpack.c.bf16 %v139, %v138
  %v186 = vpack.c.bf16 %v141, %v140
  %v187 = vpack.c.bf16 %v143, %v142
  %v188 = vpack.c.bf16 %v145, %v144
  %v189 = vpack.c.bf16 %v147, %v146
  %v190 = vpack.c.bf16 %v149, %v148
  %v191 = vpack.c.bf16 %v151, %v150
  %v192 = vpack.c.bf16 %v153, %v152
  %v193 = vpack.c.bf16 %v155, %v154
  %v194 = vpack.c.bf16 %v157, %v156
  %v195 = vpack.c.bf16 %v159, %v158
  %v196 = vpack.c.bf16 %v161, %v160
  %v197 = vpack.c.bf16 %v163, %v162
  %v198 = vpack.c.bf16 %v165, %v164
  %v199 = vpack.c.bf16 %v167, %v166
  %v200 = vpack.c.bf16 %v169, %v168
  %v201 = vpack.c.bf16 %v171, %v170
  %v202 = vpack.c.bf16 %v173, %v172
  %v203 = vpack.c.bf16 %v175, %v174
  %v204 = vpack.c.bf16 %v177, %v176
  %v205 = vpack.c.bf16 %v179, %v178
  %v206 = vpack.c.bf16 %v181, %v180
  %v207 = vpack.c.bf16 %v183, %v182
  %208 = vmatprep.subr.bf16.mxu0 0
  %209 = vmatpush1.bf16.xpose.msra.mxu0 %v184
  %210 = vmatprep.subr.bf16.mxu0 0
  %211 = vmatpush1.bf16.xpose.msra.mxu0 %v185
  %212 = vmatprep.subr.bf16.mxu0 0
  %213 = vmatpush1.bf16.xpose.msra.mxu0 %v186
  %214 = vmatprep.subr.bf16.mxu0 0
  %215 = vmatpush1.bf16.xpose.msra.mxu0 %v187
  %216 = vmatprep.subr.bf16.mxu0 0
  %217 = vmatpush1.bf16.xpose.msra.mxu0 %v188
  %218 = vmatprep.subr.bf16.mxu0 0
  %219 = vmatpush1.bf16.xpose.msra.mxu0 %v189
  %220 = vmatprep.subr.bf16.mxu0 0
  %221 = vmatpush1.bf16.xpose.msra.mxu0 %v190
  %222 = vmatprep.subr.bf16.mxu0 0
  %223 = vmatpush1.bf16.xpose.msra.mxu0 %v191
  %224 = vmatprep.subr.bf16.mxu0 0
  %225 = vmatpush1.bf16.xpose.msra.mxu0 %v192
  %226 = vmatprep.subr.bf16.mxu0 0
  %227 = vmatpush1.bf16.xpose.msra.mxu0 %v193
  %228 = vmatprep.subr.bf16.mxu0 0
  %229 = vmatpush1.bf16.xpose.msra.mxu0 %v194
  %230 = vmatprep.subr.bf16.mxu0 0
  %231 = vmatpush1.bf16.xpose.msra.mxu0 %v195
  %232 = vmatprep.subr.bf16.mxu0 0
  %233 = vmatpush1.bf16.xpose.msra.mxu0 %v196
  %234 = vmatprep.subr.bf16.mxu0 0
  %235 = vmatpush1.bf16.xpose.msra.mxu0 %v197
  %236 = vmatprep.subr.bf16.mxu0 0
  %237 = vmatpush1.bf16.xpose.msra.mxu0 %v198
  %238 = vmatprep.subr.bf16.mxu0 0
  %239 = vmatpush1.bf16.xpose.msra.mxu0 %v199
  %240 = vmatprep.mubr.bf16.mxu0 0
  %241 = vmatmul.mubr.bf16.gmra.mrb[0].mxu0 %v128
  %v242 = vpop.f32.mrb[0].mxu0
  %v243 = vadd.f32 0.0, %v242
  %v244 = vpop.f32.mrb[0].mxu0
  %v245 = vadd.f32 0.0, %v244
  %v246 = vpop.f32.mrb[0].mxu0
  %v247 = vadd.f32 0.0, %v246
  %v248 = vpop.f32.mrb[0].mxu0
  %v249 = vadd.f32 0.0, %v248
  %250 = vmatprep.mubr.bf16.mxu0 0
  %251 = vmatmul.mubr.bf16.gmra.mrb[0].mxu0 %v129
  %v252 = vpop.f32.mrb[0].mxu0
  %v253 = vadd.f32 0.0, %v252
  %v254 = vpop.f32.mrb[0].mxu0
  %v255 = vadd.f32 0.0, %v254
  %v256 = vpop.f32.mrb[0].mxu0
  %v257 = vadd.f32 0.0, %v256
  %v258 = vpop.f32.mrb[0].mxu0
  %v259 = vadd.f32 0.0, %v258
  %260 = vmatprep.mubr.bf16.mxu0 0
  %261 = vmatmul.mubr.bf16.gmra.mrb[0].mxu0 %v130
  %v262 = vpop.f32.mrb[0].mxu0
  %v263 = vadd.f32 0.0, %v262
  %v264 = vpop.f32.mrb[0].mxu0
  %v265 = vadd.f32 0.0, %v264
  %v266 = vpop.f32.mrb[0].mxu0
  %v267 = vadd.f32 0.0, %v266
  %v268 = vpop.f32.mrb[0].mxu0
  %v269 = vadd.f32 0.0, %v268
  %270 = vmatprep.mubr.bf16.mxu0 0
  %271 = vmatmul.mubr.bf16.gmra.mrb[0].mxu0 %v131
  %v272 = vpop.f32.mrb[0].mxu0
  %v273 = vadd.f32 0.0, %v272
  %v274 = vpop.f32.mrb[0].mxu0
  %v275 = vadd.f32 0.0, %v274
  %v276 = vpop.f32.mrb[0].mxu0
  %v277 = vadd.f32 0.0, %v276
  %v278 = vpop.f32.mrb[0].mxu0
  %v279 = vadd.f32 0.0, %v278
  %280 = vmatprep.mubr.bf16.mxu0 0
  %281 = vmatmul.mubr.bf16.gmra.mrb[0].mxu0 %v132
  %v282 = vpop.f32.mrb[0].mxu0
  %v283 = vadd.f32 0.0, %v282
  %v284 = vpop.f32.mrb[0].mxu0
  %v285 = vadd.f32 0.0, %v284
  %v286 = vpop.f32.mrb[0].mxu0
  %v287 = vadd.f32 0.0, %v286
  %v288 = vpop.f32.mrb[0].mxu0
  %v289 = vadd.f32 0.0, %v288
  %290 = vmatprep.mubr.bf16.mxu0 0
  %291 = vmatmul.mubr.bf16.gmra.mrb[0].mxu0 %v133
  %v292 = vpop.f32.mrb[0].mxu0
  %v293 = vadd.f32 0.0, %v292
  %v294 = vpop.f32.mrb[0].mxu0
  %v295 = vadd.f32 0.0, %v294
  %v296 = vpop.f32.mrb[0].mxu0
  %v297 = vadd.f32 0.0, %v296
  %v298 = vpop.f32.mrb[0].mxu0
  %v299 = vadd.f32 0.0, %v298
  %300 = vmatprep.mubr.bf16.mxu0 0
  %301 = vmatmul.mubr.bf16.gmra.mrb[0].mxu0 %v134
  %v302 = vpop.f32.mrb[0].mxu0
  %v303 = vadd.f32 0.0, %v302
  %v304 = vpop.f32.mrb[0].mxu0
  %v305 = vadd.f32 0.0, %v304
  %v306 = vpop.f32.mrb[0].mxu0
  %v307 = vadd.f32 0.0, %v306
  %v308 = vpop.f32.mrb[0].mxu0
  %v309 = vadd.f32 0.0, %v308
  %310 = vmatprep.mubr.bf16.mxu0 0
  %311 = vmatmul.mubr.bf16.gmra.mrb[0].mxu0 %v135
  %v312 = vpop.f32.mrb[0].mxu0
  %v313 = vadd.f32 0.0, %v312
  %v314 = vpop.f32.mrb[0].mxu0
  %v315 = vadd.f32 0.0, %v314
  %v316 = vpop.f32.mrb[0].mxu0
  %v317 = vadd.f32 0.0, %v316
  %v318 = vpop.f32.mrb[0].mxu0
  %v319 = vadd.f32 0.0, %v318
  %320 = vdwg.mxu0
  %321 = vmatprep.subr.bf16.mxu0 0
  %322 = vmatpush1.bf16.xpose.msra.mxu0 %v200
  %323 = vmatprep.subr.bf16.mxu0 0
  %324 = vmatpush1.bf16.xpose.msra.mxu0 %v201
  %325 = vmatprep.subr.bf16.mxu0 0
  %326 = vmatpush1.bf16.xpose.msra.mxu0 %v202
  %327 = vmatprep.subr.bf16.mxu0 0
  %328 = vmatpush1.bf16.xpose.msra.mxu0 %v203
  %329 = vmatprep.subr.bf16.mxu0 0
  %330 = vmatpush1.bf16.xpose.msra.mxu0 %v204
  %331 = vmatprep.subr.bf16.mxu0 0
  %332 = vmatpush1.bf16.xpose.msra.mxu0 %v205
  %333 = vmatprep.subr.bf16.mxu0 0
  %334 = vmatpush1.bf16.xpose.msra.mxu0 %v206
  %335 = vmatprep.subr.bf16.mxu0 0
  %336 = vmatpush1.bf16.xpose.msra.mxu0 %v207
  %337 = vmatprep.subr.bf16.mxu0 0
  %338 = vmatpush1.bf16.xpose.msra.mxu0 0
  %339 = vmatprep.subr.bf16.mxu0 0
  %340 = vmatpush1.bf16.xpose.msra.mxu0 0
  %341 = vmatprep.subr.bf16.mxu0 0
  %342 = vmatpush1.bf16.xpose.msra.mxu0 0
  %343 = vmatprep.subr.bf16.mxu0 0
  %344 = vmatpush1.bf16.xpose.msra.mxu0 0
  %345 = vmatprep.subr.bf16.mxu0 0
  %346 = vmatpush1.bf16.xpose.msra.mxu0 0
  %347 = vmatprep.subr.bf16.mxu0 0
  %348 = vmatpush1.bf16.xpose.msra.mxu0 0
  %349 = vmatprep.subr.bf16.mxu0 0
  %350 = vmatpush1.bf16.xpose.msra.mxu0 0
  %351 = vmatprep.subr.bf16.mxu0 0
  %352 = vmatpush1.bf16.xpose.msra.mxu0 0
  %353 = vmatprep.mubr.bf16.mxu0 0
  %354 = vmatmul.mubr.bf16.gmra.mrb[0].mxu0 %v128
  %v355 = vpop.f32.mrb[0].mxu0
  %v356 = vadd.f32 0.0, %v355
  %v357 = vpop.f32.mrb[0].mxu0
  %v358 = vpop.f32.mrb[0].mxu0
  %v359 = vadd.f32 0.0, %v358
  %v360 = vpop.f32.mrb[0].mxu0
  %361 = vmatprep.mubr.bf16.mxu0 0
  %362 = vmatmul.mubr.bf16.gmra.mrb[0].mxu0 %v129
  %v363 = vpop.f32.mrb[0].mxu0
  %v364 = vadd.f32 0.0, %v363
  %v365 = vpop.f32.mrb[0].mxu0
  %v366 = vpop.f32.mrb[0].mxu0
  %v367 = vadd.f32 0.0, %v366
  %v368 = vpop.f32.mrb[0].mxu0
  %369 = vmatprep.mubr.bf16.mxu0 0
  %370 = vmatmul.mubr.bf16.gmra.mrb[0].mxu0 %v130
  %v371 = vpop.f32.mrb[0].mxu0
  %v372 = vadd.f32 0.0, %v371
  %v373 = vpop.f32.mrb[0].mxu0
  %v374 = vpop.f32.mrb[0].mxu0
  %v375 = vadd.f32 0.0, %v374
  %v376 = vpop.f32.mrb[0].mxu0
  %377 = vmatprep.mubr.bf16.mxu0 0
  %378 = vmatmul.mubr.bf16.gmra.mrb[0].mxu0 %v131
  %v379 = vpop.f32.mrb[0].mxu0
  %v380 = vadd.f32 0.0, %v379
  %v381 = vpop.f32.mrb[0].mxu0
  %v382 = vpop.f32.mrb[0].mxu0
  %v383 = vadd.f32 0.0, %v382
  %v384 = vpop.f32.mrb[0].mxu0
  %385 = vmatprep.mubr.bf16.mxu0 0
  %386 = vmatmul.mubr.bf16.gmra.mrb[0].mxu0 %v132
  %v387 = vpop.f32.mrb[0].mxu0
  %v388 = vadd.f32 0.0, %v387
  %v389 = vpop.f32.mrb[0].mxu0
  %v390 = vpop.f32.mrb[0].mxu0
  %v391 = vadd.f32 0.0, %v390
  %v392 = vpop.f32.mrb[0].mxu0
  %393 = vmatprep.mubr.bf16.mxu0 0
  %394 = vmatmul.mubr.bf16.gmra.mrb[0].mxu0 %v133
  %v395 = vpop.f32.mrb[0].mxu0
  %v396 = vadd.f32 0.0, %v395
  %v397 = vpop.f32.mrb[0].mxu0
  %v398 = vpop.f32.mrb[0].mxu0
  %v399 = vadd.f32 0.0, %v398
  %v400 = vpop.f32.mrb[0].mxu0
  %401 = vmatprep.mubr.bf16.mxu0 0
  %402 = vmatmul.mubr.bf16.gmra.mrb[0].mxu0 %v134
  %v403 = vpop.f32.mrb[0].mxu0
  %v404 = vadd.f32 0.0, %v403
  %v405 = vpop.f32.mrb[0].mxu0
  %v406 = vpop.f32.mrb[0].mxu0
  %v407 = vadd.f32 0.0, %v406
  %v408 = vpop.f32.mrb[0].mxu0
  %409 = vmatprep.mubr.bf16.mxu0 0
  %410 = vmatmul.mubr.bf16.gmra.mrb[0].mxu0 %v135
  %v411 = vpop.f32.mrb[0].mxu0
  %v412 = vadd.f32 0.0, %v411
  %v413 = vpop.f32.mrb[0].mxu0
  %v414 = vpop.f32.mrb[0].mxu0
  %v415 = vadd.f32 0.0, %v414
  %v416 = vpop.f32.mrb[0].mxu0
  %417 = vdwg.mxu0
  %v418 = vadd.f32 %v64, %v243
  %v419 = vadd.f32 %v65, %v245
  %v420 = vadd.f32 %v66, %v356
  %v421 = vadd.f32 %v67, %v247
  %v422 = vadd.f32 %v68, %v249
  %v423 = vadd.f32 %v69, %v359
  %v424 = vadd.f32 %v70, %v253
  %v425 = vadd.f32 %v71, %v255
  %v426 = vadd.f32 %v72, %v364
  %v427 = vadd.f32 %v73, %v257
  %v428 = vadd.f32 %v74, %v259
  %v429 = vadd.f32 %v75, %v367
  %v430 = vadd.f32 %v76, %v263
  %v431 = vadd.f32 %v77, %v265
  %v432 = vadd.f32 %v78, %v372
  %v433 = vadd.f32 %v79, %v267
  %v434 = vadd.f32 %v80, %v269
  %v435 = vadd.f32 %v81, %v375
  %v436 = vadd.f32 %v82, %v273
  %v437 = vadd.f32 %v83, %v275
  %v438 = vadd.f32 %v84, %v380
  %v439 = vadd.f32 %v85, %v277
  %v440 = vadd.f32 %v86, %v279
  %v441 = vadd.f32 %v87, %v383
  %v442 = vadd.f32 %v88, %v283
  %v443 = vadd.f32 %v89, %v285
  %v444 = vadd.f32 %v90, %v388
  %v445 = vadd.f32 %v91, %v287
  %v446 = vadd.f32 %v92, %v289
  %v447 = vadd.f32 %v93, %v391
  %v448 = vadd.f32 %v94, %v293
  %v449 = vadd.f32 %v95, %v295
  %v450 = vadd.f32 %v96, %v396
  %v451 = vadd.f32 %v97, %v297
  %v452 = vadd.f32 %v98, %v299
  %v453 = vadd.f32 %v99, %v399
  %v454 = vadd.f32 %v100, %v303
  %v455 = vadd.f32 %v101, %v305
  %v456 = vadd.f32 %v102, %v404
  %v457 = vadd.f32 %v103, %v307
  %v458 = vadd.f32 %v104, %v309
  %v459 = vadd.f32 %v105, %v407
  %v460 = vadd.f32 %v106, %v313
  %v461 = vadd.f32 %v107, %v315
  %v462 = vadd.f32 %v108, %v412
  %v463 = vadd.f32 %v109, %v317
  %v464 = vadd.f32 %v110, %v319
  %v465 = vadd.f32 %v111, %v415
  %466 = vst [vmem:[#allocation2] sm:$0xff] %v418
  %467 = vst [vmem:[#allocation2 + $0x8] sm:$0xff] %v419
  %468 = vst [vmem:[#allocation2 + $0x10] sm:$0xff] %v420
  %469 = vst [vmem:[#allocation2 + $0x18] sm:$0xff] %v421
  %470 = vst [vmem:[#allocation2 + $0x20] sm:$0xff] %v422
  %471 = vst [vmem:[#allocation2 + $0x28] sm:$0xff] %v423
  %472 = vst [vmem:[#allocation2 + $0x30] sm:$0xff] %v424
  %473 = vst [vmem:[#allocation2 + $0x38] sm:$0xff] %v425
  %474 = vst [vmem:[#allocation2 + $0x40] sm:$0xff] %v426
  %475 = vst [vmem:[#allocation2 + $0x48] sm:$0xff] %v427
  %476 = vst [vmem:[#allocation2 + $0x50] sm:$0xff] %v428
  %477 = vst [vmem:[#allocation2 + $0x58] sm:$0xff] %v429
  %478 = vst [vmem:[#allocation2 + $0x60] sm:$0xff] %v430
  %479 = vst [vmem:[#allocation2 + $0x68] sm:$0xff] %v431
  %480 = vst [vmem:[#allocation2 + $0x70] sm:$0xff] %v432
  %481 = vst [vmem:[#allocation2 + $0x78] sm:$0xff] %v433
  %482 = vst [vmem:[#allocation2 + $0x80] sm:$0xff] %v434
  %483 = vst [vmem:[#allocation2 + $0x88] sm:$0xff] %v435
  %484 = vst [vmem:[#allocation2 + $0x90] sm:$0xff] %v436
  %485 = vst [vmem:[#allocation2 + $0x98] sm:$0xff] %v437
  %486 = vst [vmem:[#allocation2 + $0xa0] sm:$0xff] %v438
  %487 = vst [vmem:[#allocation2 + $0xa8] sm:$0xff] %v439
  %488 = vst [vmem:[#allocation2 + $0xb0] sm:$0xff] %v440
  %489 = vst [vmem:[#allocation2 + $0xb8] sm:$0xff] %v441
  %490 = vst [vmem:[#allocation2 + $0xc0] sm:$0xff] %v442
  %491 = vst [vmem:[#allocation2 + $0xc8] sm:$0xff] %v443
  %492 = vst [vmem:[#allocation2 + $0xd0] sm:$0xff] %v444
  %493 = vst [vmem:[#allocation2 + $0xd8] sm:$0xff] %v445
  %494 = vst [vmem:[#allocation2 + $0xe0] sm:$0xff] %v446
  %495 = vst [vmem:[#allocation2 + $0xe8] sm:$0xff] %v447
  %496 = vst [vmem:[#allocation2 + $0xf0] sm:$0xff] %v448
  %497 = vst [vmem:[#allocation2 + $0xf8] sm:$0xff] %v449
  %498 = vst [vmem:[#allocation2 + $0x100] sm:$0xff] %v450
  %499 = vst [vmem:[#allocation2 + $0x108] sm:$0xff] %v451
  %500 = vst [vmem:[#allocation2 + $0x110] sm:$0xff] %v452
  %501 = vst [vmem:[#allocation2 + $0x118] sm:$0xff] %v453
  %502 = vst [vmem:[#allocation2 + $0x120] sm:$0xff] %v454
  %503 = vst [vmem:[#allocation2 + $0x128] sm:$0xff] %v455
  %504 = vst [vmem:[#allocation2 + $0x130] sm:$0xff] %v456
  %505 = vst [vmem:[#allocation2 + $0x138] sm:$0xff] %v457
  %506 = vst [vmem:[#allocation2 + $0x140] sm:$0xff] %v458
  %507 = vst [vmem:[#allocation2 + $0x148] sm:$0xff] %v459
  %508 = vst [vmem:[#allocation2 + $0x150] sm:$0xff] %v460
  %509 = vst [vmem:[#allocation2 + $0x158] sm:$0xff] %v461
  %510 = vst [vmem:[#allocation2 + $0x160] sm:$0xff] %v462
  %511 = vst [vmem:[#allocation2 + $0x168] sm:$0xff] %v463
  %512 = vst [vmem:[#allocation2 + $0x170] sm:$0xff] %v464
  %513 = vst [vmem:[#allocation2 + $0x178] sm:$0xff] %v465
  // Predicated region
  $region14: #{gpt_forward.59} parent=0 // pred_check
    %p514 = pneg %p12
  $region15: #{gpt_forward.59} parent=0 // pred_check_branch
    %516 = sbr.rel (%p514) target = $region17
  $region16: #{gpt_forward.59} parent=0 // pred_region
    %v517 = vld [vmem:[#allocation2] sm:$0xff]
    %v518 = vld [vmem:[#allocation2 + $0x8] sm:$0xff]
    %v519 = vld [vmem:[#allocation2 + $0x10] sm:$0xff]
    %v520 = vld [vmem:[#allocation2 + $0x18] sm:$0xff]
    %v521 = vld [vmem:[#allocation2 + $0x20] sm:$0xff]
    %v522 = vld [vmem:[#allocation2 + $0x28] sm:$0xff]
    %v523 = vld [vmem:[#allocation2 + $0x30] sm:$0xff]
    %v524 = vld [vmem:[#allocation2 + $0x38] sm:$0xff]
    %v525 = vld [vmem:[#allocation2 + $0x40] sm:$0xff]
    %v526 = vld [vmem:[#allocation2 + $0x48] sm:$0xff]
    %v527 = vld [vmem:[#allocation2 + $0x50] sm:$0xff]
    %v528 = vld [vmem:[#allocation2 + $0x58] sm:$0xff]
    %v529 = vld [vmem:[#allocation2 + $0x60] sm:$0xff]
    %v530 = vld [vmem:[#allocation2 + $0x68] sm:$0xff]
    %v531 = vld [vmem:[#allocation2 + $0x70] sm:$0xff]
    %v532 = vld [vmem:[#allocation2 + $0x78] sm:$0xff]
    %v533 = vld [vmem:[#allocation2 + $0x80] sm:$0xff]
    %v534 = vld [vmem:[#allocation2 + $0x88] sm:$0xff]
    %v535 = vld [vmem:[#allocation2 + $0x90] sm:$0xff]
    %v536 = vld [vmem:[#allocation2 + $0x98] sm:$0xff]
    %v537 = vld [vmem:[#allocation2 + $0xa0] sm:$0xff]
    %v538 = vld [vmem:[#allocation2 + $0xa8] sm:$0xff]
    %v539 = vld [vmem:[#allocation2 + $0xb0] sm:$0xff]
    %v540 = vld [vmem:[#allocation2 + $0xb8] sm:$0xff]
    %v541 = vld [vmem:[#allocation2 + $0xc0] sm:$0xff]
    %v542 = vld [vmem:[#allocation2 + $0xc8] sm:$0xff]
    %v543 = vld [vmem:[#allocation2 + $0xd0] sm:$0xff]
    %v544 = vld [vmem:[#allocation2 + $0xd8] sm:$0xff]
    %v545 = vld [vmem:[#allocation2 + $0xe0] sm:$0xff]
    %v546 = vld [vmem:[#allocation2 + $0xe8] sm:$0xff]
    %v547 = vld [vmem:[#allocation2 + $0xf0] sm:$0xff]
    %v548 = vld [vmem:[#allocation2 + $0xf8] sm:$0xff]
    %v549 = vld [vmem:[#allocation2 + $0x100] sm:$0xff]
    %v550 = vld [vmem:[#allocation2 + $0x108] sm:$0xff]
    %v551 = vld [vmem:[#allocation2 + $0x110] sm:$0xff]
    %v552 = vld [vmem:[#allocation2 + $0x118] sm:$0xff]
    %v553 = vld [vmem:[#allocation2 + $0x120] sm:$0xff]
    %v554 = vld [vmem:[#allocation2 + $0x128] sm:$0xff]
    %v555 = vld [vmem:[#allocation2 + $0x130] sm:$0xff]
    %v556 = vld [vmem:[#allocation2 + $0x138] sm:$0xff]
    %v557 = vld [vmem:[#allocation2 + $0x140] sm:$0xff]
    %v558 = vld [vmem:[#allocation2 + $0x148] sm:$0xff]
    %v559 = vld [vmem:[#allocation2 + $0x150] sm:$0xff]
    %v560 = vld [vmem:[#allocation2 + $0x158] sm:$0xff]
    %v561 = vld [vmem:[#allocation2 + $0x160] sm:$0xff]
    %v562 = vld [vmem:[#allocation2 + $0x168] sm:$0xff]
    %v563 = vld [vmem:[#allocation2 + $0x170] sm:$0xff]
    %v564 = vld [vmem:[#allocation2 + $0x178] sm:$0xff]
    %565 = vst [vmem:[%s2] sm:$0xff] %v517
    %566 = vst [vmem:[%s2 + $0x8] sm:$0xff] %v518
    %567 = vst [vmem:[%s2 + $0x10] sm:$0xff] %v519
    %568 = vst [vmem:[%s2 + $0x18] sm:$0xff] %v520
    %569 = vst [vmem:[%s2 + $0x20] sm:$0xff] %v521
    %570 = vst [vmem:[%s2 + $0x28] sm:$0xff] %v522
    %571 = vst [vmem:[%s2 + $0x30] sm:$0xff] %v523
    %572 = vst [vmem:[%s2 + $0x38] sm:$0xff] %v524
    %573 = vst [vmem:[%s2 + $0x40] sm:$0xff] %v525
    %574 = vst [vmem:[%s2 + $0x48] sm:$0xff] %v526
    %575 = vst [vmem:[%s2 + $0x50] sm:$0xff] %v527
    %576 = vst [vmem:[%s2 + $0x58] sm:$0xff] %v528
    %577 = vst [vmem:[%s2 + $0x60] sm:$0xff] %v529
    %578 = vst [vmem:[%s2 + $0x68] sm:$0xff] %v530
    %579 = vst [vmem:[%s2 + $0x70] sm:$0xff] %v531
    %580 = vst [vmem:[%s2 + $0x78] sm:$0xff] %v532
    %581 = vst [vmem:[%s2 + $0x80] sm:$0xff] %v533
    %582 = vst [vmem:[%s2 + $0x88] sm:$0xff] %v534
    %583 = vst [vmem:[%s2 + $0x90] sm:$0xff] %v535
    %584 = vst [vmem:[%s2 + $0x98] sm:$0xff] %v536
    %585 = vst [vmem:[%s2 + $0xa0] sm:$0xff] %v537
    %586 = vst [vmem:[%s2 + $0xa8] sm:$0xff] %v538
    %587 = vst [vmem:[%s2 + $0xb0] sm:$0xff] %v539
    %588 = vst [vmem:[%s2 + $0xb8] sm:$0xff] %v540
    %589 = vst [vmem:[%s2 + $0xc0] sm:$0xff] %v541
    %590 = vst [vmem:[%s2 + $0xc8] sm:$0xff] %v542
    %591 = vst [vmem:[%s2 + $0xd0] sm:$0xff] %v543
    %592 = vst [vmem:[%s2 + $0xd8] sm:$0xff] %v544
    %593 = vst [vmem:[%s2 + $0xe0] sm:$0xff] %v545
    %594 = vst [vmem:[%s2 + $0xe8] sm:$0xff] %v546
    %595 = vst [vmem:[%s2 + $0xf0] sm:$0xff] %v547
    %596 = vst [vmem:[%s2 + $0xf8] sm:$0xff] %v548
    %597 = vst [vmem:[%s2 + $0x100] sm:$0xff] %v549
    %598 = vst [vmem:[%s2 + $0x108] sm:$0xff] %v550
    %599 = vst [vmem:[%s2 + $0x110] sm:$0xff] %v551
    %600 = vst [vmem:[%s2 + $0x118] sm:$0xff] %v552
    %601 = vst [vmem:[%s2 + $0x120] sm:$0xff] %v553
    %602 = vst [vmem:[%s2 + $0x128] sm:$0xff] %v554
    %603 = vst [vmem:[%s2 + $0x130] sm:$0xff] %v555
    %604 = vst [vmem:[%s2 + $0x138] sm:$0xff] %v556
    %605 = vst [vmem:[%s2 + $0x140] sm:$0xff] %v557
    %606 = vst [vmem:[%s2 + $0x148] sm:$0xff] %v558
    %607 = vst [vmem:[%s2 + $0x150] sm:$0xff] %v559
    %608 = vst [vmem:[%s2 + $0x158] sm:$0xff] %v560
    %609 = vst [vmem:[%s2 + $0x160] sm:$0xff] %v561
    %610 = vst [vmem:[%s2 + $0x168] sm:$0xff] %v562
    %611 = vst [vmem:[%s2 + $0x170] sm:$0xff] %v563
    %612 = vst [vmem:[%s2 + $0x178] sm:$0xff] %v564
  $region17: #{gpt_forward.59} parent=0 // pred_fallthru
    _
  // Predicated region
  $region18: #{gpt_forward.59} parent=0 // pred_check
    _
  $region19: #{gpt_forward.59} parent=0 // pred_check_branch
    %614 = sbr.rel (0) target = $region21
  $region20: #{gpt_forward.59} parent=0 // pred_region
    _
  $region21: #{gpt_forward.59} parent=0 // pred_fallthru
    _
  // Predicated region
  $region22: #{gpt_forward.59} parent=0 // pred_check
    _
  $region23: #{gpt_forward.59} parent=0 // pred_check_branch
    %616 = sbr.rel (0) target = $region25
  $region24: #{gpt_forward.59} parent=0 // pred_region
    _
  $region25: #{gpt_forward.59} parent=0 // pred_fallthru
    _

// kernel: gpt_forward.63
$region0: #{gpt_forward.63}
  #allocation0 [shape = 'u32[]', space=smem, size = 0x4, offset = 0x4, fixed_abs, tag = 'smem constant byte address 0x4 - core index']
  #allocation1 [shape = 'u32[144,128]{1,0:T(1,128)}', space=vmem, size = 0x12000, scoped, tag = 'internal scratch']
  #allocation2 [shape = 'f32[128,128]{1,0:T(8,128)}', space=vmem, size = 0x10000, scoped, tag = 'scratch operand']
  %s0 = inlined_call_operand.vmem [shape: f32[128,128], index: 0, kind: input, shape index: {}]
  %s1 = inlined_call_operand.vmem [shape: f32[128,128], index: 1, kind: input, shape index: {}]
  %s2 = inlined_call_operand.vmem [shape: f32[128,128], index: 2, kind: output, shape index: {}]
  %s3 = sld [smem:[#allocation0]]
  $region26: #{gpt_forward.63} parent=0
    _
  %s5 = ssub.s32 1, %s3
  %s6 = scalar_select 0, %s5, %s3
  // Predicated region
  $region2: #{gpt_forward.63} parent=0 // pred_check
    _
  $region3: #{gpt_forward.63} parent=0 // pred_check_branch
    %8 = sbr.rel (0) target = $region5
  $region4: #{gpt_forward.63} parent=0 // pred_region
    _
  $region5: #{gpt_forward.63} parent=0 // pred_fallthru
    _
  // Predicated region
  $region6: #{gpt_forward.63} parent=0 // pred_check
    _
  $region7: #{gpt_forward.63} parent=0 // pred_check_branch
    %10 = sbr.rel (0) target = $region9
  $region8: #{gpt_forward.63} parent=0 // pred_region
    _
  $region9: #{gpt_forward.63} parent=0 // pred_fallthru
    _
  %p12 = scmp.eq.s32.totalorder 0, 0
  // Predicated region
  $region10: #{gpt_forward.63} parent=0 // pred_check
    %p13 = pneg %p12
  $region11: #{gpt_forward.63} parent=0 // pred_check_branch
    %15 = sbr.rel (%p13) target = $region13
  $region12: #{gpt_forward.63} parent=0 // pred_region
    %16 = vst [vmem:[#allocation2] sm:$0xff] 0.0
    %17 = vst [vmem:[#allocation2 + $0x8] sm:$0xff] 0.0
    %18 = vst [vmem:[#allocation2 + $0x10] sm:$0xff] 0.0
    %19 = vst [vmem:[#allocation2 + $0x18] sm:$0xff] 0.0
    %20 = vst [vmem:[#allocation2 + $0x20] sm:$0xff] 0.0
    %21 = vst [vmem:[#allocation2 + $0x28] sm:$0xff] 0.0
    %22 = vst [vmem:[#allocation2 + $0x30] sm:$0xff] 0.0
    %23 = vst [vmem:[#allocation2 + $0x38] sm:$0xff] 0.0
    %24 = vst [vmem:[#allocation2 + $0x40] sm:$0xff] 0.0
    %25 = vst [vmem:[#allocation2 + $0x48] sm:$0xff] 0.0
    %26 = vst [vmem:[#allocation2 + $0x50] sm:$0xff] 0.0
    %27 = vst [vmem:[#allocation2 + $0x58] sm:$0xff] 0.0
    %28 = vst [vmem:[#allocation2 + $0x60] sm:$0xff] 0.0
    %29 = vst [vmem:[#allocation2 + $0x68] sm:$0xff] 0.0
    %30 = vst [vmem:[#allocation2 + $0x70] sm:$0xff] 0.0
    %31 = vst [vmem:[#allocation2 + $0x78] sm:$0xff] 0.0
  $region13: #{gpt_forward.63} parent=0 // pred_fallthru
    _
  %v32 = vld [vmem:[#allocation2] sm:$0xff]
  %v33 = vld [vmem:[#allocation2 + $0x8] sm:$0xff]
  %v34 = vld [vmem:[#allocation2 + $0x10] sm:$0xff]
  %v35 = vld [vmem:[#allocation2 + $0x18] sm:$0xff]
  %v36 = vld [vmem:[#allocation2 + $0x20] sm:$0xff]
  %v37 = vld [vmem:[#allocation2 + $0x28] sm:$0xff]
  %v38 = vld [vmem:[#allocation2 + $0x30] sm:$0xff]
  %v39 = vld [vmem:[#allocation2 + $0x38] sm:$0xff]
  %v40 = vld [vmem:[#allocation2 + $0x40] sm:$0xff]
  %v41 = vld [vmem:[#allocation2 + $0x48] sm:$0xff]
  %v42 = vld [vmem:[#allocation2 + $0x50] sm:$0xff]
  %v43 = vld [vmem:[#allocation2 + $0x58] sm:$0xff]
  %v44 = vld [vmem:[#allocation2 + $0x60] sm:$0xff]
  %v45 = vld [vmem:[#allocation2 + $0x68] sm:$0xff]
  %v46 = vld [vmem:[#allocation2 + $0x70] sm:$0xff]
  %v47 = vld [vmem:[#allocation2 + $0x78] sm:$0xff]
  %v48 = vld [vmem:[%s0] sm:$0xff]
  %v49 = vld [vmem:[%s0 + $0x8] sm:$0xff]
  %v50 = vld [vmem:[%s0 + $0x10] sm:$0xff]
  %v51 = vld [vmem:[%s0 + $0x18] sm:$0xff]
  %v52 = vld [vmem:[%s0 + $0x20] sm:$0xff]
  %v53 = vld [vmem:[%s0 + $0x28] sm:$0xff]
  %v54 = vld [vmem:[%s0 + $0x30] sm:$0xff]
  %v55 = vld [vmem:[%s0 + $0x38] sm:$0xff]
  %v56 = vld [vmem:[%s0 + $0x40] sm:$0xff]
  %v57 = vld [vmem:[%s0 + $0x48] sm:$0xff]
  %v58 = vld [vmem:[%s0 + $0x50] sm:$0xff]
  %v59 = vld [vmem:[%s0 + $0x58] sm:$0xff]
  %v60 = vld [vmem:[%s0 + $0x60] sm:$0xff]
  %v61 = vld [vmem:[%s0 + $0x68] sm:$0xff]
  %v62 = vld [vmem:[%s0 + $0x70] sm:$0xff]
  %v63 = vld [vmem:[%s0 + $0x78] sm:$0xff]
  %v64 = vpack.c.bf16 %v49, %v48
  %v65 = vpack.c.bf16 %v51, %v50
  %v66 = vpack.c.bf16 %v53, %v52
  %v67 = vpack.c.bf16 %v55, %v54
  %v68 = vpack.c.bf16 %v57, %v56
  %v69 = vpack.c.bf16 %v59, %v58
  %v70 = vpack.c.bf16 %v61, %v60
  %v71 = vpack.c.bf16 %v63, %v62
  %v72 = vld [vmem:[%s1] sm:$0xff]
  %v73 = vld [vmem:[%s1 + $0x8] sm:$0xff]
  %v74 = vld [vmem:[%s1 + $0x10] sm:$0xff]
  %v75 = vld [vmem:[%s1 + $0x18] sm:$0xff]
  %v76 = vld [vmem:[%s1 + $0x20] sm:$0xff]
  %v77 = vld [vmem:[%s1 + $0x28] sm:$0xff]
  %v78 = vld [vmem:[%s1 + $0x30] sm:$0xff]
  %v79 = vld [vmem:[%s1 + $0x38] sm:$0xff]
  %v80 = vld [vmem:[%s1 + $0x40] sm:$0xff]
  %v81 = vld [vmem:[%s1 + $0x48] sm:$0xff]
  %v82 = vld [vmem:[%s1 + $0x50] sm:$0xff]
  %v83 = vld [vmem:[%s1 + $0x58] sm:$0xff]
  %v84 = vld [vmem:[%s1 + $0x60] sm:$0xff]
  %v85 = vld [vmem:[%s1 + $0x68] sm:$0xff]
  %v86 = vld [vmem:[%s1 + $0x70] sm:$0xff]
  %v87 = vld [vmem:[%s1 + $0x78] sm:$0xff]
  %v88 = vpack.c.bf16 %v73, %v72
  %v89 = vpack.c.bf16 %v75, %v74
  %v90 = vpack.c.bf16 %v77, %v76
  %v91 = vpack.c.bf16 %v79, %v78
  %v92 = vpack.c.bf16 %v81, %v80
  %v93 = vpack.c.bf16 %v83, %v82
  %v94 = vpack.c.bf16 %v85, %v84
  %v95 = vpack.c.bf16 %v87, %v86
  %96 = vmatprep.subr.bf16.mxu0 0
  %97 = vmatpush1.bf16.xpose.msra.mxu0 %v88
  %98 = vmatprep.subr.bf16.mxu0 0
  %99 = vmatpush1.bf16.xpose.msra.mxu0 %v89
  %100 = vmatprep.subr.bf16.mxu0 0
  %101 = vmatpush1.bf16.xpose.msra.mxu0 %v90
  %102 = vmatprep.subr.bf16.mxu0 0
  %103 = vmatpush1.bf16.xpose.msra.mxu0 %v91
  %104 = vmatprep.subr.bf16.mxu0 0
  %105 = vmatpush1.bf16.xpose.msra.mxu0 %v92
  %106 = vmatprep.subr.bf16.mxu0 0
  %107 = vmatpush1.bf16.xpose.msra.mxu0 %v93
  %108 = vmatprep.subr.bf16.mxu0 0
  %109 = vmatpush1.bf16.xpose.msra.mxu0 %v94
  %110 = vmatprep.subr.bf16.mxu0 0
  %111 = vmatpush1.bf16.xpose.msra.mxu0 %v95
  %112 = vmatprep.subr.bf16.mxu0 0
  %113 = vmatpush1.bf16.xpose.msra.mxu0 0
  %114 = vmatprep.subr.bf16.mxu0 0
  %115 = vmatpush1.bf16.xpose.msra.mxu0 0
  %116 = vmatprep.subr.bf16.mxu0 0
  %117 = vmatpush1.bf16.xpose.msra.mxu0 0
  %118 = vmatprep.subr.bf16.mxu0 0
  %119 = vmatpush1.bf16.xpose.msra.mxu0 0
  %120 = vmatprep.subr.bf16.mxu0 0
  %121 = vmatpush1.bf16.xpose.msra.mxu0 0
  %122 = vmatprep.subr.bf16.mxu0 0
  %123 = vmatpush1.bf16.xpose.msra.mxu0 0
  %124 = vmatprep.subr.bf16.mxu0 0
  %125 = vmatpush1.bf16.xpose.msra.mxu0 0
  %126 = vmatprep.subr.bf16.mxu0 0
  %127 = vmatpush1.bf16.xpose.msra.mxu0 0
  %128 = vmatprep.mubr.bf16.mxu0 0
  %129 = vmatmul.mubr.bf16.gmra.mrb[0].mxu0 %v64
  %v130 = vpop.f32.mrb[0].mxu0
  %v131 = vadd.f32 0.0, %v130
  %v132 = vpop.f32.mrb[0].mxu0
  %v133 = vpop.f32.mrb[0].mxu0
  %v134 = vadd.f32 0.0, %v133
  %v135 = vpop.f32.mrb[0].mxu0
  %136 = vmatprep.mubr.bf16.mxu0 0
  %137 = vmatmul.mubr.bf16.gmra.mrb[0].mxu0 %v65
  %v138 = vpop.f32.mrb[0].mxu0
  %v139 = vadd.f32 0.0, %v138
  %v140 = vpop.f32.mrb[0].mxu0
  %v141 = vpop.f32.mrb[0].mxu0
  %v142 = vadd.f32 0.0, %v141
  %v143 = vpop.f32.mrb[0].mxu0
  %144 = vmatprep.mubr.bf16.mxu0 0
  %145 = vmatmul.mubr.bf16.gmra.mrb[0].mxu0 %v66
  %v146 = vpop.f32.mrb[0].mxu0
  %v147 = vadd.f32 0.0, %v146
  %v148 = vpop.f32.mrb[0].mxu0
  %v149 = vpop.f32.mrb[0].mxu0
  %v150 = vadd.f32 0.0, %v149
  %v151 = vpop.f32.mrb[0].mxu0
  %152 = vmatprep.mubr.bf16.mxu0 0
  %153 = vmatmul.mubr.bf16.gmra.mrb[0].mxu0 %v67
  %v154 = vpop.f32.mrb[0].mxu0
  %v155 = vadd.f32 0.0, %v154
  %v156 = vpop.f32.mrb[0].mxu0
  %v157 = vpop.f32.mrb[0].mxu0
  %v158 = vadd.f32 0.0, %v157
  %v159 = vpop.f32.mrb[0].mxu0
  %160 = vmatprep.mubr.bf16.mxu0 0
  %161 = vmatmul.mubr.bf16.gmra.mrb[0].mxu0 %v68
  %v162 = vpop.f32.mrb[0].mxu0
  %v163 = vadd.f32 0.0, %v162
  %v164 = vpop.f32.mrb[0].mxu0
  %v165 = vpop.f32.mrb[0].mxu0
  %v166 = vadd.f32 0.0, %v165
  %v167 = vpop.f32.mrb[0].mxu0
  %168 = vmatprep.mubr.bf16.mxu0 0
  %169 = vmatmul.mubr.bf16.gmra.mrb[0].mxu0 %v69
  %v170 = vpop.f32.mrb[0].mxu0
  %v171 = vadd.f32 0.0, %v170
  %v172 = vpop.f32.mrb[0].mxu0
  %v173 = vpop.f32.mrb[0].mxu0
  %v174 = vadd.f32 0.0, %v173
  %v175 = vpop.f32.mrb[0].mxu0
  %176 = vmatprep.mubr.bf16.mxu0 0
  %177 = vmatmul.mubr.bf16.gmra.mrb[0].mxu0 %v70
  %v178 = vpop.f32.mrb[0].mxu0
  %v179 = vadd.f32 0.0, %v178
  %v180 = vpop.f32.mrb[0].mxu0
  %v181 = vpop.f32.mrb[0].mxu0
  %v182 = vadd.f32 0.0, %v181
  %v183 = vpop.f32.mrb[0].mxu0
  %184 = vmatprep.mubr.bf16.mxu0 0
  %185 = vmatmul.mubr.bf16.gmra.mrb[0].mxu0 %v71
  %v186 = vpop.f32.mrb[0].mxu0
  %v187 = vadd.f32 0.0, %v186
  %v188 = vpop.f32.mrb[0].mxu0
  %v189 = vpop.f32.mrb[0].mxu0
  %v190 = vadd.f32 0.0, %v189
  %v191 = vpop.f32.mrb[0].mxu0
  %192 = vdwg.mxu0
  %v193 = vadd.f32 %v32, %v131
  %v194 = vadd.f32 %v33, %v134
  %v195 = vadd.f32 %v34, %v139
  %v196 = vadd.f32 %v35, %v142
  %v197 = vadd.f32 %v36, %v147
  %v198 = vadd.f32 %v37, %v150
  %v199 = vadd.f32 %v38, %v155
  %v200 = vadd.f32 %v39, %v158
  %v201 = vadd.f32 %v40, %v163
  %v202 = vadd.f32 %v41, %v166
  %v203 = vadd.f32 %v42, %v171
  %v204 = vadd.f32 %v43, %v174
  %v205 = vadd.f32 %v44, %v179
  %v206 = vadd.f32 %v45, %v182
  %v207 = vadd.f32 %v46, %v187
  %v208 = vadd.f32 %v47, %v190
  %209 = vst [vmem:[#allocation2] sm:$0xff] %v193
  %210 = vst [vmem:[#allocation2 + $0x8] sm:$0xff] %v194
  %211 = vst [vmem:[#allocation2 + $0x10] sm:$0xff] %v195
  %212 = vst [vmem:[#allocation2 + $0x18] sm:$0xff] %v196
  %213 = vst [vmem:[#allocation2 + $0x20] sm:$0xff] %v197
  %214 = vst [vmem:[#allocation2 + $0x28] sm:$0xff] %v198
  %215 = vst [vmem:[#allocation2 + $0x30] sm:$0xff] %v199
  %216 = vst [vmem:[#allocation2 + $0x38] sm:$0xff] %v200
  %217 = vst [vmem:[#allocation2 + $0x40] sm:$0xff] %v201
  %218 = vst [vmem:[#allocation2 + $0x48] sm:$0xff] %v202
  %219 = vst [vmem:[#allocation2 + $0x50] sm:$0xff] %v203
  %220 = vst [vmem:[#allocation2 + $0x58] sm:$0xff] %v204
  %221 = vst [vmem:[#allocation2 + $0x60] sm:$0xff] %v205
  %222 = vst [vmem:[#allocation2 + $0x68] sm:$0xff] %v206
  %223 = vst [vmem:[#allocation2 + $0x70] sm:$0xff] %v207
  %224 = vst [vmem:[#allocation2 + $0x78] sm:$0xff] %v208
  // Predicated region
  $region14: #{gpt_forward.63} parent=0 // pred_check
    %p225 = pneg %p12
  $region15: #{gpt_forward.63} parent=0 // pred_check_branch
    %227 = sbr.rel (%p225) target = $region17
  $region16: #{gpt_forward.63} parent=0 // pred_region
    %v228 = vld [vmem:[#allocation2] sm:$0xff]
    %v229 = vld [vmem:[#allocation2 + $0x8] sm:$0xff]
    %v230 = vld [vmem:[#allocation2 + $0x10] sm:$0xff]
    %v231 = vld [vmem:[#allocation2 + $0x18] sm:$0xff]
    %v232 = vld [vmem:[#allocation2 + $0x20] sm:$0xff]
    %v233 = vld [vmem:[#allocation2 + $0x28] sm:$0xff]
    %v234 = vld [vmem:[#allocation2 + $0x30] sm:$0xff]
    %v235 = vld [vmem:[#allocation2 + $0x38] sm:$0xff]
    %v236 = vld [vmem:[#allocation2 + $0x40] sm:$0xff]
    %v237 = vld [vmem:[#allocation2 + $0x48] sm:$0xff]
    %v238 = vld [vmem:[#allocation2 + $0x50] sm:$0xff]
    %v239 = vld [vmem:[#allocation2 + $0x58] sm:$0xff]
    %v240 = vld [vmem:[#allocation2 + $0x60] sm:$0xff]
    %v241 = vld [vmem:[#allocation2 + $0x68] sm:$0xff]
    %v242 = vld [vmem:[#allocation2 + $0x70] sm:$0xff]
    %v243 = vld [vmem:[#allocation2 + $0x78] sm:$0xff]
    %244 = vst [vmem:[%s2] sm:$0xff] %v228
    %245 = vst [vmem:[%s2 + $0x8] sm:$0xff] %v229
    %246 = vst [vmem:[%s2 + $0x10] sm:$0xff] %v230
    %247 = vst [vmem:[%s2 + $0x18] sm:$0xff] %v231
    %248 = vst [vmem:[%s2 + $0x20] sm:$0xff] %v232
    %249 = vst [vmem:[%s2 + $0x28] sm:$0xff] %v233
    %250 = vst [vmem:[%s2 + $0x30] sm:$0xff] %v234
    %251 = vst [vmem:[%s2 + $0x38] sm:$0xff] %v235
    %252 = vst [vmem:[%s2 + $0x40] sm:$0xff] %v236
    %253 = vst [vmem:[%s2 + $0x48] sm:$0xff] %v237
    %254 = vst [vmem:[%s2 + $0x50] sm:$0xff] %v238
    %255 = vst [vmem:[%s2 + $0x58] sm:$0xff] %v239
    %256 = vst [vmem:[%s2 + $0x60] sm:$0xff] %v240
    %257 = vst [vmem:[%s2 + $0x68] sm:$0xff] %v241
    %258 = vst [vmem:[%s2 + $0x70] sm:$0xff] %v242
    %259 = vst [vmem:[%s2 + $0x78] sm:$0xff] %v243
  $region17: #{gpt_forward.63} parent=0 // pred_fallthru
    _
  // Predicated region
  $region18: #{gpt_forward.63} parent=0 // pred_check
    _
  $region19: #{gpt_forward.63} parent=0 // pred_check_branch
    %261 = sbr.rel (0) target = $region21
  $region20: #{gpt_forward.63} parent=0 // pred_region
    _
  $region21: #{gpt_forward.63} parent=0 // pred_fallthru
    _
  // Predicated region
  $region22: #{gpt_forward.63} parent=0 // pred_check
    _
  $region23: #{gpt_forward.63} parent=0 // pred_check_branch
    %263 = sbr.rel (0) target = $region25
  $region24: #{gpt_forward.63} parent=0 // pred_region
    _
  $region25: #{gpt_forward.63} parent=0 // pred_fallthru
    _

// kernel: gpt_forward.62
$region0: #{gpt_forward.62}
  #allocation0 [shape = 'u32[]', space=smem, size = 0x4, offset = 0x4, fixed_abs, tag = 'smem constant byte address 0x4 - core index']
  #allocation1 [shape = 'u32[144,128]{1,0:T(1,128)}', space=vmem, size = 0x12000, scoped, tag = 'internal scratch']
  #allocation2 [shape = 'f32[128,1]{1,0:T(8,128)}', space=vmem, size = 0x10000, scoped, tag = 'scratch operand']
  #allocation3 [shape = 'f32[128,1]{1,0:T(8,128)}', space=vmem, size = 0x10000, scoped, tag = 'scratch operand']
  #allocation4 [shape = 'f32[128,128]{1,0:T(8,128)}', space=vmem, size = 0x10000, scoped, tag = 'scratch operand']
  %s0 = inlined_call_operand.vmem [shape: f32[1,128,128], index: 0, kind: input, shape index: {}]
  %s1 = inlined_call_operand.vmem [shape: f32[1,128,128], index: 1, kind: input, shape index: {}]
  %s2 = inlined_call_operand.vmem [shape: f32[1,128,128], index: 2, kind: input, shape index: {}]
  %s3 = inlined_call_operand.vmem [shape: f32[1,128,128], index: 3, kind: output, shape index: {}]
  %s4 = sld [smem:[#allocation0]]
  $region34: #{gpt_forward.62} parent=0
    _
  %s6 = ssub.s32 1, %s4
  %s7 = scalar_select 0, %s6, %s4
  // Predicated region
  $region2: #{gpt_forward.62} parent=0 // pred_check
    _
  $region3: #{gpt_forward.62} parent=0 // pred_check_branch
    %9 = sbr.rel (0) target = $region5
  $region4: #{gpt_forward.62} parent=0 // pred_region
    _
  $region5: #{gpt_forward.62} parent=0 // pred_fallthru
    _
  // Predicated region
  $region6: #{gpt_forward.62} parent=0 // pred_check
    _
  $region7: #{gpt_forward.62} parent=0 // pred_check_branch
    %11 = sbr.rel (0) target = $region9
  $region8: #{gpt_forward.62} parent=0 // pred_region
    _
  $region9: #{gpt_forward.62} parent=0 // pred_fallthru
    _
  // Predicated region
  $region10: #{gpt_forward.62} parent=0 // pred_check
    _
  $region11: #{gpt_forward.62} parent=0 // pred_check_branch
    %13 = sbr.rel (0) target = $region13
  $region12: #{gpt_forward.62} parent=0 // pred_region
    _
  $region13: #{gpt_forward.62} parent=0 // pred_fallthru
    _
  %p15 = scmp.eq.s32.totalorder 0, 0
  // Predicated region
  $region14: #{gpt_forward.62} parent=0 // pred_check
    %p16 = pneg %p15
  $region15: #{gpt_forward.62} parent=0 // pred_check_branch
    %18 = sbr.rel (%p16) target = $region17
  $region16: #{gpt_forward.62} parent=0 // pred_region
    %vm19 = vcmask 7168
    %20 = vst.msk [vmem:[#allocation2] sm:$0xff] %vm19, -inf
    %21 = vst.msk [vmem:[#allocation2 + $0x8] sm:$0xff] %vm19, -inf
    %22 = vst.msk [vmem:[#allocation2 + $0x10] sm:$0xff] %vm19, -inf
    %23 = vst.msk [vmem:[#allocation2 + $0x18] sm:$0xff] %vm19, -inf
    %24 = vst.msk [vmem:[#allocation2 + $0x20] sm:$0xff] %vm19, -inf
    %25 = vst.msk [vmem:[#allocation2 + $0x28] sm:$0xff] %vm19, -inf
    %26 = vst.msk [vmem:[#allocation2 + $0x30] sm:$0xff] %vm19, -inf
    %27 = vst.msk [vmem:[#allocation2 + $0x38] sm:$0xff] %vm19, -inf
    %28 = vst.msk [vmem:[#allocation2 + $0x40] sm:$0xff] %vm19, -inf
    %29 = vst.msk [vmem:[#allocation2 + $0x48] sm:$0xff] %vm19, -inf
    %30 = vst.msk [vmem:[#allocation2 + $0x50] sm:$0xff] %vm19, -inf
    %31 = vst.msk [vmem:[#allocation2 + $0x58] sm:$0xff] %vm19, -inf
    %32 = vst.msk [vmem:[#allocation2 + $0x60] sm:$0xff] %vm19, -inf
    %33 = vst.msk [vmem:[#allocation2 + $0x68] sm:$0xff] %vm19, -inf
    %34 = vst.msk [vmem:[#allocation2 + $0x70] sm:$0xff] %vm19, -inf
    %35 = vst.msk [vmem:[#allocation2 + $0x78] sm:$0xff] %vm19, -inf
    %36 = vst.msk [vmem:[#allocation3] sm:$0xff] %vm19, 0.0
    %37 = vst.msk [vmem:[#allocation3 + $0x8] sm:$0xff] %vm19, 0.0
    %38 = vst.msk [vmem:[#allocation3 + $0x10] sm:$0xff] %vm19, 0.0
    %39 = vst.msk [vmem:[#allocation3 + $0x18] sm:$0xff] %vm19, 0.0
    %40 = vst.msk [vmem:[#allocation3 + $0x20] sm:$0xff] %vm19, 0.0
    %41 = vst.msk [vmem:[#allocation3 + $0x28] sm:$0xff] %vm19, 0.0
    %42 = vst.msk [vmem:[#allocation3 + $0x30] sm:$0xff] %vm19, 0.0
    %43 = vst.msk [vmem:[#allocation3 + $0x38] sm:$0xff] %vm19, 0.0
    %44 = vst.msk [vmem:[#allocation3 + $0x40] sm:$0xff] %vm19, 0.0
    %45 = vst.msk [vmem:[#allocation3 + $0x48] sm:$0xff] %vm19, 0.0
    %46 = vst.msk [vmem:[#allocation3 + $0x50] sm:$0xff] %vm19, 0.0
    %47 = vst.msk [vmem:[#allocation3 + $0x58] sm:$0xff] %vm19, 0.0
    %48 = vst.msk [vmem:[#allocation3 + $0x60] sm:$0xff] %vm19, 0.0
    %49 = vst.msk [vmem:[#allocation3 + $0x68] sm:$0xff] %vm19, 0.0
    %50 = vst.msk [vmem:[#allocation3 + $0x70] sm:$0xff] %vm19, 0.0
    %51 = vst.msk [vmem:[#allocation3 + $0x78] sm:$0xff] %vm19, 0.0
    %52 = vst [vmem:[#allocation4] sm:$0xff] 0.0
    %53 = vst [vmem:[#allocation4 + $0x8] sm:$0xff] 0.0
    %54 = vst [vmem:[#allocation4 + $0x10] sm:$0xff] 0.0
    %55 = vst [vmem:[#allocation4 + $0x18] sm:$0xff] 0.0
    %56 = vst [vmem:[#allocation4 + $0x20] sm:$0xff] 0.0
    %57 = vst [vmem:[#allocation4 + $0x28] sm:$0xff] 0.0
    %58 = vst [vmem:[#allocation4 + $0x30] sm:$0xff] 0.0
    %59 = vst [vmem:[#allocation4 + $0x38] sm:$0xff] 0.0
    %60 = vst [vmem:[#allocation4 + $0x40] sm:$0xff] 0.0
    %61 = vst [vmem:[#allocation4 + $0x48] sm:$0xff] 0.0
    %62 = vst [vmem:[#allocation4 + $0x50] sm:$0xff] 0.0
    %63 = vst [vmem:[#allocation4 + $0x58] sm:$0xff] 0.0
    %64 = vst [vmem:[#allocation4 + $0x60] sm:$0xff] 0.0
    %65 = vst [vmem:[#allocation4 + $0x68] sm:$0xff] 0.0
    %66 = vst [vmem:[#allocation4 + $0x70] sm:$0xff] 0.0
    %67 = vst [vmem:[#allocation4 + $0x78] sm:$0xff] 0.0
  $region17: #{gpt_forward.62} parent=0 // pred_fallthru
    _
  %s68 = smul.u32 0, 128
  %s69 = sadd.s32 0, 1
  %s70 = smul.u32 %s69, 128
  %p71 = scmp.lt.s32.totalorder %s68, %s70
  // Predicated region
  $region18: #{gpt_forward.62} parent=0 // pred_check
    %p72 = pneg %p71
  $region19: #{gpt_forward.62} parent=0 // pred_check_branch
    %74 = sbr.rel (%p72) target = $region21
  $region20: #{gpt_forward.62} parent=0 // pred_region
    %v75 = vld [vmem:[%s0] sm:$0xff]
    %v76 = vld [vmem:[%s0 + $0x8] sm:$0xff]
    %v77 = vld [vmem:[%s0 + $0x10] sm:$0xff]
    %v78 = vld [vmem:[%s0 + $0x18] sm:$0xff]
    %v79 = vld [vmem:[%s0 + $0x20] sm:$0xff]
    %v80 = vld [vmem:[%s0 + $0x28] sm:$0xff]
    %v81 = vld [vmem:[%s0 + $0x30] sm:$0xff]
    %v82 = vld [vmem:[%s0 + $0x38] sm:$0xff]
    %v83 = vld [vmem:[%s0 + $0x40] sm:$0xff]
    %v84 = vld [vmem:[%s0 + $0x48] sm:$0xff]
    %v85 = vld [vmem:[%s0 + $0x50] sm:$0xff]
    %v86 = vld [vmem:[%s0 + $0x58] sm:$0xff]
    %v87 = vld [vmem:[%s0 + $0x60] sm:$0xff]
    %v88 = vld [vmem:[%s0 + $0x68] sm:$0xff]
    %v89 = vld [vmem:[%s0 + $0x70] sm:$0xff]
    %v90 = vld [vmem:[%s0 + $0x78] sm:$0xff]
    %v91 = vmul.f32 %v75, 0.12
    %v92 = vmul.f32 %v76, 0.12
    %v93 = vmul.f32 %v77, 0.12
    %v94 = vmul.f32 %v78, 0.12
    %v95 = vmul.f32 %v79, 0.12
    %v96 = vmul.f32 %v80, 0.12
    %v97 = vmul.f32 %v81, 0.12
    %v98 = vmul.f32 %v82, 0.12
    %v99 = vmul.f32 %v83, 0.12
    %v100 = vmul.f32 %v84, 0.12
    %v101 = vmul.f32 %v85, 0.12
    %v102 = vmul.f32 %v86, 0.12
    %v103 = vmul.f32 %v87, 0.12
    %v104 = vmul.f32 %v88, 0.12
    %v105 = vmul.f32 %v89, 0.12
    %v106 = vmul.f32 %v90, 0.12
    %v107 = vpack.c.bf16 %v92, %v91
    %v108 = vpack.c.bf16 %v94, %v93
    %v109 = vpack.c.bf16 %v96, %v95
    %v110 = vpack.c.bf16 %v98, %v97
    %v111 = vpack.c.bf16 %v100, %v99
    %v112 = vpack.c.bf16 %v102, %v101
    %v113 = vpack.c.bf16 %v104, %v103
    %v114 = vpack.c.bf16 %v106, %v105
    %v115 = vld [vmem:[%s1] sm:$0xff]
    %v116 = vld [vmem:[%s1 + $0x8] sm:$0xff]
    %v117 = vld [vmem:[%s1 + $0x10] sm:$0xff]
    %v118 = vld [vmem:[%s1 + $0x18] sm:$0xff]
    %v119 = vld [vmem:[%s1 + $0x20] sm:$0xff]
    %v120 = vld [vmem:[%s1 + $0x28] sm:$0xff]
    %v121 = vld [vmem:[%s1 + $0x30] sm:$0xff]
    %v122 = vld [vmem:[%s1 + $0x38] sm:$0xff]
    %v123 = vld [vmem:[%s1 + $0x40] sm:$0xff]
    %v124 = vld [vmem:[%s1 + $0x48] sm:$0xff]
    %v125 = vld [vmem:[%s1 + $0x50] sm:$0xff]
    %v126 = vld [vmem:[%s1 + $0x58] sm:$0xff]
    %v127 = vld [vmem:[%s1 + $0x60] sm:$0xff]
    %v128 = vld [vmem:[%s1 + $0x68] sm:$0xff]
    %v129 = vld [vmem:[%s1 + $0x70] sm:$0xff]
    %v130 = vld [vmem:[%s1 + $0x78] sm:$0xff]
    %v131 = vpack.c.bf16 %v116, %v115
    %v132 = vpack.c.bf16 %v118, %v117
    %v133 = vpack.c.bf16 %v120, %v119
    %v134 = vpack.c.bf16 %v122, %v121
    %v135 = vpack.c.bf16 %v124, %v123
    %v136 = vpack.c.bf16 %v126, %v125
    %v137 = vpack.c.bf16 %v128, %v127
    %v138 = vpack.c.bf16 %v130, %v129
    %139 = vmatprep.subr.bf16.mxu0 0
    %140 = vmatpush1.bf16.xpose.msra.mxu0 %v131
    %141 = vmatprep.subr.bf16.mxu0 0
    %142 = vmatpush1.bf16.xpose.msra.mxu0 %v132
    %143 = vmatprep.subr.bf16.mxu0 0
    %144 = vmatpush1.bf16.xpose.msra.mxu0 %v133
    %145 = vmatprep.subr.bf16.mxu0 0
    %146 = vmatpush1.bf16.xpose.msra.mxu0 %v134
    %147 = vmatprep.subr.bf16.mxu0 0
    %148 = vmatpush1.bf16.xpose.msra.mxu0 %v135
    %149 = vmatprep.subr.bf16.mxu0 0
    %150 = vmatpush1.bf16.xpose.msra.mxu0 %v136
    %151 = vmatprep.subr.bf16.mxu0 0
    %152 = vmatpush1.bf16.xpose.msra.mxu0 %v137
    %153 = vmatprep.subr.bf16.mxu0 0
    %154 = vmatpush1.bf16.xpose.msra.mxu0 %v138
    %155 = vmatprep.subr.bf16.mxu0 0
    %156 = vmatpush1.bf16.xpose.msra.mxu0 0
    %157 = vmatprep.subr.bf16.mxu0 0
    %158 = vmatpush1.bf16.xpose.msra.mxu0 0
    %159 = vmatprep.subr.bf16.mxu0 0
    %160 = vmatpush1.bf16.xpose.msra.mxu0 0
    %161 = vmatprep.subr.bf16.mxu0 0
    %162 = vmatpush1.bf16.xpose.msra.mxu0 0
    %163 = vmatprep.subr.bf16.mxu0 0
    %164 = vmatpush1.bf16.xpose.msra.mxu0 0
    %165 = vmatprep.subr.bf16.mxu0 0
    %166 = vmatpush1.bf16.xpose.msra.mxu0 0
    %167 = vmatprep.subr.bf16.mxu0 0
    %168 = vmatpush1.bf16.xpose.msra.mxu0 0
    %169 = vmatprep.subr.bf16.mxu0 0
    %170 = vmatpush1.bf16.xpose.msra.mxu0 0
    %171 = vmatprep.mubr.bf16.mxu0 0
    %172 = vmatmul.mubr.bf16.gmra.mrb[0].mxu0 %v107
    %v173 = vpop.f32.mrb[0].mxu0
    %v174 = vadd.f32 0.0, %v173
    %v175 = vpop.f32.mrb[0].mxu0
    %v176 = vpop.f32.mrb[0].mxu0
    %v177 = vadd.f32 0.0, %v176
    %v178 = vpop.f32.mrb[0].mxu0
    %179 = vmatprep.mubr.bf16.mxu0 0
    %180 = vmatmul.mubr.bf16.gmra.mrb[0].mxu0 %v108
    %v181 = vpop.f32.mrb[0].mxu0
    %v182 = vadd.f32 0.0, %v181
    %v183 = vpop.f32.mrb[0].mxu0
    %v184 = vpop.f32.mrb[0].mxu0
    %v185 = vadd.f32 0.0, %v184
    %v186 = vpop.f32.mrb[0].mxu0
    %187 = vmatprep.mubr.bf16.mxu0 0
    %188 = vmatmul.mubr.bf16.gmra.mrb[0].mxu0 %v109
    %v189 = vpop.f32.mrb[0].mxu0
    %v190 = vadd.f32 0.0, %v189
    %v191 = vpop.f32.mrb[0].mxu0
    %v192 = vpop.f32.mrb[0].mxu0
    %v193 = vadd.f32 0.0, %v192
    %v194 = vpop.f32.mrb[0].mxu0
    %195 = vmatprep.mubr.bf16.mxu0 0
    %196 = vmatmul.mubr.bf16.gmra.mrb[0].mxu0 %v110
    %v197 = vpop.f32.mrb[0].mxu0
    %v198 = vadd.f32 0.0, %v197
    %v199 = vpop.f32.mrb[0].mxu0
    %v200 = vpop.f32.mrb[0].mxu0
    %v201 = vadd.f32 0.0, %v200
    %v202 = vpop.f32.mrb[0].mxu0
    %203 = vmatprep.mubr.bf16.mxu0 0
    %204 = vmatmul.mubr.bf16.gmra.mrb[0].mxu0 %v111
    %v205 = vpop.f32.mrb[0].mxu0
    %v206 = vadd.f32 0.0, %v205
    %v207 = vpop.f32.mrb[0].mxu0
    %v208 = vpop.f32.mrb[0].mxu0
    %v209 = vadd.f32 0.0, %v208
    %v210 = vpop.f32.mrb[0].mxu0
    %211 = vmatprep.mubr.bf16.mxu0 0
    %212 = vmatmul.mubr.bf16.gmra.mrb[0].mxu0 %v112
    %v213 = vpop.f32.mrb[0].mxu0
    %v214 = vadd.f32 0.0, %v213
    %v215 = vpop.f32.mrb[0].mxu0
    %v216 = vpop.f32.mrb[0].mxu0
    %v217 = vadd.f32 0.0, %v216
    %v218 = vpop.f32.mrb[0].mxu0
    %219 = vmatprep.mubr.bf16.mxu0 0
    %220 = vmatmul.mubr.bf16.gmra.mrb[0].mxu0 %v113
    %v221 = vpop.f32.mrb[0].mxu0
    %v222 = vadd.f32 0.0, %v221
    %v223 = vpop.f32.mrb[0].mxu0
    %v224 = vpop.f32.mrb[0].mxu0
    %v225 = vadd.f32 0.0, %v224
    %v226 = vpop.f32.mrb[0].mxu0
    %227 = vmatprep.mubr.bf16.mxu0 0
    %228 = vmatmul.mubr.bf16.gmra.mrb[0].mxu0 %v114
    %v229 = vpop.f32.mrb[0].mxu0
    %v230 = vadd.f32 0.0, %v229
    %v231 = vpop.f32.mrb[0].mxu0
    %v232 = vpop.f32.mrb[0].mxu0
    %v233 = vadd.f32 0.0, %v232
    %v234 = vpop.f32.mrb[0].mxu0
    %235 = vdwg.mxu0
    %s236 = smul.u32 0, 128
    %v237 = vlaneseq
    %v238 = vshrl.u32 %v237, 7
    %v239 = vadd.s32 %v238, 8
    %v240 = vadd.s32 %v238, 16
    %v241 = vadd.s32 %v238, 24
    %v242 = vadd.s32 %v238, 32
    %v243 = vadd.s32 %v238, 40
    %v244 = vadd.s32 %v238, 48
    %v245 = vadd.s32 %v238, 56
    %v246 = vadd.s32 %v238, 64
    %v247 = vadd.s32 %v238, 72
    %v248 = vadd.s32 %v238, 80
    %v249 = vadd.s32 %v238, 88
    %v250 = vadd.s32 %v238, 96
    %v251 = vadd.s32 %v238, 104
    %v252 = vadd.s32 %v238, 112
    %v253 = vadd.s32 %v238, 120
    %v254 = vstv %s236
    %v255 = vadd.s32 %v254, %v238
    %v256 = vadd.s32 %v254, %v239
    %v257 = vadd.s32 %v254, %v240
    %v258 = vadd.s32 %v254, %v241
    %v259 = vadd.s32 %v254, %v242
    %v260 = vadd.s32 %v254, %v243
    %v261 = vadd.s32 %v254, %v244
    %v262 = vadd.s32 %v254, %v245
    %v263 = vadd.s32 %v254, %v246
    %v264 = vadd.s32 %v254, %v247
    %v265 = vadd.s32 %v254, %v248
    %v266 = vadd.s32 %v254, %v249
    %v267 = vadd.s32 %v254, %v250
    %v268 = vadd.s32 %v254, %v251
    %v269 = vadd.s32 %v254, %v252
    %v270 = vadd.s32 %v254, %v253
    %v271 = vlaneseq
    %v272 = vand.u32 %v271, 127
    %v273 = vstv %s68
    %v274 = vadd.s32 %v273, %v272
    %vm275 = vcmp.ge.s32.totalorder %v255, %v274
    %vm276 = vcmp.ge.s32.totalorder %v256, %v274
    %vm277 = vcmp.ge.s32.totalorder %v257, %v274
    %vm278 = vcmp.ge.s32.totalorder %v258, %v274
    %vm279 = vcmp.ge.s32.totalorder %v259, %v274
    %vm280 = vcmp.ge.s32.totalorder %v260, %v274
    %vm281 = vcmp.ge.s32.totalorder %v261, %v274
    %vm282 = vcmp.ge.s32.totalorder %v262, %v274
    %vm283 = vcmp.ge.s32.totalorder %v263, %v274
    %vm284 = vcmp.ge.s32.totalorder %v264, %v274
    %vm285 = vcmp.ge.s32.totalorder %v265, %v274
    %vm286 = vcmp.ge.s32.totalorder %v266, %v274
    %vm287 = vcmp.ge.s32.totalorder %v267, %v274
    %vm288 = vcmp.ge.s32.totalorder %v268, %v274
    %vm289 = vcmp.ge.s32.totalorder %v269, %v274
    %vm290 = vcmp.ge.s32.totalorder %v270, %v274
    %v291 = vsel %vm275, %v174, -inf
    %v292 = vsel %vm276, %v177, -inf
    %v293 = vsel %vm277, %v182, -inf
    %v294 = vsel %vm278, %v185, -inf
    %v295 = vsel %vm279, %v190, -inf
    %v296 = vsel %vm280, %v193, -inf
    %v297 = vsel %vm281, %v198, -inf
    %v298 = vsel %vm282, %v201, -inf
    %v299 = vsel %vm283, %v206, -inf
    %v300 = vsel %vm284, %v209, -inf
    %v301 = vsel %vm285, %v214, -inf
    %v302 = vsel %vm286, %v217, -inf
    %v303 = vsel %vm287, %v222, -inf
    %v304 = vsel %vm288, %v225, -inf
    %v305 = vsel %vm289, %v230, -inf
    %v306 = vsel %vm290, %v233, -inf
    %v307 = vld [vmem:[#allocation2] sm:$0xff]
    %v308 = vld [vmem:[#allocation2 + $0x8] sm:$0xff]
    %v309 = vld [vmem:[#allocation2 + $0x10] sm:$0xff]
    %v310 = vld [vmem:[#allocation2 + $0x18] sm:$0xff]
    %v311 = vld [vmem:[#allocation2 + $0x20] sm:$0xff]
    %v312 = vld [vmem:[#allocation2 + $0x28] sm:$0xff]
    %v313 = vld [vmem:[#allocation2 + $0x30] sm:$0xff]
    %v314 = vld [vmem:[#allocation2 + $0x38] sm:$0xff]
    %v315 = vld [vmem:[#allocation2 + $0x40] sm:$0xff]
    %v316 = vld [vmem:[#allocation2 + $0x48] sm:$0xff]
    %v317 = vld [vmem:[#allocation2 + $0x50] sm:$0xff]
    %v318 = vld [vmem:[#allocation2 + $0x58] sm:$0xff]
    %v319 = vld [vmem:[#allocation2 + $0x60] sm:$0xff]
    %v320 = vld [vmem:[#allocation2 + $0x68] sm:$0xff]
    %v321 = vld [vmem:[#allocation2 + $0x70] sm:$0xff]
    %v322 = vld [vmem:[#allocation2 + $0x78] sm:$0xff]
    %323 = vmax.xlane.f32.xlu0 %v291
    %v324 = vpop.xlane.xlu0 %323
    %325 = vmax.xlane.f32.xlu0 %v292
    %v326 = vpop.xlane.xlu0 %325
    %327 = vmax.xlane.f32.xlu0 %v293
    %v328 = vpop.xlane.xlu0 %327
    %329 = vmax.xlane.f32.xlu0 %v294
    %v330 = vpop.xlane.xlu0 %329
    %331 = vmax.xlane.f32.xlu0 %v295
    %v332 = vpop.xlane.xlu0 %331
    %333 = vmax.xlane.f32.xlu0 %v296
    %v334 = vpop.xlane.xlu0 %333
    %335 = vmax.xlane.f32.xlu0 %v297
    %v336 = vpop.xlane.xlu0 %335
    %337 = vmax.xlane.f32.xlu0 %v298
    %v338 = vpop.xlane.xlu0 %337
    %339 = vmax.xlane.f32.xlu0 %v299
    %v340 = vpop.xlane.xlu0 %339
    %341 = vmax.xlane.f32.xlu0 %v300
    %v342 = vpop.xlane.xlu0 %341
    %343 = vmax.xlane.f32.xlu0 %v301
    %v344 = vpop.xlane.xlu0 %343
    %345 = vmax.xlane.f32.xlu0 %v302
    %v346 = vpop.xlane.xlu0 %345
    %347 = vmax.xlane.f32.xlu0 %v303
    %v348 = vpop.xlane.xlu0 %347
    %349 = vmax.xlane.f32.xlu0 %v304
    %v350 = vpop.xlane.xlu0 %349
    %351 = vmax.xlane.f32.xlu0 %v305
    %v352 = vpop.xlane.xlu0 %351
    %353 = vmax.xlane.f32.xlu0 %v306
    %v354 = vpop.xlane.xlu0 %353
    %v355 = vmax.f32 %v307, %v324
    %v356 = vmax.f32 %v308, %v326
    %v357 = vmax.f32 %v309, %v328
    %v358 = vmax.f32 %v310, %v330
    %v359 = vmax.f32 %v311, %v332
    %v360 = vmax.f32 %v312, %v334
    %v361 = vmax.f32 %v313, %v336
    %v362 = vmax.f32 %v314, %v338
    %v363 = vmax.f32 %v315, %v340
    %v364 = vmax.f32 %v316, %v342
    %v365 = vmax.f32 %v317, %v344
    %v366 = vmax.f32 %v318, %v346
    %v367 = vmax.f32 %v319, %v348
    %v368 = vmax.f32 %v320, %v350
    %v369 = vmax.f32 %v321, %v352
    %v370 = vmax.f32 %v322, %v354
    %v371 = vsub.f32 %v307, %v355
    %v372 = vsub.f32 %v308, %v356
    %v373 = vsub.f32 %v309, %v357
    %v374 = vsub.f32 %v310, %v358
    %v375 = vsub.f32 %v311, %v359
    %v376 = vsub.f32 %v312, %v360
    %v377 = vsub.f32 %v313, %v361
    %v378 = vsub.f32 %v314, %v362
    %v379 = vsub.f32 %v315, %v363
    %v380 = vsub.f32 %v316, %v364
    %v381 = vsub.f32 %v317, %v365
    %v382 = vsub.f32 %v318, %v366
    %v383 = vsub.f32 %v319, %v367
    %v384 = vsub.f32 %v320, %v368
    %v385 = vsub.f32 %v321, %v369
    %v386 = vsub.f32 %v322, %v370
    %v387 = vmul.f32 %v371, 1.442695
    %v388 = vpow.pop %v387
    %v389 = vmul.f32 %v372, 1.442695
    %v390 = vpow.pop %v389
    %v391 = vmul.f32 %v373, 1.442695
    %v392 = vpow.pop %v391
    %v393 = vmul.f32 %v374, 1.442695
    %v394 = vpow.pop %v393
    %v395 = vmul.f32 %v375, 1.442695
    %v396 = vpow.pop %v395
    %v397 = vmul.f32 %v376, 1.442695
    %v398 = vpow.pop %v397
    %v399 = vmul.f32 %v377, 1.442695
    %v400 = vpow.pop %v399
    %v401 = vmul.f32 %v378, 1.442695
    %v402 = vpow.pop %v401
    %v403 = vmul.f32 %v379, 1.442695
    %v404 = vpow.pop %v403
    %v405 = vmul.f32 %v380, 1.442695
    %v406 = vpow.pop %v405
    %v407 = vmul.f32 %v381, 1.442695
    %v408 = vpow.pop %v407
    %v409 = vmul.f32 %v382, 1.442695
    %v410 = vpow.pop %v409
    %v411 = vmul.f32 %v383, 1.442695
    %v412 = vpow.pop %v411
    %v413 = vmul.f32 %v384, 1.442695
    %v414 = vpow.pop %v413
    %v415 = vmul.f32 %v385, 1.442695
    %v416 = vpow.pop %v415
    %v417 = vmul.f32 %v386, 1.442695
    %v418 = vpow.pop %v417
    %420 = vset.pattern.permute.xlu0 0
    %421 = vperm.xlu0 %420, %v355
    %v422 = vpop.permute.xlu0 %421
    %425 = vset.pattern.permute.xlu0 0
    %426 = vperm.xlu0 %425, %v356
    %v427 = vpop.permute.xlu0 %426
    %430 = vset.pattern.permute.xlu0 0
    %431 = vperm.xlu0 %430, %v357
    %v432 = vpop.permute.xlu0 %431
    %435 = vset.pattern.permute.xlu0 0
    %436 = vperm.xlu0 %435, %v358
    %v437 = vpop.permute.xlu0 %436
    %440 = vset.pattern.permute.xlu0 0
    %441 = vperm.xlu0 %440, %v359
    %v442 = vpop.permute.xlu0 %441
    %445 = vset.pattern.permute.xlu0 0
    %446 = vperm.xlu0 %445, %v360
    %v447 = vpop.permute.xlu0 %446
    %450 = vset.pattern.permute.xlu0 0
    %451 = vperm.xlu0 %450, %v361
    %v452 = vpop.permute.xlu0 %451
    %455 = vset.pattern.permute.xlu0 0
    %456 = vperm.xlu0 %455, %v362
    %v457 = vpop.permute.xlu0 %456
    %460 = vset.pattern.permute.xlu0 0
    %461 = vperm.xlu0 %460, %v363
    %v462 = vpop.permute.xlu0 %461
    %465 = vset.pattern.permute.xlu0 0
    %466 = vperm.xlu0 %465, %v364
    %v467 = vpop.permute.xlu0 %466
    %470 = vset.pattern.permute.xlu0 0
    %471 = vperm.xlu0 %470, %v365
    %v472 = vpop.permute.xlu0 %471
    %475 = vset.pattern.permute.xlu0 0
    %476 = vperm.xlu0 %475, %v366
    %v477 = vpop.permute.xlu0 %476
    %480 = vset.pattern.permute.xlu0 0
    %481 = vperm.xlu0 %480, %v367
    %v482 = vpop.permute.xlu0 %481
    %485 = vset.pattern.permute.xlu0 0
    %486 = vperm.xlu0 %485, %v368
    %v487 = vpop.permute.xlu0 %486
    %490 = vset.pattern.permute.xlu0 0
    %491 = vperm.xlu0 %490, %v369
    %v492 = vpop.permute.xlu0 %491
    %495 = vset.pattern.permute.xlu0 0
    %496 = vperm.xlu0 %495, %v370
    %v497 = vpop.permute.xlu0 %496
    %v499 = vsub.f32 %v291, %v422
    %v500 = vsub.f32 %v292, %v427
    %v501 = vsub.f32 %v293, %v432
    %v502 = vsub.f32 %v294, %v437
    %v503 = vsub.f32 %v295, %v442
    %v504 = vsub.f32 %v296, %v447
    %v505 = vsub.f32 %v297, %v452
    %v506 = vsub.f32 %v298, %v457
    %v507 = vsub.f32 %v299, %v462
    %v508 = vsub.f32 %v300, %v467
    %v509 = vsub.f32 %v301, %v472
    %v510 = vsub.f32 %v302, %v477
    %v511 = vsub.f32 %v303, %v482
    %v512 = vsub.f32 %v304, %v487
    %v513 = vsub.f32 %v305, %v492
    %v514 = vsub.f32 %v306, %v497
    %v515 = vmul.f32 %v499, 1.442695
    %v516 = vpow.pop %v515
    %v517 = vmul.f32 %v500, 1.442695
    %v518 = vpow.pop %v517
    %v519 = vmul.f32 %v501, 1.442695
    %v520 = vpow.pop %v519
    %v521 = vmul.f32 %v502, 1.442695
    %v522 = vpow.pop %v521
    %v523 = vmul.f32 %v503, 1.442695
    %v524 = vpow.pop %v523
    %v525 = vmul.f32 %v504, 1.442695
    %v526 = vpow.pop %v525
    %v527 = vmul.f32 %v505, 1.442695
    %v528 = vpow.pop %v527
    %v529 = vmul.f32 %v506, 1.442695
    %v530 = vpow.pop %v529
    %v531 = vmul.f32 %v507, 1.442695
    %v532 = vpow.pop %v531
    %v533 = vmul.f32 %v508, 1.442695
    %v534 = vpow.pop %v533
    %v535 = vmul.f32 %v509, 1.442695
    %v536 = vpow.pop %v535
    %v537 = vmul.f32 %v510, 1.442695
    %v538 = vpow.pop %v537
    %v539 = vmul.f32 %v511, 1.442695
    %v540 = vpow.pop %v539
    %v541 = vmul.f32 %v512, 1.442695
    %v542 = vpow.pop %v541
    %v543 = vmul.f32 %v513, 1.442695
    %v544 = vpow.pop %v543
    %v545 = vmul.f32 %v514, 1.442695
    %v546 = vpow.pop %v545
    %v547 = vld [vmem:[#allocation3] sm:$0xff]
    %v548 = vld [vmem:[#allocation3 + $0x8] sm:$0xff]
    %v549 = vld [vmem:[#allocation3 + $0x10] sm:$0xff]
    %v550 = vld [vmem:[#allocation3 + $0x18] sm:$0xff]
    %v551 = vld [vmem:[#allocation3 + $0x20] sm:$0xff]
    %v552 = vld [vmem:[#allocation3 + $0x28] sm:$0xff]
    %v553 = vld [vmem:[#allocation3 + $0x30] sm:$0xff]
    %v554 = vld [vmem:[#allocation3 + $0x38] sm:$0xff]
    %v555 = vld [vmem:[#allocation3 + $0x40] sm:$0xff]
    %v556 = vld [vmem:[#allocation3 + $0x48] sm:$0xff]
    %v557 = vld [vmem:[#allocation3 + $0x50] sm:$0xff]
    %v558 = vld [vmem:[#allocation3 + $0x58] sm:$0xff]
    %v559 = vld [vmem:[#allocation3 + $0x60] sm:$0xff]
    %v560 = vld [vmem:[#allocation3 + $0x68] sm:$0xff]
    %v561 = vld [vmem:[#allocation3 + $0x70] sm:$0xff]
    %v562 = vld [vmem:[#allocation3 + $0x78] sm:$0xff]
    %v563 = vmul.f32 %v388, %v547
    %v564 = vmul.f32 %v390, %v548
    %v565 = vmul.f32 %v392, %v549
    %v566 = vmul.f32 %v394, %v550
    %v567 = vmul.f32 %v396, %v551
    %v568 = vmul.f32 %v398, %v552
    %v569 = vmul.f32 %v400, %v553
    %v570 = vmul.f32 %v402, %v554
    %v571 = vmul.f32 %v404, %v555
    %v572 = vmul.f32 %v406, %v556
    %v573 = vmul.f32 %v408, %v557
    %v574 = vmul.f32 %v410, %v558
    %v575 = vmul.f32 %v412, %v559
    %v576 = vmul.f32 %v414, %v560
    %v577 = vmul.f32 %v416, %v561
    %v578 = vmul.f32 %v418, %v562
    %579 = vadd.xlane.f32.xlu0 %v516
    %v580 = vpop.xlane.xlu0 %579
    %581 = vadd.xlane.f32.xlu0 %v518
    %v582 = vpop.xlane.xlu0 %581
    %583 = vadd.xlane.f32.xlu0 %v520
    %v584 = vpop.xlane.xlu0 %583
    %585 = vadd.xlane.f32.xlu0 %v522
    %v586 = vpop.xlane.xlu0 %585
    %587 = vadd.xlane.f32.xlu0 %v524
    %v588 = vpop.xlane.xlu0 %587
    %589 = vadd.xlane.f32.xlu0 %v526
    %v590 = vpop.xlane.xlu0 %589
    %591 = vadd.xlane.f32.xlu0 %v528
    %v592 = vpop.xlane.xlu0 %591
    %593 = vadd.xlane.f32.xlu0 %v530
    %v594 = vpop.xlane.xlu0 %593
    %595 = vadd.xlane.f32.xlu0 %v532
    %v596 = vpop.xlane.xlu0 %595
    %597 = vadd.xlane.f32.xlu0 %v534
    %v598 = vpop.xlane.xlu0 %597
    %599 = vadd.xlane.f32.xlu0 %v536
    %v600 = vpop.xlane.xlu0 %599
    %601 = vadd.xlane.f32.xlu0 %v538
    %v602 = vpop.xlane.xlu0 %601
    %603 = vadd.xlane.f32.xlu0 %v540
    %v604 = vpop.xlane.xlu0 %603
    %605 = vadd.xlane.f32.xlu0 %v542
    %v606 = vpop.xlane.xlu0 %605
    %607 = vadd.xlane.f32.xlu0 %v544
    %v608 = vpop.xlane.xlu0 %607
    %609 = vadd.xlane.f32.xlu0 %v546
    %v610 = vpop.xlane.xlu0 %609
    %v611 = vadd.f32 %v563, %v580
    %v612 = vadd.f32 %v564, %v582
    %v613 = vadd.f32 %v565, %v584
    %v614 = vadd.f32 %v566, %v586
    %v615 = vadd.f32 %v567, %v588
    %v616 = vadd.f32 %v568, %v590
    %v617 = vadd.f32 %v569, %v592
    %v618 = vadd.f32 %v570, %v594
    %v619 = vadd.f32 %v571, %v596
    %v620 = vadd.f32 %v572, %v598
    %v621 = vadd.f32 %v573, %v600
    %v622 = vadd.f32 %v574, %v602
    %v623 = vadd.f32 %v575, %v604
    %v624 = vadd.f32 %v576, %v606
    %v625 = vadd.f32 %v577, %v608
    %v626 = vadd.f32 %v578, %v610
    %vm627 = vcmask 7168
    %628 = vst.msk [vmem:[#allocation3] sm:$0xff] %vm627, %v611
    %629 = vst.msk [vmem:[#allocation3 + $0x8] sm:$0xff] %vm627, %v612
    %630 = vst.msk [vmem:[#allocation3 + $0x10] sm:$0xff] %vm627, %v613
    %631 = vst.msk [vmem:[#allocation3 + $0x18] sm:$0xff] %vm627, %v614
    %632 = vst.msk [vmem:[#allocation3 + $0x20] sm:$0xff] %vm627, %v615
    %633 = vst.msk [vmem:[#allocation3 + $0x28] sm:$0xff] %vm627, %v616
    %634 = vst.msk [vmem:[#allocation3 + $0x30] sm:$0xff] %vm627, %v617
    %635 = vst.msk [vmem:[#allocation3 + $0x38] sm:$0xff] %vm627, %v618
    %636 = vst.msk [vmem:[#allocation3 + $0x40] sm:$0xff] %vm627, %v619
    %637 = vst.msk [vmem:[#allocation3 + $0x48] sm:$0xff] %vm627, %v620
    %638 = vst.msk [vmem:[#allocation3 + $0x50] sm:$0xff] %vm627, %v621
    %639 = vst.msk [vmem:[#allocation3 + $0x58] sm:$0xff] %vm627, %v622
    %640 = vst.msk [vmem:[#allocation3 + $0x60] sm:$0xff] %vm627, %v623
    %641 = vst.msk [vmem:[#allocation3 + $0x68] sm:$0xff] %vm627, %v624
    %642 = vst.msk [vmem:[#allocation3 + $0x70] sm:$0xff] %vm627, %v625
    %643 = vst.msk [vmem:[#allocation3 + $0x78] sm:$0xff] %vm627, %v626
    %v644 = vld [vmem:[#allocation4] sm:$0xff]
    %v645 = vld [vmem:[#allocation4 + $0x8] sm:$0xff]
    %v646 = vld [vmem:[#allocation4 + $0x10] sm:$0xff]
    %v647 = vld [vmem:[#allocation4 + $0x18] sm:$0xff]
    %v648 = vld [vmem:[#allocation4 + $0x20] sm:$0xff]
    %v649 = vld [vmem:[#allocation4 + $0x28] sm:$0xff]
    %v650 = vld [vmem:[#allocation4 + $0x30] sm:$0xff]
    %v651 = vld [vmem:[#allocation4 + $0x38] sm:$0xff]
    %v652 = vld [vmem:[#allocation4 + $0x40] sm:$0xff]
    %v653 = vld [vmem:[#allocation4 + $0x48] sm:$0xff]
    %v654 = vld [vmem:[#allocation4 + $0x50] sm:$0xff]
    %v655 = vld [vmem:[#allocation4 + $0x58] sm:$0xff]
    %v656 = vld [vmem:[#allocation4 + $0x60] sm:$0xff]
    %v657 = vld [vmem:[#allocation4 + $0x68] sm:$0xff]
    %v658 = vld [vmem:[#allocation4 + $0x70] sm:$0xff]
    %v659 = vld [vmem:[#allocation4 + $0x78] sm:$0xff]
    %661 = vset.pattern.permute.xlu0 0
    %662 = vperm.xlu0 %661, %v388
    %v663 = vpop.permute.xlu0 %662
    %666 = vset.pattern.permute.xlu0 0
    %667 = vperm.xlu0 %666, %v390
    %v668 = vpop.permute.xlu0 %667
    %671 = vset.pattern.permute.xlu0 0
    %672 = vperm.xlu0 %671, %v392
    %v673 = vpop.permute.xlu0 %672
    %676 = vset.pattern.permute.xlu0 0
    %677 = vperm.xlu0 %676, %v394
    %v678 = vpop.permute.xlu0 %677
    %681 = vset.pattern.permute.xlu0 0
    %682 = vperm.xlu0 %681, %v396
    %v683 = vpop.permute.xlu0 %682
    %686 = vset.pattern.permute.xlu0 0
    %687 = vperm.xlu0 %686, %v398
    %v688 = vpop.permute.xlu0 %687
    %691 = vset.pattern.permute.xlu0 0
    %692 = vperm.xlu0 %691, %v400
    %v693 = vpop.permute.xlu0 %692
    %696 = vset.pattern.permute.xlu0 0
    %697 = vperm.xlu0 %696, %v402
    %v698 = vpop.permute.xlu0 %697
    %701 = vset.pattern.permute.xlu0 0
    %702 = vperm.xlu0 %701, %v404
    %v703 = vpop.permute.xlu0 %702
    %706 = vset.pattern.permute.xlu0 0
    %707 = vperm.xlu0 %706, %v406
    %v708 = vpop.permute.xlu0 %707
    %711 = vset.pattern.permute.xlu0 0
    %712 = vperm.xlu0 %711, %v408
    %v713 = vpop.permute.xlu0 %712
    %716 = vset.pattern.permute.xlu0 0
    %717 = vperm.xlu0 %716, %v410
    %v718 = vpop.permute.xlu0 %717
    %721 = vset.pattern.permute.xlu0 0
    %722 = vperm.xlu0 %721, %v412
    %v723 = vpop.permute.xlu0 %722
    %726 = vset.pattern.permute.xlu0 0
    %727 = vperm.xlu0 %726, %v414
    %v728 = vpop.permute.xlu0 %727
    %731 = vset.pattern.permute.xlu0 0
    %732 = vperm.xlu0 %731, %v416
    %v733 = vpop.permute.xlu0 %732
    %736 = vset.pattern.permute.xlu0 0
    %737 = vperm.xlu0 %736, %v418
    %v738 = vpop.permute.xlu0 %737
    %v740 = vmul.f32 %v663, %v644
    %v741 = vmul.f32 %v668, %v645
    %v742 = vmul.f32 %v673, %v646
    %v743 = vmul.f32 %v678, %v647
    %v744 = vmul.f32 %v683, %v648
    %v745 = vmul.f32 %v688, %v649
    %v746 = vmul.f32 %v693, %v650
    %v747 = vmul.f32 %v698, %v651
    %v748 = vmul.f32 %v703, %v652
    %v749 = vmul.f32 %v708, %v653
    %v750 = vmul.f32 %v713, %v654
    %v751 = vmul.f32 %v718, %v655
    %v752 = vmul.f32 %v723, %v656
    %v753 = vmul.f32 %v728, %v657
    %v754 = vmul.f32 %v733, %v658
    %v755 = vmul.f32 %v738, %v659
    %v756 = vpack.c.bf16 %v518, %v516
    %v757 = vpack.c.bf16 %v522, %v520
    %v758 = vpack.c.bf16 %v526, %v524
    %v759 = vpack.c.bf16 %v530, %v528
    %v760 = vpack.c.bf16 %v534, %v532
    %v761 = vpack.c.bf16 %v538, %v536
    %v762 = vpack.c.bf16 %v542, %v540
    %v763 = vpack.c.bf16 %v546, %v544
    %v764 = vld [vmem:[%s2] sm:$0xff]
    %v765 = vld [vmem:[%s2 + $0x8] sm:$0xff]
    %v766 = vld [vmem:[%s2 + $0x10] sm:$0xff]
    %v767 = vld [vmem:[%s2 + $0x18] sm:$0xff]
    %v768 = vld [vmem:[%s2 + $0x20] sm:$0xff]
    %v769 = vld [vmem:[%s2 + $0x28] sm:$0xff]
    %v770 = vld [vmem:[%s2 + $0x30] sm:$0xff]
    %v771 = vld [vmem:[%s2 + $0x38] sm:$0xff]
    %v772 = vld [vmem:[%s2 + $0x40] sm:$0xff]
    %v773 = vld [vmem:[%s2 + $0x48] sm:$0xff]
    %v774 = vld [vmem:[%s2 + $0x50] sm:$0xff]
    %v775 = vld [vmem:[%s2 + $0x58] sm:$0xff]
    %v776 = vld [vmem:[%s2 + $0x60] sm:$0xff]
    %v777 = vld [vmem:[%s2 + $0x68] sm:$0xff]
    %v778 = vld [vmem:[%s2 + $0x70] sm:$0xff]
    %v779 = vld [vmem:[%s2 + $0x78] sm:$0xff]
    %v780 = vpack.c.bf16 %v765, %v764
    %v781 = vpack.c.bf16 %v767, %v766
    %v782 = vpack.c.bf16 %v769, %v768
    %v783 = vpack.c.bf16 %v771, %v770
    %v784 = vpack.c.bf16 %v773, %v772
    %v785 = vpack.c.bf16 %v775, %v774
    %v786 = vpack.c.bf16 %v777, %v776
    %v787 = vpack.c.bf16 %v779, %v778
    %788 = vmatprep.subr.bf16.mxu0 0
    %789 = vmatpush1.bf16.msra.mxu0 %v780
    %790 = vmatprep.subr.bf16.mxu0 0
    %791 = vmatpush1.bf16.msra.mxu0 %v781
    %792 = vmatprep.subr.bf16.mxu0 0
    %793 = vmatpush1.bf16.msra.mxu0 %v782
    %794 = vmatprep.subr.bf16.mxu0 0
    %795 = vmatpush1.bf16.msra.mxu0 %v783
    %796 = vmatprep.subr.bf16.mxu0 0
    %797 = vmatpush1.bf16.msra.mxu0 %v784
    %798 = vmatprep.subr.bf16.mxu0 0
    %799 = vmatpush1.bf16.msra.mxu0 %v785
    %800 = vmatprep.subr.bf16.mxu0 0
    %801 = vmatpush1.bf16.msra.mxu0 %v786
    %802 = vmatprep.subr.bf16.mxu0 0
    %803 = vmatpush1.bf16.msra.mxu0 %v787
    %804 = vmatprep.subr.bf16.mxu0 0
    %805 = vmatpush1.bf16.msra.mxu0 0
    %806 = vmatprep.subr.bf16.mxu0 0
    %807 = vmatpush1.bf16.msra.mxu0 0
    %808 = vmatprep.subr.bf16.mxu0 0
    %809 = vmatpush1.bf16.msra.mxu0 0
    %810 = vmatprep.subr.bf16.mxu0 0
    %811 = vmatpush1.bf16.msra.mxu0 0
    %812 = vmatprep.subr.bf16.mxu0 0
    %813 = vmatpush1.bf16.msra.mxu0 0
    %814 = vmatprep.subr.bf16.mxu0 0
    %815 = vmatpush1.bf16.msra.mxu0 0
    %816 = vmatprep.subr.bf16.mxu0 0
    %817 = vmatpush1.bf16.msra.mxu0 0
    %818 = vmatprep.subr.bf16.mxu0 0
    %819 = vmatpush1.bf16.msra.mxu0 0
    %820 = vmatprep.mubr.bf16.mxu0 0
    %821 = vmatmul.mubr.bf16.gmra.mrb[0].mxu0 %v756
    %v822 = vpop.f32.mrb[0].mxu0
    %v823 = vadd.f32 0.0, %v822
    %v824 = vpop.f32.mrb[0].mxu0
    %v825 = vpop.f32.mrb[0].mxu0
    %v826 = vadd.f32 0.0, %v825
    %v827 = vpop.f32.mrb[0].mxu0
    %828 = vmatprep.mubr.bf16.mxu0 0
    %829 = vmatmul.mubr.bf16.gmra.mrb[0].mxu0 %v757
    %v830 = vpop.f32.mrb[0].mxu0
    %v831 = vadd.f32 0.0, %v830
    %v832 = vpop.f32.mrb[0].mxu0
    %v833 = vpop.f32.mrb[0].mxu0
    %v834 = vadd.f32 0.0, %v833
    %v835 = vpop.f32.mrb[0].mxu0
    %836 = vmatprep.mubr.bf16.mxu0 0
    %837 = vmatmul.mubr.bf16.gmra.mrb[0].mxu0 %v758
    %v838 = vpop.f32.mrb[0].mxu0
    %v839 = vadd.f32 0.0, %v838
    %v840 = vpop.f32.mrb[0].mxu0
    %v841 = vpop.f32.mrb[0].mxu0
    %v842 = vadd.f32 0.0, %v841
    %v843 = vpop.f32.mrb[0].mxu0
    %844 = vmatprep.mubr.bf16.mxu0 0
    %845 = vmatmul.mubr.bf16.gmra.mrb[0].mxu0 %v759
    %v846 = vpop.f32.mrb[0].mxu0
    %v847 = vadd.f32 0.0, %v846
    %v848 = vpop.f32.mrb[0].mxu0
    %v849 = vpop.f32.mrb[0].mxu0
    %v850 = vadd.f32 0.0, %v849
    %v851 = vpop.f32.mrb[0].mxu0
    %852 = vmatprep.mubr.bf16.mxu0 0
    %853 = vmatmul.mubr.bf16.gmra.mrb[0].mxu0 %v760
    %v854 = vpop.f32.mrb[0].mxu0
    %v855 = vadd.f32 0.0, %v854
    %v856 = vpop.f32.mrb[0].mxu0
    %v857 = vpop.f32.mrb[0].mxu0
    %v858 = vadd.f32 0.0, %v857
    %v859 = vpop.f32.mrb[0].mxu0
    %860 = vmatprep.mubr.bf16.mxu0 0
    %861 = vmatmul.mubr.bf16.gmra.mrb[0].mxu0 %v761
    %v862 = vpop.f32.mrb[0].mxu0
    %v863 = vadd.f32 0.0, %v862
    %v864 = vpop.f32.mrb[0].mxu0
    %v865 = vpop.f32.mrb[0].mxu0
    %v866 = vadd.f32 0.0, %v865
    %v867 = vpop.f32.mrb[0].mxu0
    %868 = vmatprep.mubr.bf16.mxu0 0
    %869 = vmatmul.mubr.bf16.gmra.mrb[0].mxu0 %v762
    %v870 = vpop.f32.mrb[0].mxu0
    %v871 = vadd.f32 0.0, %v870
    %v872 = vpop.f32.mrb[0].mxu0
    %v873 = vpop.f32.mrb[0].mxu0
    %v874 = vadd.f32 0.0, %v873
    %v875 = vpop.f32.mrb[0].mxu0
    %876 = vmatprep.mubr.bf16.mxu0 0
    %877 = vmatmul.mubr.bf16.gmra.mrb[0].mxu0 %v763
    %v878 = vpop.f32.mrb[0].mxu0
    %v879 = vadd.f32 0.0, %v878
    %v880 = vpop.f32.mrb[0].mxu0
    %v881 = vpop.f32.mrb[0].mxu0
    %v882 = vadd.f32 0.0, %v881
    %v883 = vpop.f32.mrb[0].mxu0
    %884 = vdwg.mxu0
    %v885 = vadd.f32 %v740, %v823
    %v886 = vadd.f32 %v741, %v826
    %v887 = vadd.f32 %v742, %v831
    %v888 = vadd.f32 %v743, %v834
    %v889 = vadd.f32 %v744, %v839
    %v890 = vadd.f32 %v745, %v842
    %v891 = vadd.f32 %v746, %v847
    %v892 = vadd.f32 %v747, %v850
    %v893 = vadd.f32 %v748, %v855
    %v894 = vadd.f32 %v749, %v858
    %v895 = vadd.f32 %v750, %v863
    %v896 = vadd.f32 %v751, %v866
    %v897 = vadd.f32 %v752, %v871
    %v898 = vadd.f32 %v753, %v874
    %v899 = vadd.f32 %v754, %v879
    %v900 = vadd.f32 %v755, %v882
    %901 = vst [vmem:[#allocation4] sm:$0xff] %v885
    %902 = vst [vmem:[#allocation4 + $0x8] sm:$0xff] %v886
    %903 = vst [vmem:[#allocation4 + $0x10] sm:$0xff] %v887
    %904 = vst [vmem:[#allocation4 + $0x18] sm:$0xff] %v888
    %905 = vst [vmem:[#allocation4 + $0x20] sm:$0xff] %v889
    %906 = vst [vmem:[#allocation4 + $0x28] sm:$0xff] %v890
    %907 = vst [vmem:[#allocation4 + $0x30] sm:$0xff] %v891
    %908 = vst [vmem:[#allocation4 + $0x38] sm:$0xff] %v892
    %909 = vst [vmem:[#allocation4 + $0x40] sm:$0xff] %v893
    %910 = vst [vmem:[#allocation4 + $0x48] sm:$0xff] %v894
    %911 = vst [vmem:[#allocation4 + $0x50] sm:$0xff] %v895
    %912 = vst [vmem:[#allocation4 + $0x58] sm:$0xff] %v896
    %913 = vst [vmem:[#allocation4 + $0x60] sm:$0xff] %v897
    %914 = vst [vmem:[#allocation4 + $0x68] sm:$0xff] %v898
    %915 = vst [vmem:[#allocation4 + $0x70] sm:$0xff] %v899
    %916 = vst [vmem:[#allocation4 + $0x78] sm:$0xff] %v900
    %917 = vst.msk [vmem:[#allocation2] sm:$0xff] %vm627, %v355
    %918 = vst.msk [vmem:[#allocation2 + $0x8] sm:$0xff] %vm627, %v356
    %919 = vst.msk [vmem:[#allocation2 + $0x10] sm:$0xff] %vm627, %v357
    %920 = vst.msk [vmem:[#allocation2 + $0x18] sm:$0xff] %vm627, %v358
    %921 = vst.msk [vmem:[#allocation2 + $0x20] sm:$0xff] %vm627, %v359
    %922 = vst.msk [vmem:[#allocation2 + $0x28] sm:$0xff] %vm627, %v360
    %923 = vst.msk [vmem:[#allocation2 + $0x30] sm:$0xff] %vm627, %v361
    %924 = vst.msk [vmem:[#allocation2 + $0x38] sm:$0xff] %vm627, %v362
    %925 = vst.msk [vmem:[#allocation2 + $0x40] sm:$0xff] %vm627, %v363
    %926 = vst.msk [vmem:[#allocation2 + $0x48] sm:$0xff] %vm627, %v364
    %927 = vst.msk [vmem:[#allocation2 + $0x50] sm:$0xff] %vm627, %v365
    %928 = vst.msk [vmem:[#allocation2 + $0x58] sm:$0xff] %vm627, %v366
    %929 = vst.msk [vmem:[#allocation2 + $0x60] sm:$0xff] %vm627, %v367
    %930 = vst.msk [vmem:[#allocation2 + $0x68] sm:$0xff] %vm627, %v368
    %931 = vst.msk [vmem:[#allocation2 + $0x70] sm:$0xff] %vm627, %v369
    %932 = vst.msk [vmem:[#allocation2 + $0x78] sm:$0xff] %vm627, %v370
  $region21: #{gpt_forward.62} parent=0 // pred_fallthru
    _
  // Predicated region
  $region22: #{gpt_forward.62} parent=0 // pred_check
    %p933 = pneg %p15
  $region23: #{gpt_forward.62} parent=0 // pred_check_branch
    %935 = sbr.rel (%p933) target = $region25
  $region24: #{gpt_forward.62} parent=0 // pred_region
    %v936 = vld [vmem:[#allocation4] sm:$0xff]
    %v937 = vld [vmem:[#allocation4 + $0x8] sm:$0xff]
    %v938 = vld [vmem:[#allocation4 + $0x10] sm:$0xff]
    %v939 = vld [vmem:[#allocation4 + $0x18] sm:$0xff]
    %v940 = vld [vmem:[#allocation4 + $0x20] sm:$0xff]
    %v941 = vld [vmem:[#allocation4 + $0x28] sm:$0xff]
    %v942 = vld [vmem:[#allocation4 + $0x30] sm:$0xff]
    %v943 = vld [vmem:[#allocation4 + $0x38] sm:$0xff]
    %v944 = vld [vmem:[#allocation4 + $0x40] sm:$0xff]
    %v945 = vld [vmem:[#allocation4 + $0x48] sm:$0xff]
    %v946 = vld [vmem:[#allocation4 + $0x50] sm:$0xff]
    %v947 = vld [vmem:[#allocation4 + $0x58] sm:$0xff]
    %v948 = vld [vmem:[#allocation4 + $0x60] sm:$0xff]
    %v949 = vld [vmem:[#allocation4 + $0x68] sm:$0xff]
    %v950 = vld [vmem:[#allocation4 + $0x70] sm:$0xff]
    %v951 = vld [vmem:[#allocation4 + $0x78] sm:$0xff]
    %v952 = vld [vmem:[#allocation3] sm:$0xff]
    %v953 = vld [vmem:[#allocation3 + $0x8] sm:$0xff]
    %v954 = vld [vmem:[#allocation3 + $0x10] sm:$0xff]
    %v955 = vld [vmem:[#allocation3 + $0x18] sm:$0xff]
    %v956 = vld [vmem:[#allocation3 + $0x20] sm:$0xff]
    %v957 = vld [vmem:[#allocation3 + $0x28] sm:$0xff]
    %v958 = vld [vmem:[#allocation3 + $0x30] sm:$0xff]
    %v959 = vld [vmem:[#allocation3 + $0x38] sm:$0xff]
    %v960 = vld [vmem:[#allocation3 + $0x40] sm:$0xff]
    %v961 = vld [vmem:[#allocation3 + $0x48] sm:$0xff]
    %v962 = vld [vmem:[#allocation3 + $0x50] sm:$0xff]
    %v963 = vld [vmem:[#allocation3 + $0x58] sm:$0xff]
    %v964 = vld [vmem:[#allocation3 + $0x60] sm:$0xff]
    %v965 = vld [vmem:[#allocation3 + $0x68] sm:$0xff]
    %v966 = vld [vmem:[#allocation3 + $0x70] sm:$0xff]
    %v967 = vld [vmem:[#allocation3 + $0x78] sm:$0xff]
    %v968 = vrcp.pop %v952
    %v969 = vrcp.pop %v953
    %v970 = vrcp.pop %v954
    %v971 = vrcp.pop %v955
    %v972 = vrcp.pop %v956
    %v973 = vrcp.pop %v957
    %v974 = vrcp.pop %v958
    %v975 = vrcp.pop %v959
    %v976 = vrcp.pop %v960
    %v977 = vrcp.pop %v961
    %v978 = vrcp.pop %v962
    %v979 = vrcp.pop %v963
    %v980 = vrcp.pop %v964
    %v981 = vrcp.pop %v965
    %v982 = vrcp.pop %v966
    %v983 = vrcp.pop %v967
    %985 = vset.pattern.permute.xlu0 0
    %986 = vperm.xlu0 %985, %v968
    %v987 = vpop.permute.xlu0 %986
    %990 = vset.pattern.permute.xlu0 0
    %991 = vperm.xlu0 %990, %v969
    %v992 = vpop.permute.xlu0 %991
    %995 = vset.pattern.permute.xlu0 0
    %996 = vperm.xlu0 %995, %v970
    %v997 = vpop.permute.xlu0 %996
    %1000 = vset.pattern.permute.xlu0 0
    %1001 = vperm.xlu0 %1000, %v971
    %v1002 = vpop.permute.xlu0 %1001
    %1005 = vset.pattern.permute.xlu0 0
    %1006 = vperm.xlu0 %1005, %v972
    %v1007 = vpop.permute.xlu0 %1006
    %1010 = vset.pattern.permute.xlu0 0
    %1011 = vperm.xlu0 %1010, %v973
    %v1012 = vpop.permute.xlu0 %1011
    %1015 = vset.pattern.permute.xlu0 0
    %1016 = vperm.xlu0 %1015, %v974
    %v1017 = vpop.permute.xlu0 %1016
    %1020 = vset.pattern.permute.xlu0 0
    %1021 = vperm.xlu0 %1020, %v975
    %v1022 = vpop.permute.xlu0 %1021
    %1025 = vset.pattern.permute.xlu0 0
    %1026 = vperm.xlu0 %1025, %v976
    %v1027 = vpop.permute.xlu0 %1026
    %1030 = vset.pattern.permute.xlu0 0
    %1031 = vperm.xlu0 %1030, %v977
    %v1032 = vpop.permute.xlu0 %1031
    %1035 = vset.pattern.permute.xlu0 0
    %1036 = vperm.xlu0 %1035, %v978
    %v1037 = vpop.permute.xlu0 %1036
    %1040 = vset.pattern.permute.xlu0 0
    %1041 = vperm.xlu0 %1040, %v979
    %v1042 = vpop.permute.xlu0 %1041
    %1045 = vset.pattern.permute.xlu0 0
    %1046 = vperm.xlu0 %1045, %v980
    %v1047 = vpop.permute.xlu0 %1046
    %1050 = vset.pattern.permute.xlu0 0
    %1051 = vperm.xlu0 %1050, %v981
    %v1052 = vpop.permute.xlu0 %1051
    %1055 = vset.pattern.permute.xlu0 0
    %1056 = vperm.xlu0 %1055, %v982
    %v1057 = vpop.permute.xlu0 %1056
    %1060 = vset.pattern.permute.xlu0 0
    %1061 = vperm.xlu0 %1060, %v983
    %v1062 = vpop.permute.xlu0 %1061
    %v1064 = vmul.f32 %v936, %v987
    %v1065 = vmul.f32 %v937, %v992
    %v1066 = vmul.f32 %v938, %v997
    %v1067 = vmul.f32 %v939, %v1002
    %v1068 = vmul.f32 %v940, %v1007
    %v1069 = vmul.f32 %v941, %v1012
    %v1070 = vmul.f32 %v942, %v1017
    %v1071 = vmul.f32 %v943, %v1022
    %v1072 = vmul.f32 %v944, %v1027
    %v1073 = vmul.f32 %v945, %v1032
    %v1074 = vmul.f32 %v946, %v1037
    %v1075 = vmul.f32 %v947, %v1042
    %v1076 = vmul.f32 %v948, %v1047
    %v1077 = vmul.f32 %v949, %v1052
    %v1078 = vmul.f32 %v950, %v1057
    %v1079 = vmul.f32 %v951, %v1062
    %1080 = vst [vmem:[%s3] sm:$0xff] %v1064
    %1081 = vst [vmem:[%s3 + $0x8] sm:$0xff] %v1065
    %1082 = vst [vmem:[%s3 + $0x10] sm:$0xff] %v1066
    %1083 = vst [vmem:[%s3 + $0x18] sm:$0xff] %v1067
    %1084 = vst [vmem:[%s3 + $0x20] sm:$0xff] %v1068
    %1085 = vst [vmem:[%s3 + $0x28] sm:$0xff] %v1069
    %1086 = vst [vmem:[%s3 + $0x30] sm:$0xff] %v1070
    %1087 = vst [vmem:[%s3 + $0x38] sm:$0xff] %v1071
    %1088 = vst [vmem:[%s3 + $0x40] sm:$0xff] %v1072
    %1089 = vst [vmem:[%s3 + $0x48] sm:$0xff] %v1073
    %1090 = vst [vmem:[%s3 + $0x50] sm:$0xff] %v1074
    %1091 = vst [vmem:[%s3 + $0x58] sm:$0xff] %v1075
    %1092 = vst [vmem:[%s3 + $0x60] sm:$0xff] %v1076
    %1093 = vst [vmem:[%s3 + $0x68] sm:$0xff] %v1077
    %1094 = vst [vmem:[%s3 + $0x70] sm:$0xff] %v1078
    %1095 = vst [vmem:[%s3 + $0x78] sm:$0xff] %v1079
  $region25: #{gpt_forward.62} parent=0 // pred_fallthru
    _
  // Predicated region
  $region26: #{gpt_forward.62} parent=0 // pred_check
    _
  $region27: #{gpt_forward.62} parent=0 // pred_check_branch
    %1097 = sbr.rel (0) target = $region29
  $region28: #{gpt_forward.62} parent=0 // pred_region
    _
  $region29: #{gpt_forward.62} parent=0 // pred_fallthru
    _
  // Predicated region
  $region30: #{gpt_forward.62} parent=0 // pred_check
    _
  $region31: #{gpt_forward.62} parent=0 // pred_check_branch
    %1099 = sbr.rel (0) target = $region33
  $region32: #{gpt_forward.62} parent=0 // pred_region
    _
  $region33: #{gpt_forward.62} parent=0 // pred_fallthru
    _

// kernel: gpt_forward.66
$region0: #{gpt_forward.66}
  #allocation0 [shape = 'u32[]', space=smem, size = 0x4, offset = 0x4, fixed_abs, tag = 'smem constant byte address 0x4 - core index']
  #allocation1 [shape = 'u32[144,128]{1,0:T(1,128)}', space=vmem, size = 0x12000, scoped, tag = 'internal scratch']
  #allocation2 [shape = 'f32[128,128]{1,0:T(8,128)}', space=vmem, size = 0x10000, scoped, tag = 'scratch operand']
  %s0 = inlined_call_operand.vmem [shape: f32[128,512], index: 0, kind: input, shape index: {}]
  %s1 = inlined_call_operand.vmem [shape: f32[128,512], index: 1, kind: input, shape index: {}]
  %s2 = inlined_call_operand.vmem [shape: f32[128,128], index: 2, kind: output, shape index: {}]
  %s3 = sld [smem:[#allocation0]]
  $region26: #{gpt_forward.66} parent=0
    _
  %s5 = ssub.s32 1, %s3
  %s6 = scalar_select 0, %s5, %s3
  // Predicated region
  $region2: #{gpt_forward.66} parent=0 // pred_check
    _
  $region3: #{gpt_forward.66} parent=0 // pred_check_branch
    %8 = sbr.rel (0) target = $region5
  $region4: #{gpt_forward.66} parent=0 // pred_region
    _
  $region5: #{gpt_forward.66} parent=0 // pred_fallthru
    _
  // Predicated region
  $region6: #{gpt_forward.66} parent=0 // pred_check
    _
  $region7: #{gpt_forward.66} parent=0 // pred_check_branch
    %10 = sbr.rel (0) target = $region9
  $region8: #{gpt_forward.66} parent=0 // pred_region
    _
  $region9: #{gpt_forward.66} parent=0 // pred_fallthru
    _
  %p12 = scmp.eq.s32.totalorder 0, 0
  // Predicated region
  $region10: #{gpt_forward.66} parent=0 // pred_check
    %p13 = pneg %p12
  $region11: #{gpt_forward.66} parent=0 // pred_check_branch
    %15 = sbr.rel (%p13) target = $region13
  $region12: #{gpt_forward.66} parent=0 // pred_region
    %16 = vst [vmem:[#allocation2] sm:$0xff] 0.0
    %17 = vst [vmem:[#allocation2 + $0x8] sm:$0xff] 0.0
    %18 = vst [vmem:[#allocation2 + $0x10] sm:$0xff] 0.0
    %19 = vst [vmem:[#allocation2 + $0x18] sm:$0xff] 0.0
    %20 = vst [vmem:[#allocation2 + $0x20] sm:$0xff] 0.0
    %21 = vst [vmem:[#allocation2 + $0x28] sm:$0xff] 0.0
    %22 = vst [vmem:[#allocation2 + $0x30] sm:$0xff] 0.0
    %23 = vst [vmem:[#allocation2 + $0x38] sm:$0xff] 0.0
    %24 = vst [vmem:[#allocation2 + $0x40] sm:$0xff] 0.0
    %25 = vst [vmem:[#allocation2 + $0x48] sm:$0xff] 0.0
    %26 = vst [vmem:[#allocation2 + $0x50] sm:$0xff] 0.0
    %27 = vst [vmem:[#allocation2 + $0x58] sm:$0xff] 0.0
    %28 = vst [vmem:[#allocation2 + $0x60] sm:$0xff] 0.0
    %29 = vst [vmem:[#allocation2 + $0x68] sm:$0xff] 0.0
    %30 = vst [vmem:[#allocation2 + $0x70] sm:$0xff] 0.0
    %31 = vst [vmem:[#allocation2 + $0x78] sm:$0xff] 0.0
  $region13: #{gpt_forward.66} parent=0 // pred_fallthru
    _
  %v32 = vld [vmem:[#allocation2] sm:$0xff]
  %v33 = vld [vmem:[#allocation2 + $0x8] sm:$0xff]
  %v34 = vld [vmem:[#allocation2 + $0x10] sm:$0xff]
  %v35 = vld [vmem:[#allocation2 + $0x18] sm:$0xff]
  %v36 = vld [vmem:[#allocation2 + $0x20] sm:$0xff]
  %v37 = vld [vmem:[#allocation2 + $0x28] sm:$0xff]
  %v38 = vld [vmem:[#allocation2 + $0x30] sm:$0xff]
  %v39 = vld [vmem:[#allocation2 + $0x38] sm:$0xff]
  %v40 = vld [vmem:[#allocation2 + $0x40] sm:$0xff]
  %v41 = vld [vmem:[#allocation2 + $0x48] sm:$0xff]
  %v42 = vld [vmem:[#allocation2 + $0x50] sm:$0xff]
  %v43 = vld [vmem:[#allocation2 + $0x58] sm:$0xff]
  %v44 = vld [vmem:[#allocation2 + $0x60] sm:$0xff]
  %v45 = vld [vmem:[#allocation2 + $0x68] sm:$0xff]
  %v46 = vld [vmem:[#allocation2 + $0x70] sm:$0xff]
  %v47 = vld [vmem:[#allocation2 + $0x78] sm:$0xff]
  %v48 = vld [vmem:[%s0] sm:$0xff]
  %v49 = vld [vmem:[%s0 + $0x8] sm:$0xff]
  %v50 = vld [vmem:[%s0 + $0x10] sm:$0xff]
  %v51 = vld [vmem:[%s0 + $0x18] sm:$0xff]
  %v52 = vld [vmem:[%s0 + $0x20] sm:$0xff]
  %v53 = vld [vmem:[%s0 + $0x28] sm:$0xff]
  %v54 = vld [vmem:[%s0 + $0x30] sm:$0xff]
  %v55 = vld [vmem:[%s0 + $0x38] sm:$0xff]
  %v56 = vld [vmem:[%s0 + $0x40] sm:$0xff]
  %v57 = vld [vmem:[%s0 + $0x48] sm:$0xff]
  %v58 = vld [vmem:[%s0 + $0x50] sm:$0xff]
  %v59 = vld [vmem:[%s0 + $0x58] sm:$0xff]
  %v60 = vld [vmem:[%s0 + $0x60] sm:$0xff]
  %v61 = vld [vmem:[%s0 + $0x68] sm:$0xff]
  %v62 = vld [vmem:[%s0 + $0x70] sm:$0xff]
  %v63 = vld [vmem:[%s0 + $0x78] sm:$0xff]
  %v64 = vld [vmem:[%s0 + $0x80] sm:$0xff]
  %v65 = vld [vmem:[%s0 + $0x88] sm:$0xff]
  %v66 = vld [vmem:[%s0 + $0x90] sm:$0xff]
  %v67 = vld [vmem:[%s0 + $0x98] sm:$0xff]
  %v68 = vld [vmem:[%s0 + $0xa0] sm:$0xff]
  %v69 = vld [vmem:[%s0 + $0xa8] sm:$0xff]
  %v70 = vld [vmem:[%s0 + $0xb0] sm:$0xff]
  %v71 = vld [vmem:[%s0 + $0xb8] sm:$0xff]
  %v72 = vld [vmem:[%s0 + $0xc0] sm:$0xff]
  %v73 = vld [vmem:[%s0 + $0xc8] sm:$0xff]
  %v74 = vld [vmem:[%s0 + $0xd0] sm:$0xff]
  %v75 = vld [vmem:[%s0 + $0xd8] sm:$0xff]
  %v76 = vld [vmem:[%s0 + $0xe0] sm:$0xff]
  %v77 = vld [vmem:[%s0 + $0xe8] sm:$0xff]
  %v78 = vld [vmem:[%s0 + $0xf0] sm:$0xff]
  %v79 = vld [vmem:[%s0 + $0xf8] sm:$0xff]
  %v80 = vld [vmem:[%s0 + $0x100] sm:$0xff]
  %v81 = vld [vmem:[%s0 + $0x108] sm:$0xff]
  %v82 = vld [vmem:[%s0 + $0x110] sm:$0xff]
  %v83 = vld [vmem:[%s0 + $0x118] sm:$0xff]
  %v84 = vld [vmem:[%s0 + $0x120] sm:$0xff]
  %v85 = vld [vmem:[%s0 + $0x128] sm:$0xff]
  %v86 = vld [vmem:[%s0 + $0x130] sm:$0xff]
  %v87 = vld [vmem:[%s0 + $0x138] sm:$0xff]
  %v88 = vld [vmem:[%s0 + $0x140] sm:$0xff]
  %v89 = vld [vmem:[%s0 + $0x148] sm:$0xff]
  %v90 = vld [vmem:[%s0 + $0x150] sm:$0xff]
  %v91 = vld [vmem:[%s0 + $0x158] sm:$0xff]
  %v92 = vld [vmem:[%s0 + $0x160] sm:$0xff]
  %v93 = vld [vmem:[%s0 + $0x168] sm:$0xff]
  %v94 = vld [vmem:[%s0 + $0x170] sm:$0xff]
  %v95 = vld [vmem:[%s0 + $0x178] sm:$0xff]
  %v96 = vld [vmem:[%s0 + $0x180] sm:$0xff]
  %v97 = vld [vmem:[%s0 + $0x188] sm:$0xff]
  %v98 = vld [vmem:[%s0 + $0x190] sm:$0xff]
  %v99 = vld [vmem:[%s0 + $0x198] sm:$0xff]
  %v100 = vld [vmem:[%s0 + $0x1a0] sm:$0xff]
  %v101 = vld [vmem:[%s0 + $0x1a8] sm:$0xff]
  %v102 = vld [vmem:[%s0 + $0x1b0] sm:$0xff]
  %v103 = vld [vmem:[%s0 + $0x1b8] sm:$0xff]
  %v104 = vld [vmem:[%s0 + $0x1c0] sm:$0xff]
  %v105 = vld [vmem:[%s0 + $0x1c8] sm:$0xff]
  %v106 = vld [vmem:[%s0 + $0x1d0] sm:$0xff]
  %v107 = vld [vmem:[%s0 + $0x1d8] sm:$0xff]
  %v108 = vld [vmem:[%s0 + $0x1e0] sm:$0xff]
  %v109 = vld [vmem:[%s0 + $0x1e8] sm:$0xff]
  %v110 = vld [vmem:[%s0 + $0x1f0] sm:$0xff]
  %v111 = vld [vmem:[%s0 + $0x1f8] sm:$0xff]
  %v112 = vpack.c.bf16 %v52, %v48
  %v113 = vpack.c.bf16 %v53, %v49
  %v114 = vpack.c.bf16 %v54, %v50
  %v115 = vpack.c.bf16 %v55, %v51
  %v116 = vpack.c.bf16 %v60, %v56
  %v117 = vpack.c.bf16 %v61, %v57
  %v118 = vpack.c.bf16 %v62, %v58
  %v119 = vpack.c.bf16 %v63, %v59
  %v120 = vpack.c.bf16 %v68, %v64
  %v121 = vpack.c.bf16 %v69, %v65
  %v122 = vpack.c.bf16 %v70, %v66
  %v123 = vpack.c.bf16 %v71, %v67
  %v124 = vpack.c.bf16 %v76, %v72
  %v125 = vpack.c.bf16 %v77, %v73
  %v126 = vpack.c.bf16 %v78, %v74
  %v127 = vpack.c.bf16 %v79, %v75
  %v128 = vpack.c.bf16 %v84, %v80
  %v129 = vpack.c.bf16 %v85, %v81
  %v130 = vpack.c.bf16 %v86, %v82
  %v131 = vpack.c.bf16 %v87, %v83
  %v132 = vpack.c.bf16 %v92, %v88
  %v133 = vpack.c.bf16 %v93, %v89
  %v134 = vpack.c.bf16 %v94, %v90
  %v135 = vpack.c.bf16 %v95, %v91
  %v136 = vpack.c.bf16 %v100, %v96
  %v137 = vpack.c.bf16 %v101, %v97
  %v138 = vpack.c.bf16 %v102, %v98
  %v139 = vpack.c.bf16 %v103, %v99
  %v140 = vpack.c.bf16 %v108, %v104
  %v141 = vpack.c.bf16 %v109, %v105
  %v142 = vpack.c.bf16 %v110, %v106
  %v143 = vpack.c.bf16 %v111, %v107
  %v144 = vld [vmem:[%s1] sm:$0xff]
  %v145 = vld [vmem:[%s1 + $0x8] sm:$0xff]
  %v146 = vld [vmem:[%s1 + $0x10] sm:$0xff]
  %v147 = vld [vmem:[%s1 + $0x18] sm:$0xff]
  %v148 = vld [vmem:[%s1 + $0x20] sm:$0xff]
  %v149 = vld [vmem:[%s1 + $0x28] sm:$0xff]
  %v150 = vld [vmem:[%s1 + $0x30] sm:$0xff]
  %v151 = vld [vmem:[%s1 + $0x38] sm:$0xff]
  %v152 = vld [vmem:[%s1 + $0x40] sm:$0xff]
  %v153 = vld [vmem:[%s1 + $0x48] sm:$0xff]
  %v154 = vld [vmem:[%s1 + $0x50] sm:$0xff]
  %v155 = vld [vmem:[%s1 + $0x58] sm:$0xff]
  %v156 = vld [vmem:[%s1 + $0x60] sm:$0xff]
  %v157 = vld [vmem:[%s1 + $0x68] sm:$0xff]
  %v158 = vld [vmem:[%s1 + $0x70] sm:$0xff]
  %v159 = vld [vmem:[%s1 + $0x78] sm:$0xff]
  %v160 = vld [vmem:[%s1 + $0x80] sm:$0xff]
  %v161 = vld [vmem:[%s1 + $0x88] sm:$0xff]
  %v162 = vld [vmem:[%s1 + $0x90] sm:$0xff]
  %v163 = vld [vmem:[%s1 + $0x98] sm:$0xff]
  %v164 = vld [vmem:[%s1 + $0xa0] sm:$0xff]
  %v165 = vld [vmem:[%s1 + $0xa8] sm:$0xff]
  %v166 = vld [vmem:[%s1 + $0xb0] sm:$0xff]
  %v167 = vld [vmem:[%s1 + $0xb8] sm:$0xff]
  %v168 = vld [vmem:[%s1 + $0xc0] sm:$0xff]
  %v169 = vld [vmem:[%s1 + $0xc8] sm:$0xff]
  %v170 = vld [vmem:[%s1 + $0xd0] sm:$0xff]
  %v171 = vld [vmem:[%s1 + $0xd8] sm:$0xff]
  %v172 = vld [vmem:[%s1 + $0xe0] sm:$0xff]
  %v173 = vld [vmem:[%s1 + $0xe8] sm:$0xff]
  %v174 = vld [vmem:[%s1 + $0xf0] sm:$0xff]
  %v175 = vld [vmem:[%s1 + $0xf8] sm:$0xff]
  %v176 = vld [vmem:[%s1 + $0x100] sm:$0xff]
  %v177 = vld [vmem:[%s1 + $0x108] sm:$0xff]
  %v178 = vld [vmem:[%s1 + $0x110] sm:$0xff]
  %v179 = vld [vmem:[%s1 + $0x118] sm:$0xff]
  %v180 = vld [vmem:[%s1 + $0x120] sm:$0xff]
  %v181 = vld [vmem:[%s1 + $0x128] sm:$0xff]
  %v182 = vld [vmem:[%s1 + $0x130] sm:$0xff]
  %v183 = vld [vmem:[%s1 + $0x138] sm:$0xff]
  %v184 = vld [vmem:[%s1 + $0x140] sm:$0xff]
  %v185 = vld [vmem:[%s1 + $0x148] sm:$0xff]
  %v186 = vld [vmem:[%s1 + $0x150] sm:$0xff]
  %v187 = vld [vmem:[%s1 + $0x158] sm:$0xff]
  %v188 = vld [vmem:[%s1 + $0x160] sm:$0xff]
  %v189 = vld [vmem:[%s1 + $0x168] sm:$0xff]
  %v190 = vld [vmem:[%s1 + $0x170] sm:$0xff]
  %v191 = vld [vmem:[%s1 + $0x178] sm:$0xff]
  %v192 = vld [vmem:[%s1 + $0x180] sm:$0xff]
  %v193 = vld [vmem:[%s1 + $0x188] sm:$0xff]
  %v194 = vld [vmem:[%s1 + $0x190] sm:$0xff]
  %v195 = vld [vmem:[%s1 + $0x198] sm:$0xff]
  %v196 = vld [vmem:[%s1 + $0x1a0] sm:$0xff]
  %v197 = vld [vmem:[%s1 + $0x1a8] sm:$0xff]
  %v198 = vld [vmem:[%s1 + $0x1b0] sm:$0xff]
  %v199 = vld [vmem:[%s1 + $0x1b8] sm:$0xff]
  %v200 = vld [vmem:[%s1 + $0x1c0] sm:$0xff]
  %v201 = vld [vmem:[%s1 + $0x1c8] sm:$0xff]
  %v202 = vld [vmem:[%s1 + $0x1d0] sm:$0xff]
  %v203 = vld [vmem:[%s1 + $0x1d8] sm:$0xff]
  %v204 = vld [vmem:[%s1 + $0x1e0] sm:$0xff]
  %v205 = vld [vmem:[%s1 + $0x1e8] sm:$0xff]
  %v206 = vld [vmem:[%s1 + $0x1f0] sm:$0xff]
  %v207 = vld [vmem:[%s1 + $0x1f8] sm:$0xff]
  %v208 = vpack.c.bf16 %v148, %v144
  %v209 = vpack.c.bf16 %v149, %v145
  %v210 = vpack.c.bf16 %v150, %v146
  %v211 = vpack.c.bf16 %v151, %v147
  %v212 = vpack.c.bf16 %v156, %v152
  %v213 = vpack.c.bf16 %v157, %v153
  %v214 = vpack.c.bf16 %v158, %v154
  %v215 = vpack.c.bf16 %v159, %v155
  %v216 = vpack.c.bf16 %v164, %v160
  %v217 = vpack.c.bf16 %v165, %v161
  %v218 = vpack.c.bf16 %v166, %v162
  %v219 = vpack.c.bf16 %v167, %v163
  %v220 = vpack.c.bf16 %v172, %v168
  %v221 = vpack.c.bf16 %v173, %v169
  %v222 = vpack.c.bf16 %v174, %v170
  %v223 = vpack.c.bf16 %v175, %v171
  %v224 = vpack.c.bf16 %v180, %v176
  %v225 = vpack.c.bf16 %v181, %v177
  %v226 = vpack.c.bf16 %v182, %v178
  %v227 = vpack.c.bf16 %v183, %v179
  %v228 = vpack.c.bf16 %v188, %v184
  %v229 = vpack.c.bf16 %v189, %v185
  %v230 = vpack.c.bf16 %v190, %v186
  %v231 = vpack.c.bf16 %v191, %v187
  %v232 = vpack.c.bf16 %v196, %v192
  %v233 = vpack.c.bf16 %v197, %v193
  %v234 = vpack.c.bf16 %v198, %v194
  %v235 = vpack.c.bf16 %v199, %v195
  %v236 = vpack.c.bf16 %v204, %v200
  %v237 = vpack.c.bf16 %v205, %v201
  %v238 = vpack.c.bf16 %v206, %v202
  %v239 = vpack.c.bf16 %v207, %v203
  %240 = vmatprep.subr.bf16.mxu0 %v209
  %241 = vmatpush1.bf16.xpose.msra.mxu0 %v208
  %242 = vmatprep.subr.bf16.mxu0 %v213
  %243 = vmatpush1.bf16.xpose.msra.mxu0 %v212
  %244 = vmatprep.subr.bf16.mxu0 %v217
  %245 = vmatpush1.bf16.xpose.msra.mxu0 %v216
  %246 = vmatprep.subr.bf16.mxu0 %v221
  %247 = vmatpush1.bf16.xpose.msra.mxu0 %v220
  %248 = vmatprep.subr.bf16.mxu0 %v225
  %249 = vmatpush1.bf16.xpose.msra.mxu0 %v224
  %250 = vmatprep.subr.bf16.mxu0 %v229
  %251 = vmatpush1.bf16.xpose.msra.mxu0 %v228
  %252 = vmatprep.subr.bf16.mxu0 %v233
  %253 = vmatpush1.bf16.xpose.msra.mxu0 %v232
  %254 = vmatprep.subr.bf16.mxu0 %v237
  %255 = vmatpush1.bf16.xpose.msra.mxu0 %v236
  %256 = vmatprep.subr.bf16.mxu0 0
  %257 = vmatpush1.bf16.xpose.msra.mxu0 0
  %258 = vmatprep.subr.bf16.mxu0 0
  %259 = vmatpush1.bf16.xpose.msra.mxu0 0
  %260 = vmatprep.subr.bf16.mxu0 0
  %261 = vmatpush1.bf16.xpose.msra.mxu0 0
  %262 = vmatprep.subr.bf16.mxu0 0
  %263 = vmatpush1.bf16.xpose.msra.mxu0 0
  %264 = vmatprep.subr.bf16.mxu0 0
  %265 = vmatpush1.bf16.xpose.msra.mxu0 0
  %266 = vmatprep.subr.bf16.mxu0 0
  %267 = vmatpush1.bf16.xpose.msra.mxu0 0
  %268 = vmatprep.subr.bf16.mxu0 0
  %269 = vmatpush1.bf16.xpose.msra.mxu0 0
  %270 = vmatprep.subr.bf16.mxu0 0
  %271 = vmatpush1.bf16.xpose.msra.mxu0 0
  %272 = vmatprep.mubr.bf16.mxu0 %v113
  %273 = vmatmul.mubr.bf16.gmra.mrb[0].mxu0 %v112
  %v274 = vpop.f32.mrb[0].mxu0
  %v275 = vadd.f32 0.0, %v274
  %v276 = vpop.f32.mrb[0].mxu0
  %v277 = vpop.f32.mrb[0].mxu0
  %v278 = vadd.f32 0.0, %v277
  %v279 = vpop.f32.mrb[0].mxu0
  %280 = vmatprep.mubr.bf16.mxu0 %v117
  %281 = vmatmul.mubr.bf16.gmra.mrb[0].mxu0 %v116
  %v282 = vpop.f32.mrb[0].mxu0
  %v283 = vadd.f32 0.0, %v282
  %v284 = vpop.f32.mrb[0].mxu0
  %v285 = vpop.f32.mrb[0].mxu0
  %v286 = vadd.f32 0.0, %v285
  %v287 = vpop.f32.mrb[0].mxu0
  %288 = vmatprep.mubr.bf16.mxu0 %v121
  %289 = vmatmul.mubr.bf16.gmra.mrb[0].mxu0 %v120
  %v290 = vpop.f32.mrb[0].mxu0
  %v291 = vadd.f32 0.0, %v290
  %v292 = vpop.f32.mrb[0].mxu0
  %v293 = vpop.f32.mrb[0].mxu0
  %v294 = vadd.f32 0.0, %v293
  %v295 = vpop.f32.mrb[0].mxu0
  %296 = vmatprep.mubr.bf16.mxu0 %v125
  %297 = vmatmul.mubr.bf16.gmra.mrb[0].mxu0 %v124
  %v298 = vpop.f32.mrb[0].mxu0
  %v299 = vadd.f32 0.0, %v298
  %v300 = vpop.f32.mrb[0].mxu0
  %v301 = vpop.f32.mrb[0].mxu0
  %v302 = vadd.f32 0.0, %v301
  %v303 = vpop.f32.mrb[0].mxu0
  %304 = vmatprep.mubr.bf16.mxu0 %v129
  %305 = vmatmul.mubr.bf16.gmra.mrb[0].mxu0 %v128
  %v306 = vpop.f32.mrb[0].mxu0
  %v307 = vadd.f32 0.0, %v306
  %v308 = vpop.f32.mrb[0].mxu0
  %v309 = vpop.f32.mrb[0].mxu0
  %v310 = vadd.f32 0.0, %v309
  %v311 = vpop.f32.mrb[0].mxu0
  %312 = vmatprep.mubr.bf16.mxu0 %v133
  %313 = vmatmul.mubr.bf16.gmra.mrb[0].mxu0 %v132
  %v314 = vpop.f32.mrb[0].mxu0
  %v315 = vadd.f32 0.0, %v314
  %v316 = vpop.f32.mrb[0].mxu0
  %v317 = vpop.f32.mrb[0].mxu0
  %v318 = vadd.f32 0.0, %v317
  %v319 = vpop.f32.mrb[0].mxu0
  %320 = vmatprep.mubr.bf16.mxu0 %v137
  %321 = vmatmul.mubr.bf16.gmra.mrb[0].mxu0 %v136
  %v322 = vpop.f32.mrb[0].mxu0
  %v323 = vadd.f32 0.0, %v322
  %v324 = vpop.f32.mrb[0].mxu0
  %v325 = vpop.f32.mrb[0].mxu0
  %v326 = vadd.f32 0.0, %v325
  %v327 = vpop.f32.mrb[0].mxu0
  %328 = vmatprep.mubr.bf16.mxu0 %v141
  %329 = vmatmul.mubr.bf16.gmra.mrb[0].mxu0 %v140
  %v330 = vpop.f32.mrb[0].mxu0
  %v331 = vadd.f32 0.0, %v330
  %v332 = vpop.f32.mrb[0].mxu0
  %v333 = vpop.f32.mrb[0].mxu0
  %v334 = vadd.f32 0.0, %v333
  %v335 = vpop.f32.mrb[0].mxu0
  %336 = vdwg.mxu0
  %337 = vmatprep.subr.bf16.mxu0 %v211
  %338 = vmatpush1.bf16.xpose.msra.mxu0 %v210
  %339 = vmatprep.subr.bf16.mxu0 %v215
  %340 = vmatpush1.bf16.xpose.msra.mxu0 %v214
  %341 = vmatprep.subr.bf16.mxu0 %v219
  %342 = vmatpush1.bf16.xpose.msra.mxu0 %v218
  %343 = vmatprep.subr.bf16.mxu0 %v223
  %344 = vmatpush1.bf16.xpose.msra.mxu0 %v222
  %345 = vmatprep.subr.bf16.mxu0 %v227
  %346 = vmatpush1.bf16.xpose.msra.mxu0 %v226
  %347 = vmatprep.subr.bf16.mxu0 %v231
  %348 = vmatpush1.bf16.xpose.msra.mxu0 %v230
  %349 = vmatprep.subr.bf16.mxu0 %v235
  %350 = vmatpush1.bf16.xpose.msra.mxu0 %v234
  %351 = vmatprep.subr.bf16.mxu0 %v239
  %352 = vmatpush1.bf16.xpose.msra.mxu0 %v238
  %353 = vmatprep.subr.bf16.mxu0 0
  %354 = vmatpush1.bf16.xpose.msra.mxu0 0
  %355 = vmatprep.subr.bf16.mxu0 0
  %356 = vmatpush1.bf16.xpose.msra.mxu0 0
  %357 = vmatprep.subr.bf16.mxu0 0
  %358 = vmatpush1.bf16.xpose.msra.mxu0 0
  %359 = vmatprep.subr.bf16.mxu0 0
  %360 = vmatpush1.bf16.xpose.msra.mxu0 0
  %361 = vmatprep.subr.bf16.mxu0 0
  %362 = vmatpush1.bf16.xpose.msra.mxu0 0
  %363 = vmatprep.subr.bf16.mxu0 0
  %364 = vmatpush1.bf16.xpose.msra.mxu0 0
  %365 = vmatprep.subr.bf16.mxu0 0
  %366 = vmatpush1.bf16.xpose.msra.mxu0 0
  %367 = vmatprep.subr.bf16.mxu0 0
  %368 = vmatpush1.bf16.xpose.msra.mxu0 0
  %369 = vmatprep.mubr.bf16.mxu0 %v115
  %370 = vmatmul.mubr.bf16.gmra.mrb[0].mxu0 %v114
  %v371 = vpop.f32.mrb[0].mxu0
  %v372 = vadd.f32 %v275, %v371
  %v373 = vpop.f32.mrb[0].mxu0
  %v374 = vpop.f32.mrb[0].mxu0
  %v375 = vadd.f32 %v278, %v374
  %v376 = vpop.f32.mrb[0].mxu0
  %377 = vmatprep.mubr.bf16.mxu0 %v119
  %378 = vmatmul.mubr.bf16.gmra.mrb[0].mxu0 %v118
  %v379 = vpop.f32.mrb[0].mxu0
  %v380 = vadd.f32 %v283, %v379
  %v381 = vpop.f32.mrb[0].mxu0
  %v382 = vpop.f32.mrb[0].mxu0
  %v383 = vadd.f32 %v286, %v382
  %v384 = vpop.f32.mrb[0].mxu0
  %385 = vmatprep.mubr.bf16.mxu0 %v123
  %386 = vmatmul.mubr.bf16.gmra.mrb[0].mxu0 %v122
  %v387 = vpop.f32.mrb[0].mxu0
  %v388 = vadd.f32 %v291, %v387
  %v389 = vpop.f32.mrb[0].mxu0
  %v390 = vpop.f32.mrb[0].mxu0
  %v391 = vadd.f32 %v294, %v390
  %v392 = vpop.f32.mrb[0].mxu0
  %393 = vmatprep.mubr.bf16.mxu0 %v127
  %394 = vmatmul.mubr.bf16.gmra.mrb[0].mxu0 %v126
  %v395 = vpop.f32.mrb[0].mxu0
  %v396 = vadd.f32 %v299, %v395
  %v397 = vpop.f32.mrb[0].mxu0
  %v398 = vpop.f32.mrb[0].mxu0
  %v399 = vadd.f32 %v302, %v398
  %v400 = vpop.f32.mrb[0].mxu0
  %401 = vmatprep.mubr.bf16.mxu0 %v131
  %402 = vmatmul.mubr.bf16.gmra.mrb[0].mxu0 %v130
  %v403 = vpop.f32.mrb[0].mxu0
  %v404 = vadd.f32 %v307, %v403
  %v405 = vpop.f32.mrb[0].mxu0
  %v406 = vpop.f32.mrb[0].mxu0
  %v407 = vadd.f32 %v310, %v406
  %v408 = vpop.f32.mrb[0].mxu0
  %409 = vmatprep.mubr.bf16.mxu0 %v135
  %410 = vmatmul.mubr.bf16.gmra.mrb[0].mxu0 %v134
  %v411 = vpop.f32.mrb[0].mxu0
  %v412 = vadd.f32 %v315, %v411
  %v413 = vpop.f32.mrb[0].mxu0
  %v414 = vpop.f32.mrb[0].mxu0
  %v415 = vadd.f32 %v318, %v414
  %v416 = vpop.f32.mrb[0].mxu0
  %417 = vmatprep.mubr.bf16.mxu0 %v139
  %418 = vmatmul.mubr.bf16.gmra.mrb[0].mxu0 %v138
  %v419 = vpop.f32.mrb[0].mxu0
  %v420 = vadd.f32 %v323, %v419
  %v421 = vpop.f32.mrb[0].mxu0
  %v422 = vpop.f32.mrb[0].mxu0
  %v423 = vadd.f32 %v326, %v422
  %v424 = vpop.f32.mrb[0].mxu0
  %425 = vmatprep.mubr.bf16.mxu0 %v143
  %426 = vmatmul.mubr.bf16.gmra.mrb[0].mxu0 %v142
  %v427 = vpop.f32.mrb[0].mxu0
  %v428 = vadd.f32 %v331, %v427
  %v429 = vpop.f32.mrb[0].mxu0
  %v430 = vpop.f32.mrb[0].mxu0
  %v431 = vadd.f32 %v334, %v430
  %v432 = vpop.f32.mrb[0].mxu0
  %433 = vdwg.mxu0
  %v434 = vadd.f32 %v32, %v372
  %v435 = vadd.f32 %v33, %v375
  %v436 = vadd.f32 %v34, %v380
  %v437 = vadd.f32 %v35, %v383
  %v438 = vadd.f32 %v36, %v388
  %v439 = vadd.f32 %v37, %v391
  %v440 = vadd.f32 %v38, %v396
  %v441 = vadd.f32 %v39, %v399
  %v442 = vadd.f32 %v40, %v404
  %v443 = vadd.f32 %v41, %v407
  %v444 = vadd.f32 %v42, %v412
  %v445 = vadd.f32 %v43, %v415
  %v446 = vadd.f32 %v44, %v420
  %v447 = vadd.f32 %v45, %v423
  %v448 = vadd.f32 %v46, %v428
  %v449 = vadd.f32 %v47, %v431
  %450 = vst [vmem:[#allocation2] sm:$0xff] %v434
  %451 = vst [vmem:[#allocation2 + $0x8] sm:$0xff] %v435
  %452 = vst [vmem:[#allocation2 + $0x10] sm:$0xff] %v436
  %453 = vst [vmem:[#allocation2 + $0x18] sm:$0xff] %v437
  %454 = vst [vmem:[#allocation2 + $0x20] sm:$0xff] %v438
  %455 = vst [vmem:[#allocation2 + $0x28] sm:$0xff] %v439
  %456 = vst [vmem:[#allocation2 + $0x30] sm:$0xff] %v440
  %457 = vst [vmem:[#allocation2 + $0x38] sm:$0xff] %v441
  %458 = vst [vmem:[#allocation2 + $0x40] sm:$0xff] %v442
  %459 = vst [vmem:[#allocation2 + $0x48] sm:$0xff] %v443
  %460 = vst [vmem:[#allocation2 + $0x50] sm:$0xff] %v444
  %461 = vst [vmem:[#allocation2 + $0x58] sm:$0xff] %v445
  %462 = vst [vmem:[#allocation2 + $0x60] sm:$0xff] %v446
  %463 = vst [vmem:[#allocation2 + $0x68] sm:$0xff] %v447
  %464 = vst [vmem:[#allocation2 + $0x70] sm:$0xff] %v448
  %465 = vst [vmem:[#allocation2 + $0x78] sm:$0xff] %v449
  // Predicated region
  $region14: #{gpt_forward.66} parent=0 // pred_check
    %p466 = pneg %p12
  $region15: #{gpt_forward.66} parent=0 // pred_check_branch
    %468 = sbr.rel (%p466) target = $region17
  $region16: #{gpt_forward.66} parent=0 // pred_region
    %v469 = vld [vmem:[#allocation2] sm:$0xff]
    %v470 = vld [vmem:[#allocation2 + $0x8] sm:$0xff]
    %v471 = vld [vmem:[#allocation2 + $0x10] sm:$0xff]
    %v472 = vld [vmem:[#allocation2 + $0x18] sm:$0xff]
    %v473 = vld [vmem:[#allocation2 + $0x20] sm:$0xff]
    %v474 = vld [vmem:[#allocation2 + $0x28] sm:$0xff]
    %v475 = vld [vmem:[#allocation2 + $0x30] sm:$0xff]
    %v476 = vld [vmem:[#allocation2 + $0x38] sm:$0xff]
    %v477 = vld [vmem:[#allocation2 + $0x40] sm:$0xff]
    %v478 = vld [vmem:[#allocation2 + $0x48] sm:$0xff]
    %v479 = vld [vmem:[#allocation2 + $0x50] sm:$0xff]
    %v480 = vld [vmem:[#allocation2 + $0x58] sm:$0xff]
    %v481 = vld [vmem:[#allocation2 + $0x60] sm:$0xff]
    %v482 = vld [vmem:[#allocation2 + $0x68] sm:$0xff]
    %v483 = vld [vmem:[#allocation2 + $0x70] sm:$0xff]
    %v484 = vld [vmem:[#allocation2 + $0x78] sm:$0xff]
    %485 = vst [vmem:[%s2] sm:$0xff] %v469
    %486 = vst [vmem:[%s2 + $0x8] sm:$0xff] %v470
    %487 = vst [vmem:[%s2 + $0x10] sm:$0xff] %v471
    %488 = vst [vmem:[%s2 + $0x18] sm:$0xff] %v472
    %489 = vst [vmem:[%s2 + $0x20] sm:$0xff] %v473
    %490 = vst [vmem:[%s2 + $0x28] sm:$0xff] %v474
    %491 = vst [vmem:[%s2 + $0x30] sm:$0xff] %v475
    %492 = vst [vmem:[%s2 + $0x38] sm:$0xff] %v476
    %493 = vst [vmem:[%s2 + $0x40] sm:$0xff] %v477
    %494 = vst [vmem:[%s2 + $0x48] sm:$0xff] %v478
    %495 = vst [vmem:[%s2 + $0x50] sm:$0xff] %v479
    %496 = vst [vmem:[%s2 + $0x58] sm:$0xff] %v480
    %497 = vst [vmem:[%s2 + $0x60] sm:$0xff] %v481
    %498 = vst [vmem:[%s2 + $0x68] sm:$0xff] %v482
    %499 = vst [vmem:[%s2 + $0x70] sm:$0xff] %v483
    %500 = vst [vmem:[%s2 + $0x78] sm:$0xff] %v484
  $region17: #{gpt_forward.66} parent=0 // pred_fallthru
    _
  // Predicated region
  $region18: #{gpt_forward.66} parent=0 // pred_check
    _
  $region19: #{gpt_forward.66} parent=0 // pred_check_branch
    %502 = sbr.rel (0) target = $region21
  $region20: #{gpt_forward.66} parent=0 // pred_region
    _
  $region21: #{gpt_forward.66} parent=0 // pred_fallthru
    _
  // Predicated region
  $region22: #{gpt_forward.66} parent=0 // pred_check
    _
  $region23: #{gpt_forward.66} parent=0 // pred_check_branch
    %504 = sbr.rel (0) target = $region25
  $region24: #{gpt_forward.66} parent=0 // pred_region
    _
  $region25: #{gpt_forward.66} parent=0 // pred_fallthru
    _

// kernel: gpt_forward.113
$region0: #{gpt_forward.113}
  #allocation0 [shape = 'u32[]', space=smem, size = 0x4, offset = 0x4, fixed_abs, tag = 'smem constant byte address 0x4 - core index']
  #allocation1 [shape = 'u32[144,128]{1,0:T(1,128)}', space=vmem, size = 0x12000, scoped, tag = 'internal scratch']
  #allocation2 [shape = 'f32[128,1]{1,0:T(8,128)}', space=vmem, size = 0x10000, scoped, tag = 'scratch operand']
  #allocation3 [shape = 'f32[128,1]{1,0:T(8,128)}', space=vmem, size = 0x10000, scoped, tag = 'scratch operand']
  #allocation4 [shape = 'f32[128,1]{1,0:T(8,128)}', space=vmem, size = 0x10000, scoped, tag = 'scratch operand']
  %s0 = inlined_call_operand.vmem [shape: f32[128,128], index: 0, kind: input, shape index: {}]
  %s1 = inlined_call_operand.vmem [shape: f32[128,128], index: 1, kind: input, shape index: {}]
  %s2 = inlined_call_operand.vmem [shape: s32[128,1], index: 2, kind: input, shape index: {}]
  %s3 = inlined_call_operand.vmem [shape: f32[128,1], index: 3, kind: output, shape index: {}]
  %s4 = sld [smem:[#allocation0]]
  $region30: #{gpt_forward.113} parent=0
    _
  %s6 = ssub.s32 1, %s4
  %s7 = scalar_select 0, %s6, %s4
  // Predicated region
  $region2: #{gpt_forward.113} parent=0 // pred_check
    _
  $region3: #{gpt_forward.113} parent=0 // pred_check_branch
    %9 = sbr.rel (0) target = $region5
  $region4: #{gpt_forward.113} parent=0 // pred_region
    _
  $region5: #{gpt_forward.113} parent=0 // pred_fallthru
    _
  // Predicated region
  $region6: #{gpt_forward.113} parent=0 // pred_check
    _
  $region7: #{gpt_forward.113} parent=0 // pred_check_branch
    %11 = sbr.rel (0) target = $region9
  $region8: #{gpt_forward.113} parent=0 // pred_region
    _
  $region9: #{gpt_forward.113} parent=0 // pred_fallthru
    _
  // Predicated region
  $region10: #{gpt_forward.113} parent=0 // pred_check
    _
  $region11: #{gpt_forward.113} parent=0 // pred_check_branch
    %13 = sbr.rel (0) target = $region13
  $region12: #{gpt_forward.113} parent=0 // pred_region
    _
  $region13: #{gpt_forward.113} parent=0 // pred_fallthru
    _
  %p15 = scmp.eq.s32.totalorder 0, 0
  // Predicated region
  $region14: #{gpt_forward.113} parent=0 // pred_check
    %p16 = pneg %p15
  $region15: #{gpt_forward.113} parent=0 // pred_check_branch
    %18 = sbr.rel (%p16) target = $region17
  $region16: #{gpt_forward.113} parent=0 // pred_region
    %vm19 = vcmask 7168
    %20 = vst.msk [vmem:[#allocation2] sm:$0xff] %vm19, -inf
    %21 = vst.msk [vmem:[#allocation2 + $0x8] sm:$0xff] %vm19, -inf
    %22 = vst.msk [vmem:[#allocation2 + $0x10] sm:$0xff] %vm19, -inf
    %23 = vst.msk [vmem:[#allocation2 + $0x18] sm:$0xff] %vm19, -inf
    %24 = vst.msk [vmem:[#allocation2 + $0x20] sm:$0xff] %vm19, -inf
    %25 = vst.msk [vmem:[#allocation2 + $0x28] sm:$0xff] %vm19, -inf
    %26 = vst.msk [vmem:[#allocation2 + $0x30] sm:$0xff] %vm19, -inf
    %27 = vst.msk [vmem:[#allocation2 + $0x38] sm:$0xff] %vm19, -inf
    %28 = vst.msk [vmem:[#allocation2 + $0x40] sm:$0xff] %vm19, -inf
    %29 = vst.msk [vmem:[#allocation2 + $0x48] sm:$0xff] %vm19, -inf
    %30 = vst.msk [vmem:[#allocation2 + $0x50] sm:$0xff] %vm19, -inf
    %31 = vst.msk [vmem:[#allocation2 + $0x58] sm:$0xff] %vm19, -inf
    %32 = vst.msk [vmem:[#allocation2 + $0x60] sm:$0xff] %vm19, -inf
    %33 = vst.msk [vmem:[#allocation2 + $0x68] sm:$0xff] %vm19, -inf
    %34 = vst.msk [vmem:[#allocation2 + $0x70] sm:$0xff] %vm19, -inf
    %35 = vst.msk [vmem:[#allocation2 + $0x78] sm:$0xff] %vm19, -inf
    %36 = vst.msk [vmem:[#allocation3] sm:$0xff] %vm19, 0.0
    %37 = vst.msk [vmem:[#allocation3 + $0x8] sm:$0xff] %vm19, 0.0
    %38 = vst.msk [vmem:[#allocation3 + $0x10] sm:$0xff] %vm19, 0.0
    %39 = vst.msk [vmem:[#allocation3 + $0x18] sm:$0xff] %vm19, 0.0
    %40 = vst.msk [vmem:[#allocation3 + $0x20] sm:$0xff] %vm19, 0.0
    %41 = vst.msk [vmem:[#allocation3 + $0x28] sm:$0xff] %vm19, 0.0
    %42 = vst.msk [vmem:[#allocation3 + $0x30] sm:$0xff] %vm19, 0.0
    %43 = vst.msk [vmem:[#allocation3 + $0x38] sm:$0xff] %vm19, 0.0
    %44 = vst.msk [vmem:[#allocation3 + $0x40] sm:$0xff] %vm19, 0.0
    %45 = vst.msk [vmem:[#allocation3 + $0x48] sm:$0xff] %vm19, 0.0
    %46 = vst.msk [vmem:[#allocation3 + $0x50] sm:$0xff] %vm19, 0.0
    %47 = vst.msk [vmem:[#allocation3 + $0x58] sm:$0xff] %vm19, 0.0
    %48 = vst.msk [vmem:[#allocation3 + $0x60] sm:$0xff] %vm19, 0.0
    %49 = vst.msk [vmem:[#allocation3 + $0x68] sm:$0xff] %vm19, 0.0
    %50 = vst.msk [vmem:[#allocation3 + $0x70] sm:$0xff] %vm19, 0.0
    %51 = vst.msk [vmem:[#allocation3 + $0x78] sm:$0xff] %vm19, 0.0
    %52 = vst.msk [vmem:[#allocation4] sm:$0xff] %vm19, 0.0
    %53 = vst.msk [vmem:[#allocation4 + $0x8] sm:$0xff] %vm19, 0.0
    %54 = vst.msk [vmem:[#allocation4 + $0x10] sm:$0xff] %vm19, 0.0
    %55 = vst.msk [vmem:[#allocation4 + $0x18] sm:$0xff] %vm19, 0.0
    %56 = vst.msk [vmem:[#allocation4 + $0x20] sm:$0xff] %vm19, 0.0
    %57 = vst.msk [vmem:[#allocation4 + $0x28] sm:$0xff] %vm19, 0.0
    %58 = vst.msk [vmem:[#allocation4 + $0x30] sm:$0xff] %vm19, 0.0
    %59 = vst.msk [vmem:[#allocation4 + $0x38] sm:$0xff] %vm19, 0.0
    %60 = vst.msk [vmem:[#allocation4 + $0x40] sm:$0xff] %vm19, 0.0
    %61 = vst.msk [vmem:[#allocation4 + $0x48] sm:$0xff] %vm19, 0.0
    %62 = vst.msk [vmem:[#allocation4 + $0x50] sm:$0xff] %vm19, 0.0
    %63 = vst.msk [vmem:[#allocation4 + $0x58] sm:$0xff] %vm19, 0.0
    %64 = vst.msk [vmem:[#allocation4 + $0x60] sm:$0xff] %vm19, 0.0
    %65 = vst.msk [vmem:[#allocation4 + $0x68] sm:$0xff] %vm19, 0.0
    %66 = vst.msk [vmem:[#allocation4 + $0x70] sm:$0xff] %vm19, 0.0
    %67 = vst.msk [vmem:[#allocation4 + $0x78] sm:$0xff] %vm19, 0.0
  $region17: #{gpt_forward.113} parent=0 // pred_fallthru
    _
  %v68 = vld [vmem:[%s0] sm:$0xff]
  %v69 = vld [vmem:[%s0 + $0x8] sm:$0xff]
  %v70 = vld [vmem:[%s0 + $0x10] sm:$0xff]
  %v71 = vld [vmem:[%s0 + $0x18] sm:$0xff]
  %v72 = vld [vmem:[%s0 + $0x20] sm:$0xff]
  %v73 = vld [vmem:[%s0 + $0x28] sm:$0xff]
  %v74 = vld [vmem:[%s0 + $0x30] sm:$0xff]
  %v75 = vld [vmem:[%s0 + $0x38] sm:$0xff]
  %v76 = vld [vmem:[%s0 + $0x40] sm:$0xff]
  %v77 = vld [vmem:[%s0 + $0x48] sm:$0xff]
  %v78 = vld [vmem:[%s0 + $0x50] sm:$0xff]
  %v79 = vld [vmem:[%s0 + $0x58] sm:$0xff]
  %v80 = vld [vmem:[%s0 + $0x60] sm:$0xff]
  %v81 = vld [vmem:[%s0 + $0x68] sm:$0xff]
  %v82 = vld [vmem:[%s0 + $0x70] sm:$0xff]
  %v83 = vld [vmem:[%s0 + $0x78] sm:$0xff]
  %v84 = vpack.c.bf16 %v69, %v68
  %v85 = vpack.c.bf16 %v71, %v70
  %v86 = vpack.c.bf16 %v73, %v72
  %v87 = vpack.c.bf16 %v75, %v74
  %v88 = vpack.c.bf16 %v77, %v76
  %v89 = vpack.c.bf16 %v79, %v78
  %v90 = vpack.c.bf16 %v81, %v80
  %v91 = vpack.c.bf16 %v83, %v82
  %v92 = vld [vmem:[%s1] sm:$0xff]
  %v93 = vld [vmem:[%s1 + $0x8] sm:$0xff]
  %v94 = vld [vmem:[%s1 + $0x10] sm:$0xff]
  %v95 = vld [vmem:[%s1 + $0x18] sm:$0xff]
  %v96 = vld [vmem:[%s1 + $0x20] sm:$0xff]
  %v97 = vld [vmem:[%s1 + $0x28] sm:$0xff]
  %v98 = vld [vmem:[%s1 + $0x30] sm:$0xff]
  %v99 = vld [vmem:[%s1 + $0x38] sm:$0xff]
  %v100 = vld [vmem:[%s1 + $0x40] sm:$0xff]
  %v101 = vld [vmem:[%s1 + $0x48] sm:$0xff]
  %v102 = vld [vmem:[%s1 + $0x50] sm:$0xff]
  %v103 = vld [vmem:[%s1 + $0x58] sm:$0xff]
  %v104 = vld [vmem:[%s1 + $0x60] sm:$0xff]
  %v105 = vld [vmem:[%s1 + $0x68] sm:$0xff]
  %v106 = vld [vmem:[%s1 + $0x70] sm:$0xff]
  %v107 = vld [vmem:[%s1 + $0x78] sm:$0xff]
  %v108 = vpack.c.bf16 %v93, %v92
  %v109 = vpack.c.bf16 %v95, %v94
  %v110 = vpack.c.bf16 %v97, %v96
  %v111 = vpack.c.bf16 %v99, %v98
  %v112 = vpack.c.bf16 %v101, %v100
  %v113 = vpack.c.bf16 %v103, %v102
  %v114 = vpack.c.bf16 %v105, %v104
  %v115 = vpack.c.bf16 %v107, %v106
  %116 = vmatprep.subr.bf16.mxu0 0
  %117 = vmatpush1.bf16.xpose.msra.mxu0 %v108
  %118 = vmatprep.subr.bf16.mxu0 0
  %119 = vmatpush1.bf16.xpose.msra.mxu0 %v109
  %120 = vmatprep.subr.bf16.mxu0 0
  %121 = vmatpush1.bf16.xpose.msra.mxu0 %v110
  %122 = vmatprep.subr.bf16.mxu0 0
  %123 = vmatpush1.bf16.xpose.msra.mxu0 %v111
  %124 = vmatprep.subr.bf16.mxu0 0
  %125 = vmatpush1.bf16.xpose.msra.mxu0 %v112
  %126 = vmatprep.subr.bf16.mxu0 0
  %127 = vmatpush1.bf16.xpose.msra.mxu0 %v113
  %128 = vmatprep.subr.bf16.mxu0 0
  %129 = vmatpush1.bf16.xpose.msra.mxu0 %v114
  %130 = vmatprep.subr.bf16.mxu0 0
  %131 = vmatpush1.bf16.xpose.msra.mxu0 %v115
  %132 = vmatprep.subr.bf16.mxu0 0
  %133 = vmatpush1.bf16.xpose.msra.mxu0 0
  %134 = vmatprep.subr.bf16.mxu0 0
  %135 = vmatpush1.bf16.xpose.msra.mxu0 0
  %136 = vmatprep.subr.bf16.mxu0 0
  %137 = vmatpush1.bf16.xpose.msra.mxu0 0
  %138 = vmatprep.subr.bf16.mxu0 0
  %139 = vmatpush1.bf16.xpose.msra.mxu0 0
  %140 = vmatprep.subr.bf16.mxu0 0
  %141 = vmatpush1.bf16.xpose.msra.mxu0 0
  %142 = vmatprep.subr.bf16.mxu0 0
  %143 = vmatpush1.bf16.xpose.msra.mxu0 0
  %144 = vmatprep.subr.bf16.mxu0 0
  %145 = vmatpush1.bf16.xpose.msra.mxu0 0
  %146 = vmatprep.subr.bf16.mxu0 0
  %147 = vmatpush1.bf16.xpose.msra.mxu0 0
  %148 = vmatprep.mubr.bf16.mxu0 0
  %149 = vmatmul.mubr.bf16.gmra.mrb[0].mxu0 %v84
  %v150 = vpop.f32.mrb[0].mxu0
  %v151 = vadd.f32 0.0, %v150
  %v152 = vpop.f32.mrb[0].mxu0
  %v153 = vpop.f32.mrb[0].mxu0
  %v154 = vadd.f32 0.0, %v153
  %v155 = vpop.f32.mrb[0].mxu0
  %156 = vmatprep.mubr.bf16.mxu0 0
  %157 = vmatmul.mubr.bf16.gmra.mrb[0].mxu0 %v85
  %v158 = vpop.f32.mrb[0].mxu0
  %v159 = vadd.f32 0.0, %v158
  %v160 = vpop.f32.mrb[0].mxu0
  %v161 = vpop.f32.mrb[0].mxu0
  %v162 = vadd.f32 0.0, %v161
  %v163 = vpop.f32.mrb[0].mxu0
  %164 = vmatprep.mubr.bf16.mxu0 0
  %165 = vmatmul.mubr.bf16.gmra.mrb[0].mxu0 %v86
  %v166 = vpop.f32.mrb[0].mxu0
  %v167 = vadd.f32 0.0, %v166
  %v168 = vpop.f32.mrb[0].mxu0
  %v169 = vpop.f32.mrb[0].mxu0
  %v170 = vadd.f32 0.0, %v169
  %v171 = vpop.f32.mrb[0].mxu0
  %172 = vmatprep.mubr.bf16.mxu0 0
  %173 = vmatmul.mubr.bf16.gmra.mrb[0].mxu0 %v87
  %v174 = vpop.f32.mrb[0].mxu0
  %v175 = vadd.f32 0.0, %v174
  %v176 = vpop.f32.mrb[0].mxu0
  %v177 = vpop.f32.mrb[0].mxu0
  %v178 = vadd.f32 0.0, %v177
  %v179 = vpop.f32.mrb[0].mxu0
  %180 = vmatprep.mubr.bf16.mxu0 0
  %181 = vmatmul.mubr.bf16.gmra.mrb[0].mxu0 %v88
  %v182 = vpop.f32.mrb[0].mxu0
  %v183 = vadd.f32 0.0, %v182
  %v184 = vpop.f32.mrb[0].mxu0
  %v185 = vpop.f32.mrb[0].mxu0
  %v186 = vadd.f32 0.0, %v185
  %v187 = vpop.f32.mrb[0].mxu0
  %188 = vmatprep.mubr.bf16.mxu0 0
  %189 = vmatmul.mubr.bf16.gmra.mrb[0].mxu0 %v89
  %v190 = vpop.f32.mrb[0].mxu0
  %v191 = vadd.f32 0.0, %v190
  %v192 = vpop.f32.mrb[0].mxu0
  %v193 = vpop.f32.mrb[0].mxu0
  %v194 = vadd.f32 0.0, %v193
  %v195 = vpop.f32.mrb[0].mxu0
  %196 = vmatprep.mubr.bf16.mxu0 0
  %197 = vmatmul.mubr.bf16.gmra.mrb[0].mxu0 %v90
  %v198 = vpop.f32.mrb[0].mxu0
  %v199 = vadd.f32 0.0, %v198
  %v200 = vpop.f32.mrb[0].mxu0
  %v201 = vpop.f32.mrb[0].mxu0
  %v202 = vadd.f32 0.0, %v201
  %v203 = vpop.f32.mrb[0].mxu0
  %204 = vmatprep.mubr.bf16.mxu0 0
  %205 = vmatmul.mubr.bf16.gmra.mrb[0].mxu0 %v91
  %v206 = vpop.f32.mrb[0].mxu0
  %v207 = vadd.f32 0.0, %v206
  %v208 = vpop.f32.mrb[0].mxu0
  %v209 = vpop.f32.mrb[0].mxu0
  %v210 = vadd.f32 0.0, %v209
  %v211 = vpop.f32.mrb[0].mxu0
  %212 = vdwg.mxu0
  %v213 = vmul.f32 %v151, 0.06666667
  %v214 = vmul.f32 %v154, 0.06666667
  %v215 = vmul.f32 %v159, 0.06666667
  %v216 = vmul.f32 %v162, 0.06666667
  %v217 = vmul.f32 %v167, 0.06666667
  %v218 = vmul.f32 %v170, 0.06666667
  %v219 = vmul.f32 %v175, 0.06666667
  %v220 = vmul.f32 %v178, 0.06666667
  %v221 = vmul.f32 %v183, 0.06666667
  %v222 = vmul.f32 %v186, 0.06666667
  %v223 = vmul.f32 %v191, 0.06666667
  %v224 = vmul.f32 %v194, 0.06666667
  %v225 = vmul.f32 %v199, 0.06666667
  %v226 = vmul.f32 %v202, 0.06666667
  %v227 = vmul.f32 %v207, 0.06666667
  %v228 = vmul.f32 %v210, 0.06666667
  %v229 = vtanh.pop %v213
  %v230 = vtanh.pop %v214
  %v231 = vtanh.pop %v215
  %v232 = vtanh.pop %v216
  %v233 = vtanh.pop %v217
  %v234 = vtanh.pop %v218
  %v235 = vtanh.pop %v219
  %v236 = vtanh.pop %v220
  %v237 = vtanh.pop %v221
  %v238 = vtanh.pop %v222
  %v239 = vtanh.pop %v223
  %v240 = vtanh.pop %v224
  %v241 = vtanh.pop %v225
  %v242 = vtanh.pop %v226
  %v243 = vtanh.pop %v227
  %v244 = vtanh.pop %v228
  %v245 = vadd.f32 %v229, 1.0
  %v246 = vadd.f32 %v230, 1.0
  %v247 = vadd.f32 %v231, 1.0
  %v248 = vadd.f32 %v232, 1.0
  %v249 = vadd.f32 %v233, 1.0
  %v250 = vadd.f32 %v234, 1.0
  %v251 = vadd.f32 %v235, 1.0
  %v252 = vadd.f32 %v236, 1.0
  %v253 = vadd.f32 %v237, 1.0
  %v254 = vadd.f32 %v238, 1.0
  %v255 = vadd.f32 %v239, 1.0
  %v256 = vadd.f32 %v240, 1.0
  %v257 = vadd.f32 %v241, 1.0
  %v258 = vadd.f32 %v242, 1.0
  %v259 = vadd.f32 %v243, 1.0
  %v260 = vadd.f32 %v244, 1.0
  %v261 = vmul.f32 %v245, 15.0
  %v262 = vmul.f32 %v246, 15.0
  %v263 = vmul.f32 %v247, 15.0
  %v264 = vmul.f32 %v248, 15.0
  %v265 = vmul.f32 %v249, 15.0
  %v266 = vmul.f32 %v250, 15.0
  %v267 = vmul.f32 %v251, 15.0
  %v268 = vmul.f32 %v252, 15.0
  %v269 = vmul.f32 %v253, 15.0
  %v270 = vmul.f32 %v254, 15.0
  %v271 = vmul.f32 %v255, 15.0
  %v272 = vmul.f32 %v256, 15.0
  %v273 = vmul.f32 %v257, 15.0
  %v274 = vmul.f32 %v258, 15.0
  %v275 = vmul.f32 %v259, 15.0
  %v276 = vmul.f32 %v260, 15.0
  %s277 = smul.u32 0, 128
  %v278 = vlaneseq
  %v279 = vand.u32 %v278, 127
  %v280 = vstv %s277
  %v281 = vadd.s32 %v280, %v279
  %v282 = vld [vmem:[%s2] sm:$0xff]
  %v283 = vld [vmem:[%s2 + $0x8] sm:$0xff]
  %v284 = vld [vmem:[%s2 + $0x10] sm:$0xff]
  %v285 = vld [vmem:[%s2 + $0x18] sm:$0xff]
  %v286 = vld [vmem:[%s2 + $0x20] sm:$0xff]
  %v287 = vld [vmem:[%s2 + $0x28] sm:$0xff]
  %v288 = vld [vmem:[%s2 + $0x30] sm:$0xff]
  %v289 = vld [vmem:[%s2 + $0x38] sm:$0xff]
  %v290 = vld [vmem:[%s2 + $0x40] sm:$0xff]
  %v291 = vld [vmem:[%s2 + $0x48] sm:$0xff]
  %v292 = vld [vmem:[%s2 + $0x50] sm:$0xff]
  %v293 = vld [vmem:[%s2 + $0x58] sm:$0xff]
  %v294 = vld [vmem:[%s2 + $0x60] sm:$0xff]
  %v295 = vld [vmem:[%s2 + $0x68] sm:$0xff]
  %v296 = vld [vmem:[%s2 + $0x70] sm:$0xff]
  %v297 = vld [vmem:[%s2 + $0x78] sm:$0xff]
  %v298 = vld [vmem:[#allocation4] sm:$0xff]
  %v299 = vld [vmem:[#allocation4 + $0x8] sm:$0xff]
  %v300 = vld [vmem:[#allocation4 + $0x10] sm:$0xff]
  %v301 = vld [vmem:[#allocation4 + $0x18] sm:$0xff]
  %v302 = vld [vmem:[#allocation4 + $0x20] sm:$0xff]
  %v303 = vld [vmem:[#allocation4 + $0x28] sm:$0xff]
  %v304 = vld [vmem:[#allocation4 + $0x30] sm:$0xff]
  %v305 = vld [vmem:[#allocation4 + $0x38] sm:$0xff]
  %v306 = vld [vmem:[#allocation4 + $0x40] sm:$0xff]
  %v307 = vld [vmem:[#allocation4 + $0x48] sm:$0xff]
  %v308 = vld [vmem:[#allocation4 + $0x50] sm:$0xff]
  %v309 = vld [vmem:[#allocation4 + $0x58] sm:$0xff]
  %v310 = vld [vmem:[#allocation4 + $0x60] sm:$0xff]
  %v311 = vld [vmem:[#allocation4 + $0x68] sm:$0xff]
  %v312 = vld [vmem:[#allocation4 + $0x70] sm:$0xff]
  %v313 = vld [vmem:[#allocation4 + $0x78] sm:$0xff]
  %314 = vset.pattern.permute.xlu0 0
  %315 = vperm.xlu0 %314, %v282
  %v316 = vpop.permute.xlu0 %315
  %317 = vset.pattern.permute.xlu0 0
  %318 = vperm.xlu0 %317, %v283
  %v319 = vpop.permute.xlu0 %318
  %320 = vset.pattern.permute.xlu0 0
  %321 = vperm.xlu0 %320, %v284
  %v322 = vpop.permute.xlu0 %321
  %323 = vset.pattern.permute.xlu0 0
  %324 = vperm.xlu0 %323, %v285
  %v325 = vpop.permute.xlu0 %324
  %326 = vset.pattern.permute.xlu0 0
  %327 = vperm.xlu0 %326, %v286
  %v328 = vpop.permute.xlu0 %327
  %329 = vset.pattern.permute.xlu0 0
  %330 = vperm.xlu0 %329, %v287
  %v331 = vpop.permute.xlu0 %330
  %332 = vset.pattern.permute.xlu0 0
  %333 = vperm.xlu0 %332, %v288
  %v334 = vpop.permute.xlu0 %333
  %335 = vset.pattern.permute.xlu0 0
  %336 = vperm.xlu0 %335, %v289
  %v337 = vpop.permute.xlu0 %336
  %338 = vset.pattern.permute.xlu0 0
  %339 = vperm.xlu0 %338, %v290
  %v340 = vpop.permute.xlu0 %339
  %341 = vset.pattern.permute.xlu0 0
  %342 = vperm.xlu0 %341, %v291
  %v343 = vpop.permute.xlu0 %342
  %344 = vset.pattern.permute.xlu0 0
  %345 = vperm.xlu0 %344, %v292
  %v346 = vpop.permute.xlu0 %345
  %347 = vset.pattern.permute.xlu0 0
  %348 = vperm.xlu0 %347, %v293
  %v349 = vpop.permute.xlu0 %348
  %350 = vset.pattern.permute.xlu0 0
  %351 = vperm.xlu0 %350, %v294
  %v352 = vpop.permute.xlu0 %351
  %353 = vset.pattern.permute.xlu0 0
  %354 = vperm.xlu0 %353, %v295
  %v355 = vpop.permute.xlu0 %354
  %356 = vset.pattern.permute.xlu0 0
  %357 = vperm.xlu0 %356, %v296
  %v358 = vpop.permute.xlu0 %357
  %359 = vset.pattern.permute.xlu0 0
  %360 = vperm.xlu0 %359, %v297
  %v361 = vpop.permute.xlu0 %360
  %vm362 = vcmp.eq.s32.totalorder %v281, %v316
  %vm363 = vcmp.eq.s32.totalorder %v281, %v319
  %vm364 = vcmp.eq.s32.totalorder %v281, %v322
  %vm365 = vcmp.eq.s32.totalorder %v281, %v325
  %vm366 = vcmp.eq.s32.totalorder %v281, %v328
  %vm367 = vcmp.eq.s32.totalorder %v281, %v331
  %vm368 = vcmp.eq.s32.totalorder %v281, %v334
  %vm369 = vcmp.eq.s32.totalorder %v281, %v337
  %vm370 = vcmp.eq.s32.totalorder %v281, %v340
  %vm371 = vcmp.eq.s32.totalorder %v281, %v343
  %vm372 = vcmp.eq.s32.totalorder %v281, %v346
  %vm373 = vcmp.eq.s32.totalorder %v281, %v349
  %vm374 = vcmp.eq.s32.totalorder %v281, %v352
  %vm375 = vcmp.eq.s32.totalorder %v281, %v355
  %vm376 = vcmp.eq.s32.totalorder %v281, %v358
  %vm377 = vcmp.eq.s32.totalorder %v281, %v361
  %v378 = vsel %vm362, %v261, 0.0
  %v379 = vsel %vm363, %v262, 0.0
  %v380 = vsel %vm364, %v263, 0.0
  %v381 = vsel %vm365, %v264, 0.0
  %v382 = vsel %vm366, %v265, 0.0
  %v383 = vsel %vm367, %v266, 0.0
  %v384 = vsel %vm368, %v267, 0.0
  %v385 = vsel %vm369, %v268, 0.0
  %v386 = vsel %vm370, %v269, 0.0
  %v387 = vsel %vm371, %v270, 0.0
  %v388 = vsel %vm372, %v271, 0.0
  %v389 = vsel %vm373, %v272, 0.0
  %v390 = vsel %vm374, %v273, 0.0
  %v391 = vsel %vm375, %v274, 0.0
  %v392 = vsel %vm376, %v275, 0.0
  %v393 = vsel %vm377, %v276, 0.0
  %394 = vadd.xlane.f32.xlu0 %v378
  %v395 = vpop.xlane.xlu0 %394
  %396 = vadd.xlane.f32.xlu0 %v379
  %v397 = vpop.xlane.xlu0 %396
  %398 = vadd.xlane.f32.xlu0 %v380
  %v399 = vpop.xlane.xlu0 %398
  %400 = vadd.xlane.f32.xlu0 %v381
  %v401 = vpop.xlane.xlu0 %400
  %402 = vadd.xlane.f32.xlu0 %v382
  %v403 = vpop.xlane.xlu0 %402
  %404 = vadd.xlane.f32.xlu0 %v383
  %v405 = vpop.xlane.xlu0 %404
  %406 = vadd.xlane.f32.xlu0 %v384
  %v407 = vpop.xlane.xlu0 %406
  %408 = vadd.xlane.f32.xlu0 %v385
  %v409 = vpop.xlane.xlu0 %408
  %410 = vadd.xlane.f32.xlu0 %v386
  %v411 = vpop.xlane.xlu0 %410
  %412 = vadd.xlane.f32.xlu0 %v387
  %v413 = vpop.xlane.xlu0 %412
  %414 = vadd.xlane.f32.xlu0 %v388
  %v415 = vpop.xlane.xlu0 %414
  %416 = vadd.xlane.f32.xlu0 %v389
  %v417 = vpop.xlane.xlu0 %416
  %418 = vadd.xlane.f32.xlu0 %v390
  %v419 = vpop.xlane.xlu0 %418
  %420 = vadd.xlane.f32.xlu0 %v391
  %v421 = vpop.xlane.xlu0 %420
  %422 = vadd.xlane.f32.xlu0 %v392
  %v423 = vpop.xlane.xlu0 %422
  %424 = vadd.xlane.f32.xlu0 %v393
  %v425 = vpop.xlane.xlu0 %424
  %v426 = vadd.f32 %v298, %v395
  %v427 = vadd.f32 %v299, %v397
  %v428 = vadd.f32 %v300, %v399
  %v429 = vadd.f32 %v301, %v401
  %v430 = vadd.f32 %v302, %v403
  %v431 = vadd.f32 %v303, %v405
  %v432 = vadd.f32 %v304, %v407
  %v433 = vadd.f32 %v305, %v409
  %v434 = vadd.f32 %v306, %v411
  %v435 = vadd.f32 %v307, %v413
  %v436 = vadd.f32 %v308, %v415
  %v437 = vadd.f32 %v309, %v417
  %v438 = vadd.f32 %v310, %v419
  %v439 = vadd.f32 %v311, %v421
  %v440 = vadd.f32 %v312, %v423
  %v441 = vadd.f32 %v313, %v425
  %vm442 = vcmask 7168
  %443 = vst.msk [vmem:[#allocation4] sm:$0xff] %vm442, %v426
  %444 = vst.msk [vmem:[#allocation4 + $0x8] sm:$0xff] %vm442, %v427
  %445 = vst.msk [vmem:[#allocation4 + $0x10] sm:$0xff] %vm442, %v428
  %446 = vst.msk [vmem:[#allocation4 + $0x18] sm:$0xff] %vm442, %v429
  %447 = vst.msk [vmem:[#allocation4 + $0x20] sm:$0xff] %vm442, %v430
  %448 = vst.msk [vmem:[#allocation4 + $0x28] sm:$0xff] %vm442, %v431
  %449 = vst.msk [vmem:[#allocation4 + $0x30] sm:$0xff] %vm442, %v432
  %450 = vst.msk [vmem:[#allocation4 + $0x38] sm:$0xff] %vm442, %v433
  %451 = vst.msk [vmem:[#allocation4 + $0x40] sm:$0xff] %vm442, %v434
  %452 = vst.msk [vmem:[#allocation4 + $0x48] sm:$0xff] %vm442, %v435
  %453 = vst.msk [vmem:[#allocation4 + $0x50] sm:$0xff] %vm442, %v436
  %454 = vst.msk [vmem:[#allocation4 + $0x58] sm:$0xff] %vm442, %v437
  %455 = vst.msk [vmem:[#allocation4 + $0x60] sm:$0xff] %vm442, %v438
  %456 = vst.msk [vmem:[#allocation4 + $0x68] sm:$0xff] %vm442, %v439
  %457 = vst.msk [vmem:[#allocation4 + $0x70] sm:$0xff] %vm442, %v440
  %458 = vst.msk [vmem:[#allocation4 + $0x78] sm:$0xff] %vm442, %v441
  %v459 = vld [vmem:[#allocation2] sm:$0xff]
  %v460 = vld [vmem:[#allocation2 + $0x8] sm:$0xff]
  %v461 = vld [vmem:[#allocation2 + $0x10] sm:$0xff]
  %v462 = vld [vmem:[#allocation2 + $0x18] sm:$0xff]
  %v463 = vld [vmem:[#allocation2 + $0x20] sm:$0xff]
  %v464 = vld [vmem:[#allocation2 + $0x28] sm:$0xff]
  %v465 = vld [vmem:[#allocation2 + $0x30] sm:$0xff]
  %v466 = vld [vmem:[#allocation2 + $0x38] sm:$0xff]
  %v467 = vld [vmem:[#allocation2 + $0x40] sm:$0xff]
  %v468 = vld [vmem:[#allocation2 + $0x48] sm:$0xff]
  %v469 = vld [vmem:[#allocation2 + $0x50] sm:$0xff]
  %v470 = vld [vmem:[#allocation2 + $0x58] sm:$0xff]
  %v471 = vld [vmem:[#allocation2 + $0x60] sm:$0xff]
  %v472 = vld [vmem:[#allocation2 + $0x68] sm:$0xff]
  %v473 = vld [vmem:[#allocation2 + $0x70] sm:$0xff]
  %v474 = vld [vmem:[#allocation2 + $0x78] sm:$0xff]
  %475 = vmax.xlane.f32.xlu0 %v261
  %v476 = vpop.xlane.xlu0 %475
  %477 = vmax.xlane.f32.xlu0 %v262
  %v478 = vpop.xlane.xlu0 %477
  %479 = vmax.xlane.f32.xlu0 %v263
  %v480 = vpop.xlane.xlu0 %479
  %481 = vmax.xlane.f32.xlu0 %v264
  %v482 = vpop.xlane.xlu0 %481
  %483 = vmax.xlane.f32.xlu0 %v265
  %v484 = vpop.xlane.xlu0 %483
  %485 = vmax.xlane.f32.xlu0 %v266
  %v486 = vpop.xlane.xlu0 %485
  %487 = vmax.xlane.f32.xlu0 %v267
  %v488 = vpop.xlane.xlu0 %487
  %489 = vmax.xlane.f32.xlu0 %v268
  %v490 = vpop.xlane.xlu0 %489
  %491 = vmax.xlane.f32.xlu0 %v269
  %v492 = vpop.xlane.xlu0 %491
  %493 = vmax.xlane.f32.xlu0 %v270
  %v494 = vpop.xlane.xlu0 %493
  %495 = vmax.xlane.f32.xlu0 %v271
  %v496 = vpop.xlane.xlu0 %495
  %497 = vmax.xlane.f32.xlu0 %v272
  %v498 = vpop.xlane.xlu0 %497
  %499 = vmax.xlane.f32.xlu0 %v273
  %v500 = vpop.xlane.xlu0 %499
  %501 = vmax.xlane.f32.xlu0 %v274
  %v502 = vpop.xlane.xlu0 %501
  %503 = vmax.xlane.f32.xlu0 %v275
  %v504 = vpop.xlane.xlu0 %503
  %505 = vmax.xlane.f32.xlu0 %v276
  %v506 = vpop.xlane.xlu0 %505
  %v507 = vmax.f32 %v459, %v476
  %v508 = vmax.f32 %v460, %v478
  %v509 = vmax.f32 %v461, %v480
  %v510 = vmax.f32 %v462, %v482
  %v511 = vmax.f32 %v463, %v484
  %v512 = vmax.f32 %v464, %v486
  %v513 = vmax.f32 %v465, %v488
  %v514 = vmax.f32 %v466, %v490
  %v515 = vmax.f32 %v467, %v492
  %v516 = vmax.f32 %v468, %v494
  %v517 = vmax.f32 %v469, %v496
  %v518 = vmax.f32 %v470, %v498
  %v519 = vmax.f32 %v471, %v500
  %v520 = vmax.f32 %v472, %v502
  %v521 = vmax.f32 %v473, %v504
  %v522 = vmax.f32 %v474, %v506
  %v523 = vld [vmem:[#allocation3] sm:$0xff]
  %v524 = vld [vmem:[#allocation3 + $0x8] sm:$0xff]
  %v525 = vld [vmem:[#allocation3 + $0x10] sm:$0xff]
  %v526 = vld [vmem:[#allocation3 + $0x18] sm:$0xff]
  %v527 = vld [vmem:[#allocation3 + $0x20] sm:$0xff]
  %v528 = vld [vmem:[#allocation3 + $0x28] sm:$0xff]
  %v529 = vld [vmem:[#allocation3 + $0x30] sm:$0xff]
  %v530 = vld [vmem:[#allocation3 + $0x38] sm:$0xff]
  %v531 = vld [vmem:[#allocation3 + $0x40] sm:$0xff]
  %v532 = vld [vmem:[#allocation3 + $0x48] sm:$0xff]
  %v533 = vld [vmem:[#allocation3 + $0x50] sm:$0xff]
  %v534 = vld [vmem:[#allocation3 + $0x58] sm:$0xff]
  %v535 = vld [vmem:[#allocation3 + $0x60] sm:$0xff]
  %v536 = vld [vmem:[#allocation3 + $0x68] sm:$0xff]
  %v537 = vld [vmem:[#allocation3 + $0x70] sm:$0xff]
  %v538 = vld [vmem:[#allocation3 + $0x78] sm:$0xff]
  %v539 = vsub.f32 %v459, %v507
  %v540 = vsub.f32 %v460, %v508
  %v541 = vsub.f32 %v461, %v509
  %v542 = vsub.f32 %v462, %v510
  %v543 = vsub.f32 %v463, %v511
  %v544 = vsub.f32 %v464, %v512
  %v545 = vsub.f32 %v465, %v513
  %v546 = vsub.f32 %v466, %v514
  %v547 = vsub.f32 %v467, %v515
  %v548 = vsub.f32 %v468, %v516
  %v549 = vsub.f32 %v469, %v517
  %v550 = vsub.f32 %v470, %v518
  %v551 = vsub.f32 %v471, %v519
  %v552 = vsub.f32 %v472, %v520
  %v553 = vsub.f32 %v473, %v521
  %v554 = vsub.f32 %v474, %v522
  %v555 = vmul.f32 %v539, 1.442695
  %v556 = vpow.pop %v555
  %v557 = vmul.f32 %v540, 1.442695
  %v558 = vpow.pop %v557
  %v559 = vmul.f32 %v541, 1.442695
  %v560 = vpow.pop %v559
  %v561 = vmul.f32 %v542, 1.442695
  %v562 = vpow.pop %v561
  %v563 = vmul.f32 %v543, 1.442695
  %v564 = vpow.pop %v563
  %v565 = vmul.f32 %v544, 1.442695
  %v566 = vpow.pop %v565
  %v567 = vmul.f32 %v545, 1.442695
  %v568 = vpow.pop %v567
  %v569 = vmul.f32 %v546, 1.442695
  %v570 = vpow.pop %v569
  %v571 = vmul.f32 %v547, 1.442695
  %v572 = vpow.pop %v571
  %v573 = vmul.f32 %v548, 1.442695
  %v574 = vpow.pop %v573
  %v575 = vmul.f32 %v549, 1.442695
  %v576 = vpow.pop %v575
  %v577 = vmul.f32 %v550, 1.442695
  %v578 = vpow.pop %v577
  %v579 = vmul.f32 %v551, 1.442695
  %v580 = vpow.pop %v579
  %v581 = vmul.f32 %v552, 1.442695
  %v582 = vpow.pop %v581
  %v583 = vmul.f32 %v553, 1.442695
  %v584 = vpow.pop %v583
  %v585 = vmul.f32 %v554, 1.442695
  %v586 = vpow.pop %v585
  %v587 = vmul.f32 %v523, %v556
  %v588 = vmul.f32 %v524, %v558
  %v589 = vmul.f32 %v525, %v560
  %v590 = vmul.f32 %v526, %v562
  %v591 = vmul.f32 %v527, %v564
  %v592 = vmul.f32 %v528, %v566
  %v593 = vmul.f32 %v529, %v568
  %v594 = vmul.f32 %v530, %v570
  %v595 = vmul.f32 %v531, %v572
  %v596 = vmul.f32 %v532, %v574
  %v597 = vmul.f32 %v533, %v576
  %v598 = vmul.f32 %v534, %v578
  %v599 = vmul.f32 %v535, %v580
  %v600 = vmul.f32 %v536, %v582
  %v601 = vmul.f32 %v537, %v584
  %v602 = vmul.f32 %v538, %v586
  %604 = vset.pattern.permute.xlu0 0
  %605 = vperm.xlu0 %604, %v507
  %v606 = vpop.permute.xlu0 %605
  %609 = vset.pattern.permute.xlu0 0
  %610 = vperm.xlu0 %609, %v508
  %v611 = vpop.permute.xlu0 %610
  %614 = vset.pattern.permute.xlu0 0
  %615 = vperm.xlu0 %614, %v509
  %v616 = vpop.permute.xlu0 %615
  %619 = vset.pattern.permute.xlu0 0
  %620 = vperm.xlu0 %619, %v510
  %v621 = vpop.permute.xlu0 %620
  %624 = vset.pattern.permute.xlu0 0
  %625 = vperm.xlu0 %624, %v511
  %v626 = vpop.permute.xlu0 %625
  %629 = vset.pattern.permute.xlu0 0
  %630 = vperm.xlu0 %629, %v512
  %v631 = vpop.permute.xlu0 %630
  %634 = vset.pattern.permute.xlu0 0
  %635 = vperm.xlu0 %634, %v513
  %v636 = vpop.permute.xlu0 %635
  %639 = vset.pattern.permute.xlu0 0
  %640 = vperm.xlu0 %639, %v514
  %v641 = vpop.permute.xlu0 %640
  %644 = vset.pattern.permute.xlu0 0
  %645 = vperm.xlu0 %644, %v515
  %v646 = vpop.permute.xlu0 %645
  %649 = vset.pattern.permute.xlu0 0
  %650 = vperm.xlu0 %649, %v516
  %v651 = vpop.permute.xlu0 %650
  %654 = vset.pattern.permute.xlu0 0
  %655 = vperm.xlu0 %654, %v517
  %v656 = vpop.permute.xlu0 %655
  %659 = vset.pattern.permute.xlu0 0
  %660 = vperm.xlu0 %659, %v518
  %v661 = vpop.permute.xlu0 %660
  %664 = vset.pattern.permute.xlu0 0
  %665 = vperm.xlu0 %664, %v519
  %v666 = vpop.permute.xlu0 %665
  %669 = vset.pattern.permute.xlu0 0
  %670 = vperm.xlu0 %669, %v520
  %v671 = vpop.permute.xlu0 %670
  %674 = vset.pattern.permute.xlu0 0
  %675 = vperm.xlu0 %674, %v521
  %v676 = vpop.permute.xlu0 %675
  %679 = vset.pattern.permute.xlu0 0
  %680 = vperm.xlu0 %679, %v522
  %v681 = vpop.permute.xlu0 %680
  %v683 = vsub.f32 %v261, %v606
  %v684 = vsub.f32 %v262, %v611
  %v685 = vsub.f32 %v263, %v616
  %v686 = vsub.f32 %v264, %v621
  %v687 = vsub.f32 %v265, %v626
  %v688 = vsub.f32 %v266, %v631
  %v689 = vsub.f32 %v267, %v636
  %v690 = vsub.f32 %v268, %v641
  %v691 = vsub.f32 %v269, %v646
  %v692 = vsub.f32 %v270, %v651
  %v693 = vsub.f32 %v271, %v656
  %v694 = vsub.f32 %v272, %v661
  %v695 = vsub.f32 %v273, %v666
  %v696 = vsub.f32 %v274, %v671
  %v697 = vsub.f32 %v275, %v676
  %v698 = vsub.f32 %v276, %v681
  %v699 = vmul.f32 %v683, 1.442695
  %v700 = vpow.pop %v699
  %v701 = vmul.f32 %v684, 1.442695
  %v702 = vpow.pop %v701
  %v703 = vmul.f32 %v685, 1.442695
  %v704 = vpow.pop %v703
  %v705 = vmul.f32 %v686, 1.442695
  %v706 = vpow.pop %v705
  %v707 = vmul.f32 %v687, 1.442695
  %v708 = vpow.pop %v707
  %v709 = vmul.f32 %v688, 1.442695
  %v710 = vpow.pop %v709
  %v711 = vmul.f32 %v689, 1.442695
  %v712 = vpow.pop %v711
  %v713 = vmul.f32 %v690, 1.442695
  %v714 = vpow.pop %v713
  %v715 = vmul.f32 %v691, 1.442695
  %v716 = vpow.pop %v715
  %v717 = vmul.f32 %v692, 1.442695
  %v718 = vpow.pop %v717
  %v719 = vmul.f32 %v693, 1.442695
  %v720 = vpow.pop %v719
  %v721 = vmul.f32 %v694, 1.442695
  %v722 = vpow.pop %v721
  %v723 = vmul.f32 %v695, 1.442695
  %v724 = vpow.pop %v723
  %v725 = vmul.f32 %v696, 1.442695
  %v726 = vpow.pop %v725
  %v727 = vmul.f32 %v697, 1.442695
  %v728 = vpow.pop %v727
  %v729 = vmul.f32 %v698, 1.442695
  %v730 = vpow.pop %v729
  %731 = vadd.xlane.f32.xlu0 %v700
  %v732 = vpop.xlane.xlu0 %731
  %733 = vadd.xlane.f32.xlu0 %v702
  %v734 = vpop.xlane.xlu0 %733
  %735 = vadd.xlane.f32.xlu0 %v704
  %v736 = vpop.xlane.xlu0 %735
  %737 = vadd.xlane.f32.xlu0 %v706
  %v738 = vpop.xlane.xlu0 %737
  %739 = vadd.xlane.f32.xlu0 %v708
  %v740 = vpop.xlane.xlu0 %739
  %741 = vadd.xlane.f32.xlu0 %v710
  %v742 = vpop.xlane.xlu0 %741
  %743 = vadd.xlane.f32.xlu0 %v712
  %v744 = vpop.xlane.xlu0 %743
  %745 = vadd.xlane.f32.xlu0 %v714
  %v746 = vpop.xlane.xlu0 %745
  %747 = vadd.xlane.f32.xlu0 %v716
  %v748 = vpop.xlane.xlu0 %747
  %749 = vadd.xlane.f32.xlu0 %v718
  %v750 = vpop.xlane.xlu0 %749
  %751 = vadd.xlane.f32.xlu0 %v720
  %v752 = vpop.xlane.xlu0 %751
  %753 = vadd.xlane.f32.xlu0 %v722
  %v754 = vpop.xlane.xlu0 %753
  %755 = vadd.xlane.f32.xlu0 %v724
  %v756 = vpop.xlane.xlu0 %755
  %757 = vadd.xlane.f32.xlu0 %v726
  %v758 = vpop.xlane.xlu0 %757
  %759 = vadd.xlane.f32.xlu0 %v728
  %v760 = vpop.xlane.xlu0 %759
  %761 = vadd.xlane.f32.xlu0 %v730
  %v762 = vpop.xlane.xlu0 %761
  %v763 = vadd.f32 %v587, %v732
  %v764 = vadd.f32 %v588, %v734
  %v765 = vadd.f32 %v589, %v736
  %v766 = vadd.f32 %v590, %v738
  %v767 = vadd.f32 %v591, %v740
  %v768 = vadd.f32 %v592, %v742
  %v769 = vadd.f32 %v593, %v744
  %v770 = vadd.f32 %v594, %v746
  %v771 = vadd.f32 %v595, %v748
  %v772 = vadd.f32 %v596, %v750
  %v773 = vadd.f32 %v597, %v752
  %v774 = vadd.f32 %v598, %v754
  %v775 = vadd.f32 %v599, %v756
  %v776 = vadd.f32 %v600, %v758
  %v777 = vadd.f32 %v601, %v760
  %v778 = vadd.f32 %v602, %v762
  %779 = vst.msk [vmem:[#allocation3] sm:$0xff] %vm442, %v763
  %780 = vst.msk [vmem:[#allocation3 + $0x8] sm:$0xff] %vm442, %v764
  %781 = vst.msk [vmem:[#allocation3 + $0x10] sm:$0xff] %vm442, %v765
  %782 = vst.msk [vmem:[#allocation3 + $0x18] sm:$0xff] %vm442, %v766
  %783 = vst.msk [vmem:[#allocation3 + $0x20] sm:$0xff] %vm442, %v767
  %784 = vst.msk [vmem:[#allocation3 + $0x28] sm:$0xff] %vm442, %v768
  %785 = vst.msk [vmem:[#allocation3 + $0x30] sm:$0xff] %vm442, %v769
  %786 = vst.msk [vmem:[#allocation3 + $0x38] sm:$0xff] %vm442, %v770
  %787 = vst.msk [vmem:[#allocation3 + $0x40] sm:$0xff] %vm442, %v771
  %788 = vst.msk [vmem:[#allocation3 + $0x48] sm:$0xff] %vm442, %v772
  %789 = vst.msk [vmem:[#allocation3 + $0x50] sm:$0xff] %vm442, %v773
  %790 = vst.msk [vmem:[#allocation3 + $0x58] sm:$0xff] %vm442, %v774
  %791 = vst.msk [vmem:[#allocation3 + $0x60] sm:$0xff] %vm442, %v775
  %792 = vst.msk [vmem:[#allocation3 + $0x68] sm:$0xff] %vm442, %v776
  %793 = vst.msk [vmem:[#allocation3 + $0x70] sm:$0xff] %vm442, %v777
  %794 = vst.msk [vmem:[#allocation3 + $0x78] sm:$0xff] %vm442, %v778
  %795 = vst.msk [vmem:[#allocation2] sm:$0xff] %vm442, %v507
  %796 = vst.msk [vmem:[#allocation2 + $0x8] sm:$0xff] %vm442, %v508
  %797 = vst.msk [vmem:[#allocation2 + $0x10] sm:$0xff] %vm442, %v509
  %798 = vst.msk [vmem:[#allocation2 + $0x18] sm:$0xff] %vm442, %v510
  %799 = vst.msk [vmem:[#allocation2 + $0x20] sm:$0xff] %vm442, %v511
  %800 = vst.msk [vmem:[#allocation2 + $0x28] sm:$0xff] %vm442, %v512
  %801 = vst.msk [vmem:[#allocation2 + $0x30] sm:$0xff] %vm442, %v513
  %802 = vst.msk [vmem:[#allocation2 + $0x38] sm:$0xff] %vm442, %v514
  %803 = vst.msk [vmem:[#allocation2 + $0x40] sm:$0xff] %vm442, %v515
  %804 = vst.msk [vmem:[#allocation2 + $0x48] sm:$0xff] %vm442, %v516
  %805 = vst.msk [vmem:[#allocation2 + $0x50] sm:$0xff] %vm442, %v517
  %806 = vst.msk [vmem:[#allocation2 + $0x58] sm:$0xff] %vm442, %v518
  %807 = vst.msk [vmem:[#allocation2 + $0x60] sm:$0xff] %vm442, %v519
  %808 = vst.msk [vmem:[#allocation2 + $0x68] sm:$0xff] %vm442, %v520
  %809 = vst.msk [vmem:[#allocation2 + $0x70] sm:$0xff] %vm442, %v521
  %810 = vst.msk [vmem:[#allocation2 + $0x78] sm:$0xff] %vm442, %v522
  // Predicated region
  $region18: #{gpt_forward.113} parent=0 // pred_check
    %p811 = pneg %p15
  $region19: #{gpt_forward.113} parent=0 // pred_check_branch
    %813 = sbr.rel (%p811) target = $region21
  $region20: #{gpt_forward.113} parent=0 // pred_region
    %v814 = vld [vmem:[#allocation2] sm:$0xff]
    %v815 = vld [vmem:[#allocation2 + $0x8] sm:$0xff]
    %v816 = vld [vmem:[#allocation2 + $0x10] sm:$0xff]
    %v817 = vld [vmem:[#allocation2 + $0x18] sm:$0xff]
    %v818 = vld [vmem:[#allocation2 + $0x20] sm:$0xff]
    %v819 = vld [vmem:[#allocation2 + $0x28] sm:$0xff]
    %v820 = vld [vmem:[#allocation2 + $0x30] sm:$0xff]
    %v821 = vld [vmem:[#allocation2 + $0x38] sm:$0xff]
    %v822 = vld [vmem:[#allocation2 + $0x40] sm:$0xff]
    %v823 = vld [vmem:[#allocation2 + $0x48] sm:$0xff]
    %v824 = vld [vmem:[#allocation2 + $0x50] sm:$0xff]
    %v825 = vld [vmem:[#allocation2 + $0x58] sm:$0xff]
    %v826 = vld [vmem:[#allocation2 + $0x60] sm:$0xff]
    %v827 = vld [vmem:[#allocation2 + $0x68] sm:$0xff]
    %v828 = vld [vmem:[#allocation2 + $0x70] sm:$0xff]
    %v829 = vld [vmem:[#allocation2 + $0x78] sm:$0xff]
    %v830 = vld [vmem:[#allocation3] sm:$0xff]
    %v831 = vld [vmem:[#allocation3 + $0x8] sm:$0xff]
    %v832 = vld [vmem:[#allocation3 + $0x10] sm:$0xff]
    %v833 = vld [vmem:[#allocation3 + $0x18] sm:$0xff]
    %v834 = vld [vmem:[#allocation3 + $0x20] sm:$0xff]
    %v835 = vld [vmem:[#allocation3 + $0x28] sm:$0xff]
    %v836 = vld [vmem:[#allocation3 + $0x30] sm:$0xff]
    %v837 = vld [vmem:[#allocation3 + $0x38] sm:$0xff]
    %v838 = vld [vmem:[#allocation3 + $0x40] sm:$0xff]
    %v839 = vld [vmem:[#allocation3 + $0x48] sm:$0xff]
    %v840 = vld [vmem:[#allocation3 + $0x50] sm:$0xff]
    %v841 = vld [vmem:[#allocation3 + $0x58] sm:$0xff]
    %v842 = vld [vmem:[#allocation3 + $0x60] sm:$0xff]
    %v843 = vld [vmem:[#allocation3 + $0x68] sm:$0xff]
    %v844 = vld [vmem:[#allocation3 + $0x70] sm:$0xff]
    %v845 = vld [vmem:[#allocation3 + $0x78] sm:$0xff]
    %v846 = vlog2.pop %v830
    %v847 = vmul.f32 %v846, 0.6931472
    %v848 = vlog2.pop %v831
    %v849 = vmul.f32 %v848, 0.6931472
    %v850 = vlog2.pop %v832
    %v851 = vmul.f32 %v850, 0.6931472
    %v852 = vlog2.pop %v833
    %v853 = vmul.f32 %v852, 0.6931472
    %v854 = vlog2.pop %v834
    %v855 = vmul.f32 %v854, 0.6931472
    %v856 = vlog2.pop %v835
    %v857 = vmul.f32 %v856, 0.6931472
    %v858 = vlog2.pop %v836
    %v859 = vmul.f32 %v858, 0.6931472
    %v860 = vlog2.pop %v837
    %v861 = vmul.f32 %v860, 0.6931472
    %v862 = vlog2.pop %v838
    %v863 = vmul.f32 %v862, 0.6931472
    %v864 = vlog2.pop %v839
    %v865 = vmul.f32 %v864, 0.6931472
    %v866 = vlog2.pop %v840
    %v867 = vmul.f32 %v866, 0.6931472
    %v868 = vlog2.pop %v841
    %v869 = vmul.f32 %v868, 0.6931472
    %v870 = vlog2.pop %v842
    %v871 = vmul.f32 %v870, 0.6931472
    %v872 = vlog2.pop %v843
    %v873 = vmul.f32 %v872, 0.6931472
    %v874 = vlog2.pop %v844
    %v875 = vmul.f32 %v874, 0.6931472
    %v876 = vlog2.pop %v845
    %v877 = vmul.f32 %v876, 0.6931472
    %v878 = vadd.f32 %v814, %v847
    %v879 = vadd.f32 %v815, %v849
    %v880 = vadd.f32 %v816, %v851
    %v881 = vadd.f32 %v817, %v853
    %v882 = vadd.f32 %v818, %v855
    %v883 = vadd.f32 %v819, %v857
    %v884 = vadd.f32 %v820, %v859
    %v885 = vadd.f32 %v821, %v861
    %v886 = vadd.f32 %v822, %v863
    %v887 = vadd.f32 %v823, %v865
    %v888 = vadd.f32 %v824, %v867
    %v889 = vadd.f32 %v825, %v869
    %v890 = vadd.f32 %v826, %v871
    %v891 = vadd.f32 %v827, %v873
    %v892 = vadd.f32 %v828, %v875
    %v893 = vadd.f32 %v829, %v877
    %v894 = vld [vmem:[#allocation4] sm:$0xff]
    %v895 = vld [vmem:[#allocation4 + $0x8] sm:$0xff]
    %v896 = vld [vmem:[#allocation4 + $0x10] sm:$0xff]
    %v897 = vld [vmem:[#allocation4 + $0x18] sm:$0xff]
    %v898 = vld [vmem:[#allocation4 + $0x20] sm:$0xff]
    %v899 = vld [vmem:[#allocation4 + $0x28] sm:$0xff]
    %v900 = vld [vmem:[#allocation4 + $0x30] sm:$0xff]
    %v901 = vld [vmem:[#allocation4 + $0x38] sm:$0xff]
    %v902 = vld [vmem:[#allocation4 + $0x40] sm:$0xff]
    %v903 = vld [vmem:[#allocation4 + $0x48] sm:$0xff]
    %v904 = vld [vmem:[#allocation4 + $0x50] sm:$0xff]
    %v905 = vld [vmem:[#allocation4 + $0x58] sm:$0xff]
    %v906 = vld [vmem:[#allocation4 + $0x60] sm:$0xff]
    %v907 = vld [vmem:[#allocation4 + $0x68] sm:$0xff]
    %v908 = vld [vmem:[#allocation4 + $0x70] sm:$0xff]
    %v909 = vld [vmem:[#allocation4 + $0x78] sm:$0xff]
    %v910 = vsub.f32 %v878, %v894
    %v911 = vsub.f32 %v879, %v895
    %v912 = vsub.f32 %v880, %v896
    %v913 = vsub.f32 %v881, %v897
    %v914 = vsub.f32 %v882, %v898
    %v915 = vsub.f32 %v883, %v899
    %v916 = vsub.f32 %v884, %v900
    %v917 = vsub.f32 %v885, %v901
    %v918 = vsub.f32 %v886, %v902
    %v919 = vsub.f32 %v887, %v903
    %v920 = vsub.f32 %v888, %v904
    %v921 = vsub.f32 %v889, %v905
    %v922 = vsub.f32 %v890, %v906
    %v923 = vsub.f32 %v891, %v907
    %v924 = vsub.f32 %v892, %v908
    %v925 = vsub.f32 %v893, %v909
    %926 = vst.msk [vmem:[%s3] sm:$0xff] %vm442, %v910
    %927 = vst.msk [vmem:[%s3 + $0x8] sm:$0xff] %vm442, %v911
    %928 = vst.msk [vmem:[%s3 + $0x10] sm:$0xff] %vm442, %v912
    %929 = vst.msk [vmem:[%s3 + $0x18] sm:$0xff] %vm442, %v913
    %930 = vst.msk [vmem:[%s3 + $0x20] sm:$0xff] %vm442, %v914
    %931 = vst.msk [vmem:[%s3 + $0x28] sm:$0xff] %vm442, %v915
    %932 = vst.msk [vmem:[%s3 + $0x30] sm:$0xff] %vm442, %v916
    %933 = vst.msk [vmem:[%s3 + $0x38] sm:$0xff] %vm442, %v917
    %934 = vst.msk [vmem:[%s3 + $0x40] sm:$0xff] %vm442, %v918
    %935 = vst.msk [vmem:[%s3 + $0x48] sm:$0xff] %vm442, %v919
    %936 = vst.msk [vmem:[%s3 + $0x50] sm:$0xff] %vm442, %v920
    %937 = vst.msk [vmem:[%s3 + $0x58] sm:$0xff] %vm442, %v921
    %938 = vst.msk [vmem:[%s3 + $0x60] sm:$0xff] %vm442, %v922
    %939 = vst.msk [vmem:[%s3 + $0x68] sm:$0xff] %vm442, %v923
    %940 = vst.msk [vmem:[%s3 + $0x70] sm:$0xff] %vm442, %v924
    %941 = vst.msk [vmem:[%s3 + $0x78] sm:$0xff] %vm442, %v925
  $region21: #{gpt_forward.113} parent=0 // pred_fallthru
    _
  // Predicated region
  $region22: #{gpt_forward.113} parent=0 // pred_check
    _
  $region23: #{gpt_forward.113} parent=0 // pred_check_branch
    %943 = sbr.rel (0) target = $region25
  $region24: #{gpt_forward.113} parent=0 // pred_region
    _
  $region25: #{gpt_forward.113} parent=0 // pred_fallthru
    _
  // Predicated region
  $region26: #{gpt_forward.113} parent=0 // pred_check
    _
  $region27: #{gpt_forward.113} parent=0 // pred_check_branch
    %945 = sbr.rel (0) target = $region29
  $region28: #{gpt_forward.113} parent=0 // pred_region
    _
  $region29: #{gpt_forward.113} parent=0 // pred_fallthru
    _

// kernel: gpt_forward.65
$region0: #{gpt_forward.65}
  #allocation0 [shape = 'u32[]', space=smem, size = 0x4, offset = 0x4, fixed_abs, tag = 'smem constant byte address 0x4 - core index']
  #allocation1 [shape = 'u32[144,128]{1,0:T(1,128)}', space=vmem, size = 0x12000, scoped, tag = 'internal scratch']
  #allocation2 [shape = 'f32[128,512]{1,0:T(8,128)}', space=vmem, size = 0x40000, scoped, tag = 'scratch operand']
  %s0 = inlined_call_operand.vmem [shape: f32[128,128], index: 0, kind: input, shape index: {}]
  %s1 = inlined_call_operand.vmem [shape: f32[512,128], index: 1, kind: input, shape index: {}]
  %s2 = inlined_call_operand.vmem [shape: f32[128,512], index: 2, kind: output, shape index: {}]
  %s3 = sld [smem:[#allocation0]]
  $region26: #{gpt_forward.65} parent=0
    _
  %s5 = ssub.s32 1, %s3
  %s6 = scalar_select 0, %s5, %s3
  // Predicated region
  $region2: #{gpt_forward.65} parent=0 // pred_check
    _
  $region3: #{gpt_forward.65} parent=0 // pred_check_branch
    %8 = sbr.rel (0) target = $region5
  $region4: #{gpt_forward.65} parent=0 // pred_region
    _
  $region5: #{gpt_forward.65} parent=0 // pred_fallthru
    _
  // Predicated region
  $region6: #{gpt_forward.65} parent=0 // pred_check
    _
  $region7: #{gpt_forward.65} parent=0 // pred_check_branch
    %10 = sbr.rel (0) target = $region9
  $region8: #{gpt_forward.65} parent=0 // pred_region
    _
  $region9: #{gpt_forward.65} parent=0 // pred_fallthru
    _
  %p12 = scmp.eq.s32.totalorder 0, 0
  // Predicated region
  $region10: #{gpt_forward.65} parent=0 // pred_check
    %p13 = pneg %p12
  $region11: #{gpt_forward.65} parent=0 // pred_check_branch
    %15 = sbr.rel (%p13) target = $region13
  $region12: #{gpt_forward.65} parent=0 // pred_region
    %16 = vst [vmem:[#allocation2] sm:$0xff] 0.0
    %17 = vst [vmem:[#allocation2 + $0x8] sm:$0xff] 0.0
    %18 = vst [vmem:[#allocation2 + $0x10] sm:$0xff] 0.0
    %19 = vst [vmem:[#allocation2 + $0x18] sm:$0xff] 0.0
    %20 = vst [vmem:[#allocation2 + $0x20] sm:$0xff] 0.0
    %21 = vst [vmem:[#allocation2 + $0x28] sm:$0xff] 0.0
    %22 = vst [vmem:[#allocation2 + $0x30] sm:$0xff] 0.0
    %23 = vst [vmem:[#allocation2 + $0x38] sm:$0xff] 0.0
    %24 = vst [vmem:[#allocation2 + $0x40] sm:$0xff] 0.0
    %25 = vst [vmem:[#allocation2 + $0x48] sm:$0xff] 0.0
    %26 = vst [vmem:[#allocation2 + $0x50] sm:$0xff] 0.0
    %27 = vst [vmem:[#allocation2 + $0x58] sm:$0xff] 0.0
    %28 = vst [vmem:[#allocation2 + $0x60] sm:$0xff] 0.0
    %29 = vst [vmem:[#allocation2 + $0x68] sm:$0xff] 0.0
    %30 = vst [vmem:[#allocation2 + $0x70] sm:$0xff] 0.0
    %31 = vst [vmem:[#allocation2 + $0x78] sm:$0xff] 0.0
    %32 = vst [vmem:[#allocation2 + $0x80] sm:$0xff] 0.0
    %33 = vst [vmem:[#allocation2 + $0x88] sm:$0xff] 0.0
    %34 = vst [vmem:[#allocation2 + $0x90] sm:$0xff] 0.0
    %35 = vst [vmem:[#allocation2 + $0x98] sm:$0xff] 0.0
    %36 = vst [vmem:[#allocation2 + $0xa0] sm:$0xff] 0.0
    %37 = vst [vmem:[#allocation2 + $0xa8] sm:$0xff] 0.0
    %38 = vst [vmem:[#allocation2 + $0xb0] sm:$0xff] 0.0
    %39 = vst [vmem:[#allocation2 + $0xb8] sm:$0xff] 0.0
    %40 = vst [vmem:[#allocation2 + $0xc0] sm:$0xff] 0.0
    %41 = vst [vmem:[#allocation2 + $0xc8] sm:$0xff] 0.0
    %42 = vst [vmem:[#allocation2 + $0xd0] sm:$0xff] 0.0
    %43 = vst [vmem:[#allocation2 + $0xd8] sm:$0xff] 0.0
    %44 = vst [vmem:[#allocation2 + $0xe0] sm:$0xff] 0.0
    %45 = vst [vmem:[#allocation2 + $0xe8] sm:$0xff] 0.0
    %46 = vst [vmem:[#allocation2 + $0xf0] sm:$0xff] 0.0
    %47 = vst [vmem:[#allocation2 + $0xf8] sm:$0xff] 0.0
    %48 = vst [vmem:[#allocation2 + $0x100] sm:$0xff] 0.0
    %49 = vst [vmem:[#allocation2 + $0x108] sm:$0xff] 0.0
    %50 = vst [vmem:[#allocation2 + $0x110] sm:$0xff] 0.0
    %51 = vst [vmem:[#allocation2 + $0x118] sm:$0xff] 0.0
    %52 = vst [vmem:[#allocation2 + $0x120] sm:$0xff] 0.0
    %53 = vst [vmem:[#allocation2 + $0x128] sm:$0xff] 0.0
    %54 = vst [vmem:[#allocation2 + $0x130] sm:$0xff] 0.0
    %55 = vst [vmem:[#allocation2 + $0x138] sm:$0xff] 0.0
    %56 = vst [vmem:[#allocation2 + $0x140] sm:$0xff] 0.0
    %57 = vst [vmem:[#allocation2 + $0x148] sm:$0xff] 0.0
    %58 = vst [vmem:[#allocation2 + $0x150] sm:$0xff] 0.0
    %59 = vst [vmem:[#allocation2 + $0x158] sm:$0xff] 0.0
    %60 = vst [vmem:[#allocation2 + $0x160] sm:$0xff] 0.0
    %61 = vst [vmem:[#allocation2 + $0x168] sm:$0xff] 0.0
    %62 = vst [vmem:[#allocation2 + $0x170] sm:$0xff] 0.0
    %63 = vst [vmem:[#allocation2 + $0x178] sm:$0xff] 0.0
    %64 = vst [vmem:[#allocation2 + $0x180] sm:$0xff] 0.0
    %65 = vst [vmem:[#allocation2 + $0x188] sm:$0xff] 0.0
    %66 = vst [vmem:[#allocation2 + $0x190] sm:$0xff] 0.0
    %67 = vst [vmem:[#allocation2 + $0x198] sm:$0xff] 0.0
    %68 = vst [vmem:[#allocation2 + $0x1a0] sm:$0xff] 0.0
    %69 = vst [vmem:[#allocation2 + $0x1a8] sm:$0xff] 0.0
    %70 = vst [vmem:[#allocation2 + $0x1b0] sm:$0xff] 0.0
    %71 = vst [vmem:[#allocation2 + $0x1b8] sm:$0xff] 0.0
    %72 = vst [vmem:[#allocation2 + $0x1c0] sm:$0xff] 0.0
    %73 = vst [vmem:[#allocation2 + $0x1c8] sm:$0xff] 0.0
    %74 = vst [vmem:[#allocation2 + $0x1d0] sm:$0xff] 0.0
    %75 = vst [vmem:[#allocation2 + $0x1d8] sm:$0xff] 0.0
    %76 = vst [vmem:[#allocation2 + $0x1e0] sm:$0xff] 0.0
    %77 = vst [vmem:[#allocation2 + $0x1e8] sm:$0xff] 0.0
    %78 = vst [vmem:[#allocation2 + $0x1f0] sm:$0xff] 0.0
    %79 = vst [vmem:[#allocation2 + $0x1f8] sm:$0xff] 0.0
  $region13: #{gpt_forward.65} parent=0 // pred_fallthru
    _
  %v80 = vld [vmem:[#allocation2] sm:$0xff]
  %v81 = vld [vmem:[#allocation2 + $0x8] sm:$0xff]
  %v82 = vld [vmem:[#allocation2 + $0x10] sm:$0xff]
  %v83 = vld [vmem:[#allocation2 + $0x18] sm:$0xff]
  %v84 = vld [vmem:[#allocation2 + $0x20] sm:$0xff]
  %v85 = vld [vmem:[#allocation2 + $0x28] sm:$0xff]
  %v86 = vld [vmem:[#allocation2 + $0x30] sm:$0xff]
  %v87 = vld [vmem:[#allocation2 + $0x38] sm:$0xff]
  %v88 = vld [vmem:[#allocation2 + $0x40] sm:$0xff]
  %v89 = vld [vmem:[#allocation2 + $0x48] sm:$0xff]
  %v90 = vld [vmem:[#allocation2 + $0x50] sm:$0xff]
  %v91 = vld [vmem:[#allocation2 + $0x58] sm:$0xff]
  %v92 = vld [vmem:[#allocation2 + $0x60] sm:$0xff]
  %v93 = vld [vmem:[#allocation2 + $0x68] sm:$0xff]
  %v94 = vld [vmem:[#allocation2 + $0x70] sm:$0xff]
  %v95 = vld [vmem:[#allocation2 + $0x78] sm:$0xff]
  %v96 = vld [vmem:[#allocation2 + $0x80] sm:$0xff]
  %v97 = vld [vmem:[#allocation2 + $0x88] sm:$0xff]
  %v98 = vld [vmem:[#allocation2 + $0x90] sm:$0xff]
  %v99 = vld [vmem:[#allocation2 + $0x98] sm:$0xff]
  %v100 = vld [vmem:[#allocation2 + $0xa0] sm:$0xff]
  %v101 = vld [vmem:[#allocation2 + $0xa8] sm:$0xff]
  %v102 = vld [vmem:[#allocation2 + $0xb0] sm:$0xff]
  %v103 = vld [vmem:[#allocation2 + $0xb8] sm:$0xff]
  %v104 = vld [vmem:[#allocation2 + $0xc0] sm:$0xff]
  %v105 = vld [vmem:[#allocation2 + $0xc8] sm:$0xff]
  %v106 = vld [vmem:[#allocation2 + $0xd0] sm:$0xff]
  %v107 = vld [vmem:[#allocation2 + $0xd8] sm:$0xff]
  %v108 = vld [vmem:[#allocation2 + $0xe0] sm:$0xff]
  %v109 = vld [vmem:[#allocation2 + $0xe8] sm:$0xff]
  %v110 = vld [vmem:[#allocation2 + $0xf0] sm:$0xff]
  %v111 = vld [vmem:[#allocation2 + $0xf8] sm:$0xff]
  %v112 = vld [vmem:[#allocation2 + $0x100] sm:$0xff]
  %v113 = vld [vmem:[#allocation2 + $0x108] sm:$0xff]
  %v114 = vld [vmem:[#allocation2 + $0x110] sm:$0xff]
  %v115 = vld [vmem:[#allocation2 + $0x118] sm:$0xff]
  %v116 = vld [vmem:[#allocation2 + $0x120] sm:$0xff]
  %v117 = vld [vmem:[#allocation2 + $0x128] sm:$0xff]
  %v118 = vld [vmem:[#allocation2 + $0x130] sm:$0xff]
  %v119 = vld [vmem:[#allocation2 + $0x138] sm:$0xff]
  %v120 = vld [vmem:[#allocation2 + $0x140] sm:$0xff]
  %v121 = vld [vmem:[#allocation2 + $0x148] sm:$0xff]
  %v122 = vld [vmem:[#allocation2 + $0x150] sm:$0xff]
  %v123 = vld [vmem:[#allocation2 + $0x158] sm:$0xff]
  %v124 = vld [vmem:[#allocation2 + $0x160] sm:$0xff]
  %v125 = vld [vmem:[#allocation2 + $0x168] sm:$0xff]
  %v126 = vld [vmem:[#allocation2 + $0x170] sm:$0xff]
  %v127 = vld [vmem:[#allocation2 + $0x178] sm:$0xff]
  %v128 = vld [vmem:[#allocation2 + $0x180] sm:$0xff]
  %v129 = vld [vmem:[#allocation2 + $0x188] sm:$0xff]
  %v130 = vld [vmem:[#allocation2 + $0x190] sm:$0xff]
  %v131 = vld [vmem:[#allocation2 + $0x198] sm:$0xff]
  %v132 = vld [vmem:[#allocation2 + $0x1a0] sm:$0xff]
  %v133 = vld [vmem:[#allocation2 + $0x1a8] sm:$0xff]
  %v134 = vld [vmem:[#allocation2 + $0x1b0] sm:$0xff]
  %v135 = vld [vmem:[#allocation2 + $0x1b8] sm:$0xff]
  %v136 = vld [vmem:[#allocation2 + $0x1c0] sm:$0xff]
  %v137 = vld [vmem:[#allocation2 + $0x1c8] sm:$0xff]
  %v138 = vld [vmem:[#allocation2 + $0x1d0] sm:$0xff]
  %v139 = vld [vmem:[#allocation2 + $0x1d8] sm:$0xff]
  %v140 = vld [vmem:[#allocation2 + $0x1e0] sm:$0xff]
  %v141 = vld [vmem:[#allocation2 + $0x1e8] sm:$0xff]
  %v142 = vld [vmem:[#allocation2 + $0x1f0] sm:$0xff]
  %v143 = vld [vmem:[#allocation2 + $0x1f8] sm:$0xff]
  %v144 = vld [vmem:[%s0] sm:$0xff]
  %v145 = vld [vmem:[%s0 + $0x8] sm:$0xff]
  %v146 = vld [vmem:[%s0 + $0x10] sm:$0xff]
  %v147 = vld [vmem:[%s0 + $0x18] sm:$0xff]
  %v148 = vld [vmem:[%s0 + $0x20] sm:$0xff]
  %v149 = vld [vmem:[%s0 + $0x28] sm:$0xff]
  %v150 = vld [vmem:[%s0 + $0x30] sm:$0xff]
  %v151 = vld [vmem:[%s0 + $0x38] sm:$0xff]
  %v152 = vld [vmem:[%s0 + $0x40] sm:$0xff]
  %v153 = vld [vmem:[%s0 + $0x48] sm:$0xff]
  %v154 = vld [vmem:[%s0 + $0x50] sm:$0xff]
  %v155 = vld [vmem:[%s0 + $0x58] sm:$0xff]
  %v156 = vld [vmem:[%s0 + $0x60] sm:$0xff]
  %v157 = vld [vmem:[%s0 + $0x68] sm:$0xff]
  %v158 = vld [vmem:[%s0 + $0x70] sm:$0xff]
  %v159 = vld [vmem:[%s0 + $0x78] sm:$0xff]
  %v160 = vpack.c.bf16 %v145, %v144
  %v161 = vpack.c.bf16 %v147, %v146
  %v162 = vpack.c.bf16 %v149, %v148
  %v163 = vpack.c.bf16 %v151, %v150
  %v164 = vpack.c.bf16 %v153, %v152
  %v165 = vpack.c.bf16 %v155, %v154
  %v166 = vpack.c.bf16 %v157, %v156
  %v167 = vpack.c.bf16 %v159, %v158
  %v168 = vld [vmem:[%s1] sm:$0xff]
  %v169 = vld [vmem:[%s1 + $0x8] sm:$0xff]
  %v170 = vld [vmem:[%s1 + $0x10] sm:$0xff]
  %v171 = vld [vmem:[%s1 + $0x18] sm:$0xff]
  %v172 = vld [vmem:[%s1 + $0x20] sm:$0xff]
  %v173 = vld [vmem:[%s1 + $0x28] sm:$0xff]
  %v174 = vld [vmem:[%s1 + $0x30] sm:$0xff]
  %v175 = vld [vmem:[%s1 + $0x38] sm:$0xff]
  %v176 = vld [vmem:[%s1 + $0x40] sm:$0xff]
  %v177 = vld [vmem:[%s1 + $0x48] sm:$0xff]
  %v178 = vld [vmem:[%s1 + $0x50] sm:$0xff]
  %v179 = vld [vmem:[%s1 + $0x58] sm:$0xff]
  %v180 = vld [vmem:[%s1 + $0x60] sm:$0xff]
  %v181 = vld [vmem:[%s1 + $0x68] sm:$0xff]
  %v182 = vld [vmem:[%s1 + $0x70] sm:$0xff]
  %v183 = vld [vmem:[%s1 + $0x78] sm:$0xff]
  %v184 = vld [vmem:[%s1 + $0x80] sm:$0xff]
  %v185 = vld [vmem:[%s1 + $0x88] sm:$0xff]
  %v186 = vld [vmem:[%s1 + $0x90] sm:$0xff]
  %v187 = vld [vmem:[%s1 + $0x98] sm:$0xff]
  %v188 = vld [vmem:[%s1 + $0xa0] sm:$0xff]
  %v189 = vld [vmem:[%s1 + $0xa8] sm:$0xff]
  %v190 = vld [vmem:[%s1 + $0xb0] sm:$0xff]
  %v191 = vld [vmem:[%s1 + $0xb8] sm:$0xff]
  %v192 = vld [vmem:[%s1 + $0xc0] sm:$0xff]
  %v193 = vld [vmem:[%s1 + $0xc8] sm:$0xff]
  %v194 = vld [vmem:[%s1 + $0xd0] sm:$0xff]
  %v195 = vld [vmem:[%s1 + $0xd8] sm:$0xff]
  %v196 = vld [vmem:[%s1 + $0xe0] sm:$0xff]
  %v197 = vld [vmem:[%s1 + $0xe8] sm:$0xff]
  %v198 = vld [vmem:[%s1 + $0xf0] sm:$0xff]
  %v199 = vld [vmem:[%s1 + $0xf8] sm:$0xff]
  %v200 = vld [vmem:[%s1 + $0x100] sm:$0xff]
  %v201 = vld [vmem:[%s1 + $0x108] sm:$0xff]
  %v202 = vld [vmem:[%s1 + $0x110] sm:$0xff]
  %v203 = vld [vmem:[%s1 + $0x118] sm:$0xff]
  %v204 = vld [vmem:[%s1 + $0x120] sm:$0xff]
  %v205 = vld [vmem:[%s1 + $0x128] sm:$0xff]
  %v206 = vld [vmem:[%s1 + $0x130] sm:$0xff]
  %v207 = vld [vmem:[%s1 + $0x138] sm:$0xff]
  %v208 = vld [vmem:[%s1 + $0x140] sm:$0xff]
  %v209 = vld [vmem:[%s1 + $0x148] sm:$0xff]
  %v210 = vld [vmem:[%s1 + $0x150] sm:$0xff]
  %v211 = vld [vmem:[%s1 + $0x158] sm:$0xff]
  %v212 = vld [vmem:[%s1 + $0x160] sm:$0xff]
  %v213 = vld [vmem:[%s1 + $0x168] sm:$0xff]
  %v214 = vld [vmem:[%s1 + $0x170] sm:$0xff]
  %v215 = vld [vmem:[%s1 + $0x178] sm:$0xff]
  %v216 = vld [vmem:[%s1 + $0x180] sm:$0xff]
  %v217 = vld [vmem:[%s1 + $0x188] sm:$0xff]
  %v218 = vld [vmem:[%s1 + $0x190] sm:$0xff]
  %v219 = vld [vmem:[%s1 + $0x198] sm:$0xff]
  %v220 = vld [vmem:[%s1 + $0x1a0] sm:$0xff]
  %v221 = vld [vmem:[%s1 + $0x1a8] sm:$0xff]
  %v222 = vld [vmem:[%s1 + $0x1b0] sm:$0xff]
  %v223 = vld [vmem:[%s1 + $0x1b8] sm:$0xff]
  %v224 = vld [vmem:[%s1 + $0x1c0] sm:$0xff]
  %v225 = vld [vmem:[%s1 + $0x1c8] sm:$0xff]
  %v226 = vld [vmem:[%s1 + $0x1d0] sm:$0xff]
  %v227 = vld [vmem:[%s1 + $0x1d8] sm:$0xff]
  %v228 = vld [vmem:[%s1 + $0x1e0] sm:$0xff]
  %v229 = vld [vmem:[%s1 + $0x1e8] sm:$0xff]
  %v230 = vld [vmem:[%s1 + $0x1f0] sm:$0xff]
  %v231 = vld [vmem:[%s1 + $0x1f8] sm:$0xff]
  %v232 = vpack.c.bf16 %v169, %v168
  %v233 = vpack.c.bf16 %v171, %v170
  %v234 = vpack.c.bf16 %v173, %v172
  %v235 = vpack.c.bf16 %v175, %v174
  %v236 = vpack.c.bf16 %v177, %v176
  %v237 = vpack.c.bf16 %v179, %v178
  %v238 = vpack.c.bf16 %v181, %v180
  %v239 = vpack.c.bf16 %v183, %v182
  %v240 = vpack.c.bf16 %v185, %v184
  %v241 = vpack.c.bf16 %v187, %v186
  %v242 = vpack.c.bf16 %v189, %v188
  %v243 = vpack.c.bf16 %v191, %v190
  %v244 = vpack.c.bf16 %v193, %v192
  %v245 = vpack.c.bf16 %v195, %v194
  %v246 = vpack.c.bf16 %v197, %v196
  %v247 = vpack.c.bf16 %v199, %v198
  %v248 = vpack.c.bf16 %v201, %v200
  %v249 = vpack.c.bf16 %v203, %v202
  %v250 = vpack.c.bf16 %v205, %v204
  %v251 = vpack.c.bf16 %v207, %v206
  %v252 = vpack.c.bf16 %v209, %v208
  %v253 = vpack.c.bf16 %v211, %v210
  %v254 = vpack.c.bf16 %v213, %v212
  %v255 = vpack.c.bf16 %v215, %v214
  %v256 = vpack.c.bf16 %v217, %v216
  %v257 = vpack.c.bf16 %v219, %v218
  %v258 = vpack.c.bf16 %v221, %v220
  %v259 = vpack.c.bf16 %v223, %v222
  %v260 = vpack.c.bf16 %v225, %v224
  %v261 = vpack.c.bf16 %v227, %v226
  %v262 = vpack.c.bf16 %v229, %v228
  %v263 = vpack.c.bf16 %v231, %v230
  %264 = vmatprep.subr.bf16.mxu0 0
  %265 = vmatpush1.bf16.xpose.msra.mxu0 %v232
  %266 = vmatprep.subr.bf16.mxu0 0
  %267 = vmatpush1.bf16.xpose.msra.mxu0 %v233
  %268 = vmatprep.subr.bf16.mxu0 0
  %269 = vmatpush1.bf16.xpose.msra.mxu0 %v234
  %270 = vmatprep.subr.bf16.mxu0 0
  %271 = vmatpush1.bf16.xpose.msra.mxu0 %v235
  %272 = vmatprep.subr.bf16.mxu0 0
  %273 = vmatpush1.bf16.xpose.msra.mxu0 %v236
  %274 = vmatprep.subr.bf16.mxu0 0
  %275 = vmatpush1.bf16.xpose.msra.mxu0 %v237
  %276 = vmatprep.subr.bf16.mxu0 0
  %277 = vmatpush1.bf16.xpose.msra.mxu0 %v238
  %278 = vmatprep.subr.bf16.mxu0 0
  %279 = vmatpush1.bf16.xpose.msra.mxu0 %v239
  %280 = vmatprep.subr.bf16.mxu0 0
  %281 = vmatpush1.bf16.xpose.msra.mxu0 %v240
  %282 = vmatprep.subr.bf16.mxu0 0
  %283 = vmatpush1.bf16.xpose.msra.mxu0 %v241
  %284 = vmatprep.subr.bf16.mxu0 0
  %285 = vmatpush1.bf16.xpose.msra.mxu0 %v242
  %286 = vmatprep.subr.bf16.mxu0 0
  %287 = vmatpush1.bf16.xpose.msra.mxu0 %v243
  %288 = vmatprep.subr.bf16.mxu0 0
  %289 = vmatpush1.bf16.xpose.msra.mxu0 %v244
  %290 = vmatprep.subr.bf16.mxu0 0
  %291 = vmatpush1.bf16.xpose.msra.mxu0 %v245
  %292 = vmatprep.subr.bf16.mxu0 0
  %293 = vmatpush1.bf16.xpose.msra.mxu0 %v246
  %294 = vmatprep.subr.bf16.mxu0 0
  %295 = vmatpush1.bf16.xpose.msra.mxu0 %v247
  %296 = vmatprep.mubr.bf16.mxu0 0
  %297 = vmatmul.mubr.bf16.gmra.mrb[0].mxu0 %v160
  %v298 = vpop.f32.mrb[0].mxu0
  %v299 = vadd.f32 0.0, %v298
  %v300 = vpop.f32.mrb[0].mxu0
  %v301 = vadd.f32 0.0, %v300
  %v302 = vpop.f32.mrb[0].mxu0
  %v303 = vadd.f32 0.0, %v302
  %v304 = vpop.f32.mrb[0].mxu0
  %v305 = vadd.f32 0.0, %v304
  %306 = vmatprep.mubr.bf16.mxu0 0
  %307 = vmatmul.mubr.bf16.gmra.mrb[0].mxu0 %v161
  %v308 = vpop.f32.mrb[0].mxu0
  %v309 = vadd.f32 0.0, %v308
  %v310 = vpop.f32.mrb[0].mxu0
  %v311 = vadd.f32 0.0, %v310
  %v312 = vpop.f32.mrb[0].mxu0
  %v313 = vadd.f32 0.0, %v312
  %v314 = vpop.f32.mrb[0].mxu0
  %v315 = vadd.f32 0.0, %v314
  %316 = vmatprep.mubr.bf16.mxu0 0
  %317 = vmatmul.mubr.bf16.gmra.mrb[0].mxu0 %v162
  %v318 = vpop.f32.mrb[0].mxu0
  %v319 = vadd.f32 0.0, %v318
  %v320 = vpop.f32.mrb[0].mxu0
  %v321 = vadd.f32 0.0, %v320
  %v322 = vpop.f32.mrb[0].mxu0
  %v323 = vadd.f32 0.0, %v322
  %v324 = vpop.f32.mrb[0].mxu0
  %v325 = vadd.f32 0.0, %v324
  %326 = vmatprep.mubr.bf16.mxu0 0
  %327 = vmatmul.mubr.bf16.gmra.mrb[0].mxu0 %v163
  %v328 = vpop.f32.mrb[0].mxu0
  %v329 = vadd.f32 0.0, %v328
  %v330 = vpop.f32.mrb[0].mxu0
  %v331 = vadd.f32 0.0, %v330
  %v332 = vpop.f32.mrb[0].mxu0
  %v333 = vadd.f32 0.0, %v332
  %v334 = vpop.f32.mrb[0].mxu0
  %v335 = vadd.f32 0.0, %v334
  %336 = vmatprep.mubr.bf16.mxu0 0
  %337 = vmatmul.mubr.bf16.gmra.mrb[0].mxu0 %v164
  %v338 = vpop.f32.mrb[0].mxu0
  %v339 = vadd.f32 0.0, %v338
  %v340 = vpop.f32.mrb[0].mxu0
  %v341 = vadd.f32 0.0, %v340
  %v342 = vpop.f32.mrb[0].mxu0
  %v343 = vadd.f32 0.0, %v342
  %v344 = vpop.f32.mrb[0].mxu0
  %v345 = vadd.f32 0.0, %v344
  %346 = vmatprep.mubr.bf16.mxu0 0
  %347 = vmatmul.mubr.bf16.gmra.mrb[0].mxu0 %v165
  %v348 = vpop.f32.mrb[0].mxu0
  %v349 = vadd.f32 0.0, %v348
  %v350 = vpop.f32.mrb[0].mxu0
  %v351 = vadd.f32 0.0, %v350
  %v352 = vpop.f32.mrb[0].mxu0
  %v353 = vadd.f32 0.0, %v352
  %v354 = vpop.f32.mrb[0].mxu0
  %v355 = vadd.f32 0.0, %v354
  %356 = vmatprep.mubr.bf16.mxu0 0
  %357 = vmatmul.mubr.bf16.gmra.mrb[0].mxu0 %v166
  %v358 = vpop.f32.mrb[0].mxu0
  %v359 = vadd.f32 0.0, %v358
  %v360 = vpop.f32.mrb[0].mxu0
  %v361 = vadd.f32 0.0, %v360
  %v362 = vpop.f32.mrb[0].mxu0
  %v363 = vadd.f32 0.0, %v362
  %v364 = vpop.f32.mrb[0].mxu0
  %v365 = vadd.f32 0.0, %v364
  %366 = vmatprep.mubr.bf16.mxu0 0
  %367 = vmatmul.mubr.bf16.gmra.mrb[0].mxu0 %v167
  %v368 = vpop.f32.mrb[0].mxu0
  %v369 = vadd.f32 0.0, %v368
  %v370 = vpop.f32.mrb[0].mxu0
  %v371 = vadd.f32 0.0, %v370
  %v372 = vpop.f32.mrb[0].mxu0
  %v373 = vadd.f32 0.0, %v372
  %v374 = vpop.f32.mrb[0].mxu0
  %v375 = vadd.f32 0.0, %v374
  %376 = vdwg.mxu0
  %377 = vmatprep.subr.bf16.mxu0 0
  %378 = vmatpush1.bf16.xpose.msra.mxu0 %v248
  %379 = vmatprep.subr.bf16.mxu0 0
  %380 = vmatpush1.bf16.xpose.msra.mxu0 %v249
  %381 = vmatprep.subr.bf16.mxu0 0
  %382 = vmatpush1.bf16.xpose.msra.mxu0 %v250
  %383 = vmatprep.subr.bf16.mxu0 0
  %384 = vmatpush1.bf16.xpose.msra.mxu0 %v251
  %385 = vmatprep.subr.bf16.mxu0 0
  %386 = vmatpush1.bf16.xpose.msra.mxu0 %v252
  %387 = vmatprep.subr.bf16.mxu0 0
  %388 = vmatpush1.bf16.xpose.msra.mxu0 %v253
  %389 = vmatprep.subr.bf16.mxu0 0
  %390 = vmatpush1.bf16.xpose.msra.mxu0 %v254
  %391 = vmatprep.subr.bf16.mxu0 0
  %392 = vmatpush1.bf16.xpose.msra.mxu0 %v255
  %393 = vmatprep.subr.bf16.mxu0 0
  %394 = vmatpush1.bf16.xpose.msra.mxu0 %v256
  %395 = vmatprep.subr.bf16.mxu0 0
  %396 = vmatpush1.bf16.xpose.msra.mxu0 %v257
  %397 = vmatprep.subr.bf16.mxu0 0
  %398 = vmatpush1.bf16.xpose.msra.mxu0 %v258
  %399 = vmatprep.subr.bf16.mxu0 0
  %400 = vmatpush1.bf16.xpose.msra.mxu0 %v259
  %401 = vmatprep.subr.bf16.mxu0 0
  %402 = vmatpush1.bf16.xpose.msra.mxu0 %v260
  %403 = vmatprep.subr.bf16.mxu0 0
  %404 = vmatpush1.bf16.xpose.msra.mxu0 %v261
  %405 = vmatprep.subr.bf16.mxu0 0
  %406 = vmatpush1.bf16.xpose.msra.mxu0 %v262
  %407 = vmatprep.subr.bf16.mxu0 0
  %408 = vmatpush1.bf16.xpose.msra.mxu0 %v263
  %409 = vmatprep.mubr.bf16.mxu0 0
  %410 = vmatmul.mubr.bf16.gmra.mrb[0].mxu0 %v160
  %v411 = vpop.f32.mrb[0].mxu0
  %v412 = vadd.f32 0.0, %v411
  %v413 = vpop.f32.mrb[0].mxu0
  %v414 = vadd.f32 0.0, %v413
  %v415 = vpop.f32.mrb[0].mxu0
  %v416 = vadd.f32 0.0, %v415
  %v417 = vpop.f32.mrb[0].mxu0
  %v418 = vadd.f32 0.0, %v417
  %419 = vmatprep.mubr.bf16.mxu0 0
  %420 = vmatmul.mubr.bf16.gmra.mrb[0].mxu0 %v161
  %v421 = vpop.f32.mrb[0].mxu0
  %v422 = vadd.f32 0.0, %v421
  %v423 = vpop.f32.mrb[0].mxu0
  %v424 = vadd.f32 0.0, %v423
  %v425 = vpop.f32.mrb[0].mxu0
  %v426 = vadd.f32 0.0, %v425
  %v427 = vpop.f32.mrb[0].mxu0
  %v428 = vadd.f32 0.0, %v427
  %429 = vmatprep.mubr.bf16.mxu0 0
  %430 = vmatmul.mubr.bf16.gmra.mrb[0].mxu0 %v162
  %v431 = vpop.f32.mrb[0].mxu0
  %v432 = vadd.f32 0.0, %v431
  %v433 = vpop.f32.mrb[0].mxu0
  %v434 = vadd.f32 0.0, %v433
  %v435 = vpop.f32.mrb[0].mxu0
  %v436 = vadd.f32 0.0, %v435
  %v437 = vpop.f32.mrb[0].mxu0
  %v438 = vadd.f32 0.0, %v437
  %439 = vmatprep.mubr.bf16.mxu0 0
  %440 = vmatmul.mubr.bf16.gmra.mrb[0].mxu0 %v163
  %v441 = vpop.f32.mrb[0].mxu0
  %v442 = vadd.f32 0.0, %v441
  %v443 = vpop.f32.mrb[0].mxu0
  %v444 = vadd.f32 0.0, %v443
  %v445 = vpop.f32.mrb[0].mxu0
  %v446 = vadd.f32 0.0, %v445
  %v447 = vpop.f32.mrb[0].mxu0
  %v448 = vadd.f32 0.0, %v447
  %449 = vmatprep.mubr.bf16.mxu0 0
  %450 = vmatmul.mubr.bf16.gmra.mrb[0].mxu0 %v164
  %v451 = vpop.f32.mrb[0].mxu0
  %v452 = vadd.f32 0.0, %v451
  %v453 = vpop.f32.mrb[0].mxu0
  %v454 = vadd.f32 0.0, %v453
  %v455 = vpop.f32.mrb[0].mxu0
  %v456 = vadd.f32 0.0, %v455
  %v457 = vpop.f32.mrb[0].mxu0
  %v458 = vadd.f32 0.0, %v457
  %459 = vmatprep.mubr.bf16.mxu0 0
  %460 = vmatmul.mubr.bf16.gmra.mrb[0].mxu0 %v165
  %v461 = vpop.f32.mrb[0].mxu0
  %v462 = vadd.f32 0.0, %v461
  %v463 = vpop.f32.mrb[0].mxu0
  %v464 = vadd.f32 0.0, %v463
  %v465 = vpop.f32.mrb[0].mxu0
  %v466 = vadd.f32 0.0, %v465
  %v467 = vpop.f32.mrb[0].mxu0
  %v468 = vadd.f32 0.0, %v467
  %469 = vmatprep.mubr.bf16.mxu0 0
  %470 = vmatmul.mubr.bf16.gmra.mrb[0].mxu0 %v166
  %v471 = vpop.f32.mrb[0].mxu0
  %v472 = vadd.f32 0.0, %v471
  %v473 = vpop.f32.mrb[0].mxu0
  %v474 = vadd.f32 0.0, %v473
  %v475 = vpop.f32.mrb[0].mxu0
  %v476 = vadd.f32 0.0, %v475
  %v477 = vpop.f32.mrb[0].mxu0
  %v478 = vadd.f32 0.0, %v477
  %479 = vmatprep.mubr.bf16.mxu0 0
  %480 = vmatmul.mubr.bf16.gmra.mrb[0].mxu0 %v167
  %v481 = vpop.f32.mrb[0].mxu0
  %v482 = vadd.f32 0.0, %v481
  %v483 = vpop.f32.mrb[0].mxu0
  %v484 = vadd.f32 0.0, %v483
  %v485 = vpop.f32.mrb[0].mxu0
  %v486 = vadd.f32 0.0, %v485
  %v487 = vpop.f32.mrb[0].mxu0
  %v488 = vadd.f32 0.0, %v487
  %489 = vdwg.mxu0
  %v490 = vadd.f32 %v80, %v299
  %v491 = vadd.f32 %v81, %v301
  %v492 = vadd.f32 %v82, %v412
  %v493 = vadd.f32 %v83, %v414
  %v494 = vadd.f32 %v84, %v303
  %v495 = vadd.f32 %v85, %v305
  %v496 = vadd.f32 %v86, %v416
  %v497 = vadd.f32 %v87, %v418
  %v498 = vadd.f32 %v88, %v309
  %v499 = vadd.f32 %v89, %v311
  %v500 = vadd.f32 %v90, %v422
  %v501 = vadd.f32 %v91, %v424
  %v502 = vadd.f32 %v92, %v313
  %v503 = vadd.f32 %v93, %v315
  %v504 = vadd.f32 %v94, %v426
  %v505 = vadd.f32 %v95, %v428
  %v506 = vadd.f32 %v96, %v319
  %v507 = vadd.f32 %v97, %v321
  %v508 = vadd.f32 %v98, %v432
  %v509 = vadd.f32 %v99, %v434
  %v510 = vadd.f32 %v100, %v323
  %v511 = vadd.f32 %v101, %v325
  %v512 = vadd.f32 %v102, %v436
  %v513 = vadd.f32 %v103, %v438
  %v514 = vadd.f32 %v104, %v329
  %v515 = vadd.f32 %v105, %v331
  %v516 = vadd.f32 %v106, %v442
  %v517 = vadd.f32 %v107, %v444
  %v518 = vadd.f32 %v108, %v333
  %v519 = vadd.f32 %v109, %v335
  %v520 = vadd.f32 %v110, %v446
  %v521 = vadd.f32 %v111, %v448
  %v522 = vadd.f32 %v112, %v339
  %v523 = vadd.f32 %v113, %v341
  %v524 = vadd.f32 %v114, %v452
  %v525 = vadd.f32 %v115, %v454
  %v526 = vadd.f32 %v116, %v343
  %v527 = vadd.f32 %v117, %v345
  %v528 = vadd.f32 %v118, %v456
  %v529 = vadd.f32 %v119, %v458
  %v530 = vadd.f32 %v120, %v349
  %v531 = vadd.f32 %v121, %v351
  %v532 = vadd.f32 %v122, %v462
  %v533 = vadd.f32 %v123, %v464
  %v534 = vadd.f32 %v124, %v353
  %v535 = vadd.f32 %v125, %v355
  %v536 = vadd.f32 %v126, %v466
  %v537 = vadd.f32 %v127, %v468
  %v538 = vadd.f32 %v128, %v359
  %v539 = vadd.f32 %v129, %v361
  %v540 = vadd.f32 %v130, %v472
  %v541 = vadd.f32 %v131, %v474
  %v542 = vadd.f32 %v132, %v363
  %v543 = vadd.f32 %v133, %v365
  %v544 = vadd.f32 %v134, %v476
  %v545 = vadd.f32 %v135, %v478
  %v546 = vadd.f32 %v136, %v369
  %v547 = vadd.f32 %v137, %v371
  %v548 = vadd.f32 %v138, %v482
  %v549 = vadd.f32 %v139, %v484
  %v550 = vadd.f32 %v140, %v373
  %v551 = vadd.f32 %v141, %v375
  %v552 = vadd.f32 %v142, %v486
  %v553 = vadd.f32 %v143, %v488
  %554 = vst [vmem:[#allocation2] sm:$0xff] %v490
  %555 = vst [vmem:[#allocation2 + $0x8] sm:$0xff] %v491
  %556 = vst [vmem:[#allocation2 + $0x10] sm:$0xff] %v492
  %557 = vst [vmem:[#allocation2 + $0x18] sm:$0xff] %v493
  %558 = vst [vmem:[#allocation2 + $0x20] sm:$0xff] %v494
  %559 = vst [vmem:[#allocation2 + $0x28] sm:$0xff] %v495
  %560 = vst [vmem:[#allocation2 + $0x30] sm:$0xff] %v496
  %561 = vst [vmem:[#allocation2 + $0x38] sm:$0xff] %v497
  %562 = vst [vmem:[#allocation2 + $0x40] sm:$0xff] %v498
  %563 = vst [vmem:[#allocation2 + $0x48] sm:$0xff] %v499
  %564 = vst [vmem:[#allocation2 + $0x50] sm:$0xff] %v500
  %565 = vst [vmem:[#allocation2 + $0x58] sm:$0xff] %v501
  %566 = vst [vmem:[#allocation2 + $0x60] sm:$0xff] %v502
  %567 = vst [vmem:[#allocation2 + $0x68] sm:$0xff] %v503
  %568 = vst [vmem:[#allocation2 + $0x70] sm:$0xff] %v504
  %569 = vst [vmem:[#allocation2 + $0x78] sm:$0xff] %v505
  %570 = vst [vmem:[#allocation2 + $0x80] sm:$0xff] %v506
  %571 = vst [vmem:[#allocation2 + $0x88] sm:$0xff] %v507
  %572 = vst [vmem:[#allocation2 + $0x90] sm:$0xff] %v508
  %573 = vst [vmem:[#allocation2 + $0x98] sm:$0xff] %v509
  %574 = vst [vmem:[#allocation2 + $0xa0] sm:$0xff] %v510
  %575 = vst [vmem:[#allocation2 + $0xa8] sm:$0xff] %v511
  %576 = vst [vmem:[#allocation2 + $0xb0] sm:$0xff] %v512
  %577 = vst [vmem:[#allocation2 + $0xb8] sm:$0xff] %v513
  %578 = vst [vmem:[#allocation2 + $0xc0] sm:$0xff] %v514
  %579 = vst [vmem:[#allocation2 + $0xc8] sm:$0xff] %v515
  %580 = vst [vmem:[#allocation2 + $0xd0] sm:$0xff] %v516
  %581 = vst [vmem:[#allocation2 + $0xd8] sm:$0xff] %v517
  %582 = vst [vmem:[#allocation2 + $0xe0] sm:$0xff] %v518
  %583 = vst [vmem:[#allocation2 + $0xe8] sm:$0xff] %v519
  %584 = vst [vmem:[#allocation2 + $0xf0] sm:$0xff] %v520
  %585 = vst [vmem:[#allocation2 + $0xf8] sm:$0xff] %v521
  %586 = vst [vmem:[#allocation2 + $0x100] sm:$0xff] %v522
  %587 = vst [vmem:[#allocation2 + $0x108] sm:$0xff] %v523
  %588 = vst [vmem:[#allocation2 + $0x110] sm:$0xff] %v524
  %589 = vst [vmem:[#allocation2 + $0x118] sm:$0xff] %v525
  %590 = vst [vmem:[#allocation2 + $0x120] sm:$0xff] %v526
  %591 = vst [vmem:[#allocation2 + $0x128] sm:$0xff] %v527
  %592 = vst [vmem:[#allocation2 + $0x130] sm:$0xff] %v528
  %593 = vst [vmem:[#allocation2 + $0x138] sm:$0xff] %v529
  %594 = vst [vmem:[#allocation2 + $0x140] sm:$0xff] %v530
  %595 = vst [vmem:[#allocation2 + $0x148] sm:$0xff] %v531
  %596 = vst [vmem:[#allocation2 + $0x150] sm:$0xff] %v532
  %597 = vst [vmem:[#allocation2 + $0x158] sm:$0xff] %v533
  %598 = vst [vmem:[#allocation2 + $0x160] sm:$0xff] %v534
  %599 = vst [vmem:[#allocation2 + $0x168] sm:$0xff] %v535
  %600 = vst [vmem:[#allocation2 + $0x170] sm:$0xff] %v536
  %601 = vst [vmem:[#allocation2 + $0x178] sm:$0xff] %v537
  %602 = vst [vmem:[#allocation2 + $0x180] sm:$0xff] %v538
  %603 = vst [vmem:[#allocation2 + $0x188] sm:$0xff] %v539
  %604 = vst [vmem:[#allocation2 + $0x190] sm:$0xff] %v540
  %605 = vst [vmem:[#allocation2 + $0x198] sm:$0xff] %v541
  %606 = vst [vmem:[#allocation2 + $0x1a0] sm:$0xff] %v542
  %607 = vst [vmem:[#allocation2 + $0x1a8] sm:$0xff] %v543
  %608 = vst [vmem:[#allocation2 + $0x1b0] sm:$0xff] %v544
  %609 = vst [vmem:[#allocation2 + $0x1b8] sm:$0xff] %v545
  %610 = vst [vmem:[#allocation2 + $0x1c0] sm:$0xff] %v546
  %611 = vst [vmem:[#allocation2 + $0x1c8] sm:$0xff] %v547
  %612 = vst [vmem:[#allocation2 + $0x1d0] sm:$0xff] %v548
  %613 = vst [vmem:[#allocation2 + $0x1d8] sm:$0xff] %v549
  %614 = vst [vmem:[#allocation2 + $0x1e0] sm:$0xff] %v550
  %615 = vst [vmem:[#allocation2 + $0x1e8] sm:$0xff] %v551
  %616 = vst [vmem:[#allocation2 + $0x1f0] sm:$0xff] %v552
  %617 = vst [vmem:[#allocation2 + $0x1f8] sm:$0xff] %v553
  // Predicated region
  $region14: #{gpt_forward.65} parent=0 // pred_check
    %p618 = pneg %p12
  $region15: #{gpt_forward.65} parent=0 // pred_check_branch
    %620 = sbr.rel (%p618) target = $region17
  $region16: #{gpt_forward.65} parent=0 // pred_region
    %v621 = vld [vmem:[#allocation2] sm:$0xff]
    %v622 = vld [vmem:[#allocation2 + $0x8] sm:$0xff]
    %v623 = vld [vmem:[#allocation2 + $0x10] sm:$0xff]
    %v624 = vld [vmem:[#allocation2 + $0x18] sm:$0xff]
    %v625 = vld [vmem:[#allocation2 + $0x20] sm:$0xff]
    %v626 = vld [vmem:[#allocation2 + $0x28] sm:$0xff]
    %v627 = vld [vmem:[#allocation2 + $0x30] sm:$0xff]
    %v628 = vld [vmem:[#allocation2 + $0x38] sm:$0xff]
    %v629 = vld [vmem:[#allocation2 + $0x40] sm:$0xff]
    %v630 = vld [vmem:[#allocation2 + $0x48] sm:$0xff]
    %v631 = vld [vmem:[#allocation2 + $0x50] sm:$0xff]
    %v632 = vld [vmem:[#allocation2 + $0x58] sm:$0xff]
    %v633 = vld [vmem:[#allocation2 + $0x60] sm:$0xff]
    %v634 = vld [vmem:[#allocation2 + $0x68] sm:$0xff]
    %v635 = vld [vmem:[#allocation2 + $0x70] sm:$0xff]
    %v636 = vld [vmem:[#allocation2 + $0x78] sm:$0xff]
    %v637 = vld [vmem:[#allocation2 + $0x80] sm:$0xff]
    %v638 = vld [vmem:[#allocation2 + $0x88] sm:$0xff]
    %v639 = vld [vmem:[#allocation2 + $0x90] sm:$0xff]
    %v640 = vld [vmem:[#allocation2 + $0x98] sm:$0xff]
    %v641 = vld [vmem:[#allocation2 + $0xa0] sm:$0xff]
    %v642 = vld [vmem:[#allocation2 + $0xa8] sm:$0xff]
    %v643 = vld [vmem:[#allocation2 + $0xb0] sm:$0xff]
    %v644 = vld [vmem:[#allocation2 + $0xb8] sm:$0xff]
    %v645 = vld [vmem:[#allocation2 + $0xc0] sm:$0xff]
    %v646 = vld [vmem:[#allocation2 + $0xc8] sm:$0xff]
    %v647 = vld [vmem:[#allocation2 + $0xd0] sm:$0xff]
    %v648 = vld [vmem:[#allocation2 + $0xd8] sm:$0xff]
    %v649 = vld [vmem:[#allocation2 + $0xe0] sm:$0xff]
    %v650 = vld [vmem:[#allocation2 + $0xe8] sm:$0xff]
    %v651 = vld [vmem:[#allocation2 + $0xf0] sm:$0xff]
    %v652 = vld [vmem:[#allocation2 + $0xf8] sm:$0xff]
    %v653 = vld [vmem:[#allocation2 + $0x100] sm:$0xff]
    %v654 = vld [vmem:[#allocation2 + $0x108] sm:$0xff]
    %v655 = vld [vmem:[#allocation2 + $0x110] sm:$0xff]
    %v656 = vld [vmem:[#allocation2 + $0x118] sm:$0xff]
    %v657 = vld [vmem:[#allocation2 + $0x120] sm:$0xff]
    %v658 = vld [vmem:[#allocation2 + $0x128] sm:$0xff]
    %v659 = vld [vmem:[#allocation2 + $0x130] sm:$0xff]
    %v660 = vld [vmem:[#allocation2 + $0x138] sm:$0xff]
    %v661 = vld [vmem:[#allocation2 + $0x140] sm:$0xff]
    %v662 = vld [vmem:[#allocation2 + $0x148] sm:$0xff]
    %v663 = vld [vmem:[#allocation2 + $0x150] sm:$0xff]
    %v664 = vld [vmem:[#allocation2 + $0x158] sm:$0xff]
    %v665 = vld [vmem:[#allocation2 + $0x160] sm:$0xff]
    %v666 = vld [vmem:[#allocation2 + $0x168] sm:$0xff]
    %v667 = vld [vmem:[#allocation2 + $0x170] sm:$0xff]
    %v668 = vld [vmem:[#allocation2 + $0x178] sm:$0xff]
    %v669 = vld [vmem:[#allocation2 + $0x180] sm:$0xff]
    %v670 = vld [vmem:[#allocation2 + $0x188] sm:$0xff]
    %v671 = vld [vmem:[#allocation2 + $0x190] sm:$0xff]
    %v672 = vld [vmem:[#allocation2 + $0x198] sm:$0xff]
    %v673 = vld [vmem:[#allocation2 + $0x1a0] sm:$0xff]
    %v674 = vld [vmem:[#allocation2 + $0x1a8] sm:$0xff]
    %v675 = vld [vmem:[#allocation2 + $0x1b0] sm:$0xff]
    %v676 = vld [vmem:[#allocation2 + $0x1b8] sm:$0xff]
    %v677 = vld [vmem:[#allocation2 + $0x1c0] sm:$0xff]
    %v678 = vld [vmem:[#allocation2 + $0x1c8] sm:$0xff]
    %v679 = vld [vmem:[#allocation2 + $0x1d0] sm:$0xff]
    %v680 = vld [vmem:[#allocation2 + $0x1d8] sm:$0xff]
    %v681 = vld [vmem:[#allocation2 + $0x1e0] sm:$0xff]
    %v682 = vld [vmem:[#allocation2 + $0x1e8] sm:$0xff]
    %v683 = vld [vmem:[#allocation2 + $0x1f0] sm:$0xff]
    %v684 = vld [vmem:[#allocation2 + $0x1f8] sm:$0xff]
    %v685 = vmax.f32 %v621, 0.0
    %v686 = vmax.f32 %v622, 0.0
    %v687 = vmax.f32 %v623, 0.0
    %v688 = vmax.f32 %v624, 0.0
    %v689 = vmax.f32 %v625, 0.0
    %v690 = vmax.f32 %v626, 0.0
    %v691 = vmax.f32 %v627, 0.0
    %v692 = vmax.f32 %v628, 0.0
    %v693 = vmax.f32 %v629, 0.0
    %v694 = vmax.f32 %v630, 0.0
    %v695 = vmax.f32 %v631, 0.0
    %v696 = vmax.f32 %v632, 0.0
    %v697 = vmax.f32 %v633, 0.0
    %v698 = vmax.f32 %v634, 0.0
    %v699 = vmax.f32 %v635, 0.0
    %v700 = vmax.f32 %v636, 0.0
    %v701 = vmax.f32 %v637, 0.0
    %v702 = vmax.f32 %v638, 0.0
    %v703 = vmax.f32 %v639, 0.0
    %v704 = vmax.f32 %v640, 0.0
    %v705 = vmax.f32 %v641, 0.0
    %v706 = vmax.f32 %v642, 0.0
    %v707 = vmax.f32 %v643, 0.0
    %v708 = vmax.f32 %v644, 0.0
    %v709 = vmax.f32 %v645, 0.0
    %v710 = vmax.f32 %v646, 0.0
    %v711 = vmax.f32 %v647, 0.0
    %v712 = vmax.f32 %v648, 0.0
    %v713 = vmax.f32 %v649, 0.0
    %v714 = vmax.f32 %v650, 0.0
    %v715 = vmax.f32 %v651, 0.0
    %v716 = vmax.f32 %v652, 0.0
    %v717 = vmax.f32 %v653, 0.0
    %v718 = vmax.f32 %v654, 0.0
    %v719 = vmax.f32 %v655, 0.0
    %v720 = vmax.f32 %v656, 0.0
    %v721 = vmax.f32 %v657, 0.0
    %v722 = vmax.f32 %v658, 0.0
    %v723 = vmax.f32 %v659, 0.0
    %v724 = vmax.f32 %v660, 0.0
    %v725 = vmax.f32 %v661, 0.0
    %v726 = vmax.f32 %v662, 0.0
    %v727 = vmax.f32 %v663, 0.0
    %v728 = vmax.f32 %v664, 0.0
    %v729 = vmax.f32 %v665, 0.0
    %v730 = vmax.f32 %v666, 0.0
    %v731 = vmax.f32 %v667, 0.0
    %v732 = vmax.f32 %v668, 0.0
    %v733 = vmax.f32 %v669, 0.0
    %v734 = vmax.f32 %v670, 0.0
    %v735 = vmax.f32 %v671, 0.0
    %v736 = vmax.f32 %v672, 0.0
    %v737 = vmax.f32 %v673, 0.0
    %v738 = vmax.f32 %v674, 0.0
    %v739 = vmax.f32 %v675, 0.0
    %v740 = vmax.f32 %v676, 0.0
    %v741 = vmax.f32 %v677, 0.0
    %v742 = vmax.f32 %v678, 0.0
    %v743 = vmax.f32 %v679, 0.0
    %v744 = vmax.f32 %v680, 0.0
    %v745 = vmax.f32 %v681, 0.0
    %v746 = vmax.f32 %v682, 0.0
    %v747 = vmax.f32 %v683, 0.0
    %v748 = vmax.f32 %v684, 0.0
    %v749 = vmul.f32 %v685, %v685
    %v750 = vmul.f32 %v686, %v686
    %v751 = vmul.f32 %v687, %v687
    %v752 = vmul.f32 %v688, %v688
    %v753 = vmul.f32 %v689, %v689
    %v754 = vmul.f32 %v690, %v690
    %v755 = vmul.f32 %v691, %v691
    %v756 = vmul.f32 %v692, %v692
    %v757 = vmul.f32 %v693, %v693
    %v758 = vmul.f32 %v694, %v694
    %v759 = vmul.f32 %v695, %v695
    %v760 = vmul.f32 %v696, %v696
    %v761 = vmul.f32 %v697, %v697
    %v762 = vmul.f32 %v698, %v698
    %v763 = vmul.f32 %v699, %v699
    %v764 = vmul.f32 %v700, %v700
    %v765 = vmul.f32 %v701, %v701
    %v766 = vmul.f32 %v702, %v702
    %v767 = vmul.f32 %v703, %v703
    %v768 = vmul.f32 %v704, %v704
    %v769 = vmul.f32 %v705, %v705
    %v770 = vmul.f32 %v706, %v706
    %v771 = vmul.f32 %v707, %v707
    %v772 = vmul.f32 %v708, %v708
    %v773 = vmul.f32 %v709, %v709
    %v774 = vmul.f32 %v710, %v710
    %v775 = vmul.f32 %v711, %v711
    %v776 = vmul.f32 %v712, %v712
    %v777 = vmul.f32 %v713, %v713
    %v778 = vmul.f32 %v714, %v714
    %v779 = vmul.f32 %v715, %v715
    %v780 = vmul.f32 %v716, %v716
    %v781 = vmul.f32 %v717, %v717
    %v782 = vmul.f32 %v718, %v718
    %v783 = vmul.f32 %v719, %v719
    %v784 = vmul.f32 %v720, %v720
    %v785 = vmul.f32 %v721, %v721
    %v786 = vmul.f32 %v722, %v722
    %v787 = vmul.f32 %v723, %v723
    %v788 = vmul.f32 %v724, %v724
    %v789 = vmul.f32 %v725, %v725
    %v790 = vmul.f32 %v726, %v726
    %v791 = vmul.f32 %v727, %v727
    %v792 = vmul.f32 %v728, %v728
    %v793 = vmul.f32 %v729, %v729
    %v794 = vmul.f32 %v730, %v730
    %v795 = vmul.f32 %v731, %v731
    %v796 = vmul.f32 %v732, %v732
    %v797 = vmul.f32 %v733, %v733
    %v798 = vmul.f32 %v734, %v734
    %v799 = vmul.f32 %v735, %v735
    %v800 = vmul.f32 %v736, %v736
    %v801 = vmul.f32 %v737, %v737
    %v802 = vmul.f32 %v738, %v738
    %v803 = vmul.f32 %v739, %v739
    %v804 = vmul.f32 %v740, %v740
    %v805 = vmul.f32 %v741, %v741
    %v806 = vmul.f32 %v742, %v742
    %v807 = vmul.f32 %v743, %v743
    %v808 = vmul.f32 %v744, %v744
    %v809 = vmul.f32 %v745, %v745
    %v810 = vmul.f32 %v746, %v746
    %v811 = vmul.f32 %v747, %v747
    %v812 = vmul.f32 %v748, %v748
    %813 = vst [vmem:[%s2] sm:$0xff] %v749
    %814 = vst [vmem:[%s2 + $0x8] sm:$0xff] %v750
    %815 = vst [vmem:[%s2 + $0x10] sm:$0xff] %v751
    %816 = vst [vmem:[%s2 + $0x18] sm:$0xff] %v752
    %817 = vst [vmem:[%s2 + $0x20] sm:$0xff] %v753
    %818 = vst [vmem:[%s2 + $0x28] sm:$0xff] %v754
    %819 = vst [vmem:[%s2 + $0x30] sm:$0xff] %v755
    %820 = vst [vmem:[%s2 + $0x38] sm:$0xff] %v756
    %821 = vst [vmem:[%s2 + $0x40] sm:$0xff] %v757
    %822 = vst [vmem:[%s2 + $0x48] sm:$0xff] %v758
    %823 = vst [vmem:[%s2 + $0x50] sm:$0xff] %v759
    %824 = vst [vmem:[%s2 + $0x58] sm:$0xff] %v760
    %825 = vst [vmem:[%s2 + $0x60] sm:$0xff] %v761
    %826 = vst [vmem:[%s2 + $0x68] sm:$0xff] %v762
    %827 = vst [vmem:[%s2 + $0x70] sm:$0xff] %v763
    %828 = vst [vmem:[%s2 + $0x78] sm:$0xff] %v764
    %829 = vst [vmem:[%s2 + $0x80] sm:$0xff] %v765
    %830 = vst [vmem:[%s2 + $0x88] sm:$0xff] %v766
    %831 = vst [vmem:[%s2 + $0x90] sm:$0xff] %v767
    %832 = vst [vmem:[%s2 + $0x98] sm:$0xff] %v768
    %833 = vst [vmem:[%s2 + $0xa0] sm:$0xff] %v769
    %834 = vst [vmem:[%s2 + $0xa8] sm:$0xff] %v770
    %835 = vst [vmem:[%s2 + $0xb0] sm:$0xff] %v771
    %836 = vst [vmem:[%s2 + $0xb8] sm:$0xff] %v772
    %837 = vst [vmem:[%s2 + $0xc0] sm:$0xff] %v773
    %838 = vst [vmem:[%s2 + $0xc8] sm:$0xff] %v774
    %839 = vst [vmem:[%s2 + $0xd0] sm:$0xff] %v775
    %840 = vst [vmem:[%s2 + $0xd8] sm:$0xff] %v776
    %841 = vst [vmem:[%s2 + $0xe0] sm:$0xff] %v777
    %842 = vst [vmem:[%s2 + $0xe8] sm:$0xff] %v778
    %843 = vst [vmem:[%s2 + $0xf0] sm:$0xff] %v779
    %844 = vst [vmem:[%s2 + $0xf8] sm:$0xff] %v780
    %845 = vst [vmem:[%s2 + $0x100] sm:$0xff] %v781
    %846 = vst [vmem:[%s2 + $0x108] sm:$0xff] %v782
    %847 = vst [vmem:[%s2 + $0x110] sm:$0xff] %v783
    %848 = vst [vmem:[%s2 + $0x118] sm:$0xff] %v784
    %849 = vst [vmem:[%s2 + $0x120] sm:$0xff] %v785
    %850 = vst [vmem:[%s2 + $0x128] sm:$0xff] %v786
    %851 = vst [vmem:[%s2 + $0x130] sm:$0xff] %v787
    %852 = vst [vmem:[%s2 + $0x138] sm:$0xff] %v788
    %853 = vst [vmem:[%s2 + $0x140] sm:$0xff] %v789
    %854 = vst [vmem:[%s2 + $0x148] sm:$0xff] %v790
    %855 = vst [vmem:[%s2 + $0x150] sm:$0xff] %v791
    %856 = vst [vmem:[%s2 + $0x158] sm:$0xff] %v792
    %857 = vst [vmem:[%s2 + $0x160] sm:$0xff] %v793
    %858 = vst [vmem:[%s2 + $0x168] sm:$0xff] %v794
    %859 = vst [vmem:[%s2 + $0x170] sm:$0xff] %v795
    %860 = vst [vmem:[%s2 + $0x178] sm:$0xff] %v796
    %861 = vst [vmem:[%s2 + $0x180] sm:$0xff] %v797
    %862 = vst [vmem:[%s2 + $0x188] sm:$0xff] %v798
    %863 = vst [vmem:[%s2 + $0x190] sm:$0xff] %v799
    %864 = vst [vmem:[%s2 + $0x198] sm:$0xff] %v800
    %865 = vst [vmem:[%s2 + $0x1a0] sm:$0xff] %v801
    %866 = vst [vmem:[%s2 + $0x1a8] sm:$0xff] %v802
    %867 = vst [vmem:[%s2 + $0x1b0] sm:$0xff] %v803
    %868 = vst [vmem:[%s2 + $0x1b8] sm:$0xff] %v804
    %869 = vst [vmem:[%s2 + $0x1c0] sm:$0xff] %v805
    %870 = vst [vmem:[%s2 + $0x1c8] sm:$0xff] %v806
    %871 = vst [vmem:[%s2 + $0x1d0] sm:$0xff] %v807
    %872 = vst [vmem:[%s2 + $0x1d8] sm:$0xff] %v808
    %873 = vst [vmem:[%s2 + $0x1e0] sm:$0xff] %v809
    %874 = vst [vmem:[%s2 + $0x1e8] sm:$0xff] %v810
    %875 = vst [vmem:[%s2 + $0x1f0] sm:$0xff] %v811
    %876 = vst [vmem:[%s2 + $0x1f8] sm:$0xff] %v812
  $region17: #{gpt_forward.65} parent=0 // pred_fallthru
    _
  // Predicated region
  $region18: #{gpt_forward.65} parent=0 // pred_check
    _
  $region19: #{gpt_forward.65} parent=0 // pred_check_branch
    %878 = sbr.rel (0) target = $region21
  $region20: #{gpt_forward.65} parent=0 // pred_region
    _
  $region21: #{gpt_forward.65} parent=0 // pred_fallthru
    _
  // Predicated region
  $region22: #{gpt_forward.65} parent=0 // pred_check
    _
  $region23: #{gpt_forward.65} parent=0 // pred_check_branch
    %880 = sbr.rel (0) target = $region25
  $region24: #{gpt_forward.65} parent=0 // pred_region
    _
  $region25: #{gpt_forward.65} parent=0 // pred_fallthru
    _

</llo_original>
